<compile_context>
chip_gen: v7x
topology: tpu7x:2x2x1
jax: 0.10.0
libtpu: 0.0.40
codegen_flags: <defaults>
</compile_context>

<pallas_src>
import functools
import numpy as np
import jax
import jax.numpy as jnp
from jax.experimental import pallas as pl
from jax.experimental.pallas import tpu as pltpu


# ----------------------------- in-kernel helpers -----------------------------

def _softplus(x):
    # ShiftedSoftplus minus-log(2) shift is folded into downstream biases at init.
    return jnp.logaddexp(x, 0.0)


# ------------------------------- Pallas kernels -------------------------------

def fused_interaction_kernel(dist_ref, src_ref, dst_ref, offset_ref,
                             w1_ref, b1_ref, w2_ref, b2_ref,
                             xN_ref, P_ref, lin2w_ref, lin2b_ref,
                             linw_ref, linb_ref, types_ref,
                             out_ref, agg_ref, *, coeff, cutoff, n_nodes):
    """All InteractionBlocks fused: grid = (num_blocks, edge_tiles).

      dist   [tE, 1]   edge distances (padded edges: d=1, src/dst = n_nodes sentinel)
      src    [tE, 1]   int32 source-node index of each edge (gather x_j)
      dst    [1, tE]   int32 target-node index of each edge (scatter-add)
      xN     [N, F]    h @ lin1_w for the current block (bf16, hoisted out of kernel)
      P      [C, N]    per-(graph, element) component-mean operator
      out    [C, H]    resident accumulator: types + sum_b InteractionBlock_b(h, ...)
    Scratch: agg [N, F] f32 message accumulator (re-zeroed per block).
    """
    b = pl.program_id(0)
    k = pl.program_id(1)

    @pl.when((b == 0) & (k == 0))
    def _():
        out_ref[...] = types_ref[...]

    @pl.when(k == 0)
    def _():
        agg_ref[...] = jnp.zeros_like(agg_ref)

    # --- edge filter W = mlp(gaussian_smearing(dist)) * C, VMEM/registers only ---
    d = dist_ref[...]                                                # [tE, 1] f32
    ea = jnp.exp(coeff * (d - offset_ref[...]) ** 2)                 # [tE, Gp] f32
    t = _softplus(jnp.dot(ea.astype(jnp.bfloat16), w1_ref[...],
                          preferred_element_type=jnp.float32) + b1_ref[...])
    w = jnp.dot(t.astype(jnp.bfloat16), w2_ref[...],
                preferred_element_type=jnp.float32) + b2_ref[...]    # [tE, F]
    cfac = cutoff / (1e-10 + d * d) - 1.0                            # [tE, 1]
    W = w * cfac

    # --- gather x_j with an in-kernel one-hot (bf16 0/1 is exact) ---
    tE = d.shape[0]
    S = (jax.lax.broadcasted_iota(jnp.int32, (tE, n_nodes), 1)
         == src_ref[...]).astype(jnp.bfloat16)                       # [tE, N]
    xj = jnp.dot(S, xN_ref[...], preferred_element_type=jnp.float32)  # [tE, F]

    # --- scatter-add message onto target nodes (aggr='add') ---
    T = (jax.lax.broadcasted_iota(jnp.int32, (n_nodes, tE), 0)
         == dst_ref[...]).astype(jnp.bfloat16)                       # [N, tE]
    msg = (xj * W).astype(jnp.bfloat16)
    agg_ref[...] += jnp.dot(T, msg, preferred_element_type=jnp.float32)  # [N, F] f32

    # --- finalize this block: component mean -> lin2 -> ssp -> lin -> residual ---
    @pl.when(k == pl.num_programs(1) - 1)
    def _():
        comp = jnp.dot(P_ref[...], agg_ref[...],
                       preferred_element_type=jnp.float32)           # [C, F]
        y = _softplus(jnp.dot(comp, lin2w_ref[...],
                              preferred_element_type=jnp.float32) + lin2b_ref[...])
        delta = jnp.dot(y, linw_ref[...],
                        preferred_element_type=jnp.float32) + linb_ref[...]
        out_ref[...] += delta


def tower_readout_kernel(types_ref, w1_ref, b1_ref, w2_ref, b2_ref,
                         wh_ref, bh_ref, R_ref, out_ref):
    """All task towers in one shot (shared lin1/lin2, stacked per-task heads).

    Readout 'add' reordered exactly:  scatter_add(t2 @ Wh + b) == (R @ t2) @ Wh + counts*b
    ssp shifts are folded into b2 / head_b at init time.
    """
    t1 = _softplus(jnp.dot(types_ref[...], w1_ref[...],
                           preferred_element_type=jnp.float32) + b1_ref[...])
    t2 = _softplus(jnp.dot(t1, w2_ref[...],
                           preferred_element_type=jnp.float32) + b2_ref[...])   # [C, T2p]
    g = jnp.dot(R_ref[...], t2, preferred_element_type=jnp.float32)             # [B, T2p]
    counts = jnp.sum(R_ref[...], axis=1, keepdims=True)                         # [B, 1]
    out_ref[...] = (jnp.dot(g, wh_ref[...], preferred_element_type=jnp.float32)
                    + counts * bh_ref[...])                                      # [B, ntask]


# ------------------------------ pallas_call glue ------------------------------

def _call(kernel, inputs, out_sds):
    """Single-program pallas_call for the tiny tower/readout head."""
    in_specs = [pl.BlockSpec(tuple(x.shape), (lambda i, n=x.ndim: (0,) * n))
                for x in inputs]
    out_specs = pl.BlockSpec(tuple(out_sds.shape),
                             lambda i, n=len(out_sds.shape): (0,) * n)
    return pl.pallas_call(
        kernel,
        grid=(1,),
        in_specs=in_specs,
        out_specs=out_specs,
        out_shape=out_sds,
        compiler_params=pltpu.CompilerParams(dimension_semantics=("arbitrary",)),
    )(*inputs)


def interaction_blocks_call(xN_all, types, dist, src, dst, offsets,
                            w1_all, b1_all, w2_all, b2_all,
                            lin2w_all, lin2b_all, linw_all, linb_all, P,
                            *, coeff, cutoff, tile_e):
    """One fused pallas_call covering ALL interaction blocks (grid = blocks x edge tiles)."""
    nb, N, F = xN_all.shape
    Gp = offsets.shape[1]
    C, H = types.shape
    E_pad = dist.shape[0]
    kE = E_pad // tile_e

    grid_spec = pltpu.PrefetchScalarGridSpec(
        num_scalar_prefetch=0,
        grid=(nb, kE),
        in_specs=[
            pl.BlockSpec((tile_e, 1), lambda b, k: (k, 0)),        # dist edge tile
            pl.BlockSpec((tile_e, 1), lambda b, k: (k, 0)),        # src idx tile
            pl.BlockSpec((1, tile_e), lambda b, k: (0, k)),        # dst idx tile
            pl.BlockSpec((1, Gp), lambda b, k: (0, 0)),            # gaussian offsets
            pl.BlockSpec((None, Gp, F), lambda b, k: (b, 0, 0)),   # mlp_w1   (bf16)
            pl.BlockSpec((None, 1, F), lambda b, k: (b, 0, 0)),    # mlp_b1
            pl.BlockSpec((None, F, F), lambda b, k: (b, 0, 0)),    # mlp_w2   (bf16)
            pl.BlockSpec((None, 1, F), lambda b, k: (b, 0, 0)),    # mlp_b2   (ssp folded)
            pl.BlockSpec((None, N, F), lambda b, k: (b, 0, 0)),    # xN = h@lin1_w (bf16)
            pl.BlockSpec((C, N), lambda b, k: (0, 0)),             # P (component mean)
            pl.BlockSpec((None, F, H), lambda b, k: (b, 0, 0)),    # lin2_w
            pl.BlockSpec((None, 1, H), lambda b, k: (b, 0, 0)),    # lin2_b
            pl.BlockSpec((None, H, H), lambda b, k: (b, 0, 0)),    # lin_w
            pl.BlockSpec((None, 1, H), lambda b, k: (b, 0, 0)),    # lin_b (ssp folded)
            pl.BlockSpec((C, H), lambda b, k: (0, 0)),             # types residual base
        ],
        out_specs=pl.BlockSpec((C, H), lambda b, k: (0, 0)),
        scratch_shapes=[pltpu.VMEM((N, F), jnp.float32)],          # agg accumulator
    )
    return pl.pallas_call(
        functools.partial(fused_interaction_kernel,
                          coeff=coeff, cutoff=cutoff, n_nodes=N),
        grid_spec=grid_spec,
        out_shape=jax.ShapeDtypeStruct((C, H), jnp.float32),
        compiler_params=pltpu.CompilerParams(
            dimension_semantics=("arbitrary", "arbitrary"),
            vmem_limit_bytes=64 * 1024 * 1024),
    )(dist, src, dst, offsets, w1_all, b1_all, w2_all, b2_all, xN_all, P,
      lin2w_all, lin2b_all, linw_all, linb_all, types)


# --------------------------- host-side preprocessing ---------------------------

def build_graph(pos_np, batch_np, cutoff):
    """radius_graph equivalent: all same-graph ordered pairs within cutoff, no loops."""
    n = pos_np.shape[0]
    src, dst = [], []
    for i in range(n):          # target / center node i
        for j in range(n):      # source / neighbor node j
            if i == j or batch_np[i] != batch_np[j]:
                continue
            if np.linalg.norm(pos_np[i] - pos_np[j]) < cutoff:
                src.append(j)
                dst.append(i)
    return np.asarray(src, np.int32), np.asarray(dst, np.int32)


def build_components(z_np, batch_np):
    """Mirror of the per-batch torch.unique() component grouping in HeaNet.forward."""
    num_graphs = int(batch_np.max()) + 1
    members_per_comp, batch_c, batch_components = [], [], []
    for b in range(num_graphs):
        b_idx = np.nonzero(batch_np == b)[0]
        b_z = z_np[b_idx]
        for el in np.unique(b_z):                     # sorted, same as torch.unique
            members_per_comp.append(b_idx[b_z == el])
            batch_c.append(b)
            batch_components.append(int(el))
    return members_per_comp, np.asarray(batch_c, np.int32), np.asarray(batch_components, np.int32)


# ------------------------------- parameter init -------------------------------

def init_params(key, hidden, num_filters, num_gaussians, num_gaussians_pad,
                num_interactions, tower_h1, tower_h2, tower_h2_pad, num_tasks):
    # Linear weights stored pre-transposed as [in, out] so kernels do x @ W.
    # Padded rows/cols (gaussian axis, tower_h2 axis) are exactly zero -> exact result.
    # ShiftedSoftplus shift (-log 2) is folded into the NEXT layer's bias (exact).
    ln2 = float(np.log(2.0))
    ks = jax.random.split(key, 6 + num_interactions)
    p = {}
    p["embedding"] = jax.random.normal(ks[0], (100, hidden), jnp.float32)
    blocks = []
    for i in range(num_interactions):
        bk = jax.random.split(ks[6 + i], 6)
        w1 = 0.1 * jax.random.normal(bk[0], (num_gaussians, num_filters), jnp.float32)
        w1p = jnp.zeros((num_gaussians_pad, num_filters), jnp.float32).at[:num_gaussians].set(w1)
        w2 = 0.1 * jax.random.normal(bk[1], (num_filters, num_filters), jnp.float32)
        b2 = 0.01 * jax.random.normal(bk[2], (1, num_filters), jnp.float32)
        lin_w = 0.1 * jax.random.normal(bk[5], (hidden, hidden), jnp.float32)
        blocks.append(dict(
            mlp_w1=w1p.astype(jnp.bfloat16),
            mlp_b1=jnp.zeros((1, num_filters), jnp.float32),
            mlp_w2=w2.astype(jnp.bfloat16),
            mlp_b2=b2 - ln2 * jnp.sum(w2, axis=0, keepdims=True),            # ssp fold
            lin1_w=0.1 * jax.random.normal(bk[3], (hidden, num_filters), jnp.float32),  # bias=False
            lin2_w=0.1 * jax.random.normal(bk[4], (num_filters, hidden), jnp.float32),
            lin2_b=jnp.zeros((1, hidden), jnp.float32),
            lin_w=lin_w,
            lin_b=-ln2 * jnp.sum(lin_w, axis=0, keepdims=True),              # ssp fold
        ))
    p["blocks"] = blocks
    # shared tower layers + stacked per-task heads (default HeaNet tower path)
    p["tower_w1"] = 0.1 * jax.random.normal(ks[1], (hidden, tower_h1), jnp.float32)
    p["tower_b1"] = jnp.zeros((1, tower_h1), jnp.float32)
    w2t = 0.1 * jax.random.normal(ks[2], (tower_h1, tower_h2), jnp.float32)
    w2t_pad = jnp.zeros((tower_h1, tower_h2_pad), jnp.float32).at[:, :tower_h2].set(w2t)
    p["tower_w2"] = w2t_pad
    p["tower_b2"] = -ln2 * jnp.sum(w2t_pad, axis=0, keepdims=True)           # ssp fold
    wh = 0.1 * jax.random.normal(ks[3], (tower_h2, num_tasks), jnp.float32)
    wh_pad = jnp.zeros((tower_h2_pad, num_tasks), jnp.float32).at[:tower_h2].set(wh)
    p["head_w"] = wh_pad
    hb = 0.01 * jax.random.normal(ks[4], (1, num_tasks), jnp.float32)
    p["head_b"] = hb - ln2 * jnp.sum(wh_pad, axis=0, keepdims=True)          # ssp fold
    return p


# --------------------------------- forward pass ---------------------------------

def heanet_forward(params, z, batch_components, dist, src, dst, offsets, P, R,
                   n_pad, *, coeff, cutoff, tile_e, num_tasks):
    emb = params["embedding"]
    h = emb[z]                                           # [N, H] node embeddings
    n_real, H = h.shape
    if n_pad > n_real:
        h = jnp.concatenate([h, jnp.zeros((n_pad - n_real, H), h.dtype)], axis=0)
    types = emb[batch_components]                        # [C, H] component embeddings

    blocks = params["blocks"]
    # hoisted lin1 (bias=False): xN_b = h @ lin1_w_b, one plain XLA dot per block
    xN_all = jnp.stack([jnp.dot(h, blk["lin1_w"]) for blk in blocks]).astype(jnp.bfloat16)
    w1_all = jnp.stack([blk["mlp_w1"] for blk in blocks])
    b1_all = jnp.stack([blk["mlp_b1"] for blk in blocks])
    w2_all = jnp.stack([blk["mlp_w2"] for blk in blocks])
    b2_all = jnp.stack([blk["mlp_b2"] for blk in blocks])
    lin2w_all = jnp.stack([blk["lin2_w"] for blk in blocks])
    lin2b_all = jnp.stack([blk["lin2_b"] for blk in blocks])
    linw_all = jnp.stack([blk["lin_w"] for blk in blocks])
    linb_all = jnp.stack([blk["lin_b"] for blk in blocks])

    # ONE fused pallas_call for every interaction block (residual applied in-kernel)
    types = interaction_blocks_call(
        xN_all, types, dist, src, dst, offsets,
        w1_all, b1_all, w2_all, b2_all,
        lin2w_all, lin2b_all, linw_all, linb_all, P,
        coeff=coeff, cutoff=cutoff, tile_e=tile_e)

    # fused multi-task tower + readout ('add' over components per graph)
    B = R.shape[0]
    out = _call(
        tower_readout_kernel,
        [types, params["tower_w1"], params["tower_b1"],
         params["tower_w2"], params["tower_b2"],
         params["head_w"], params["head_b"], R],
        jax.ShapeDtypeStruct((B, num_tasks), jnp.float32),
    )
    # TODO(synk): the self.lin1/self.lin2 single-task readout, the n_seq task/tower
    #             heads, and the dipole/atomref paths are dead code under this config
    #             (num_tasks>1, n_seq=None) and are not implemented.
    return [out[:, t:t + 1] for t in range(num_tasks)]


# ------------------------------------- main -------------------------------------

if __name__ == "__main__":
    # lane-dense, deterministic small problem (module-default widths, tiny graphs)
    hidden = 128
    num_filters = 128
    num_gaussians = 50          # module default; padded to 128 lanes (zero weight rows)
    num_gaussians_pad = 128
    num_interactions = 2
    cutoff = 10.0
    tower_h1 = 128
    tower_h2 = 64               # module default; padded to 128 lanes (exact: ssp fold safe)
    tower_h2_pad = 128
    num_tasks = 2
    TILE_E = 256                # edge-tile rows per grid step (fills v6e/v7x MXU)

    key = jax.random.PRNGKey(0)
    k_z, k_pos, k_par = jax.random.split(key, 3)

    num_graphs = 2
    nodes_per_graph = 10
    N = num_graphs * nodes_per_graph
    N_pad = ((N + 7) // 8) * 8                                               # sublane-friendly

    z = np.asarray(jax.random.randint(k_z, (N,), 1, 9), np.int32)            # atomic numbers in [1, 8]
    pos = np.asarray(jax.random.uniform(k_pos, (N, 3), jnp.float32) * 2.0)   # all intra-graph pairs < cutoff
    batch = np.repeat(np.arange(num_graphs, dtype=np.int32), nodes_per_graph)

    # graph / component structure (host-side, deterministic)
    src, dst = build_graph(pos, batch, cutoff)
    E = src.shape[0]
    members, batch_c, batch_components = build_components(z, batch)
    C = len(members)

    # pad edges to a multiple of TILE_E; padded edges use index sentinel N_pad
    # (never matches the in-kernel iota) -> exact no-op contribution.
    E_pad = max(TILE_E, ((E + TILE_E - 1) // TILE_E) * TILE_E)
    src_pad = np.full((E_pad, 1), N_pad, np.int32); src_pad[:E, 0] = src     # gather x_j (source)
    dst_pad = np.full((1, E_pad), N_pad, np.int32); dst_pad[0, :E] = dst     # scatter-add target
    dist_np = np.ones((E_pad, 1), np.float32)                                # padded d=1 (harmless)
    dist_np[:E, 0] = np.linalg.norm(pos[src] - pos[dst], axis=-1).astype(np.float32)

    # per-(graph, element) component-mean operator and per-graph 'add' readout operator
    P = np.zeros((C, N_pad), np.float32)
    for c, m in enumerate(members):
        P[c, m] = 1.0 / len(m)
    R = np.zeros((num_graphs, C), np.float32)
    R[batch_c, np.arange(C)] = 1.0

    # gaussian smearing constants, padded to 128 lanes (extra centers hit zero w1 rows)
    offsets = np.linspace(0.0, cutoff, num_gaussians).astype(np.float32)
    coeff = float(-0.5 / (offsets[1] - offsets[0]) ** 2)
    offsets_pad = np.full((1, num_gaussians_pad), offsets[-1], np.float32)
    offsets_pad[0, :num_gaussians] = offsets

    params = init_params(k_par, hidden, num_filters, num_gaussians, num_gaussians_pad,
                         num_interactions, tower_h1, tower_h2, tower_h2_pad, num_tasks)

    out = heanet_forward(
        params,
        jnp.asarray(z),
        jnp.asarray(batch_components),
        jnp.asarray(dist_np),               # [E_pad, 1] f32
        jnp.asarray(src_pad),               # [E_pad, 1] int32
        jnp.asarray(dst_pad),               # [1, E_pad] int32
        jnp.asarray(offsets_pad),           # [1, 128]
        jnp.asarray(P), jnp.asarray(R),
        N_pad,
        coeff=coeff, cutoff=cutoff, tile_e=TILE_E, num_tasks=num_tasks,
    )

    out = [jax.block_until_ready(o) for o in out]
    assert len(out) == num_tasks
    for o in out:
        assert o.shape == (num_graphs, 1)
        assert np.all(np.isfinite(np.asarray(o)))
    print("KERNEL_OK")
</pallas_src>

<mosaic_0001>
module attributes {stable_mosaic.version = 11 : i64} {
  func.func @fused_interaction_kernel(%arg0: i32, %arg1: i32, %arg2: memref<256x1xf32, #tpu.memory_space<vmem>>, %arg3: memref<256x1xi32, #tpu.memory_space<vmem>>, %arg4: memref<1x256xi32, #tpu.memory_space<vmem>>, %arg5: memref<1x128xf32, #tpu.memory_space<vmem>>, %arg6: memref<1x128x128xbf16, #tpu.memory_space<vmem>>, %arg7: memref<1x1x128xf32, #tpu.memory_space<vmem>>, %arg8: memref<1x128x128xbf16, #tpu.memory_space<vmem>>, %arg9: memref<1x1x128xf32, #tpu.memory_space<vmem>>, %arg10: memref<1x24x128xbf16, #tpu.memory_space<vmem>>, %arg11: memref<12x24xf32, #tpu.memory_space<vmem>>, %arg12: memref<1x128x128xf32, #tpu.memory_space<vmem>>, %arg13: memref<1x1x128xf32, #tpu.memory_space<vmem>>, %arg14: memref<1x128x128xf32, #tpu.memory_space<vmem>>, %arg15: memref<1x1x128xf32, #tpu.memory_space<vmem>>, %arg16: memref<12x128xf32, #tpu.memory_space<vmem>>, %arg17: memref<12x128xf32, #tpu.memory_space<vmem>>, %arg18: memref<24x128xf32, #tpu.memory_space<vmem>>) attributes {dimension_semantics = [#tpu.dimension_semantics<arbitrary>, #tpu.dimension_semantics<arbitrary>], iteration_bounds = array<i64: 2, 1>, scalar_prefetch = 0 : i64, scratch_operands = 1 : i64, tpu.core_type = #tpu.core_type<tc>, window_params = [{transform_indices = @transform_0, window_bounds = array<i64: 256, 1>}, {transform_indices = @transform_1, window_bounds = array<i64: 256, 1>}, {transform_indices = @transform_2, window_bounds = array<i64: 1, 256>}, {pipeline_mode = #tpu.pipeline_mode<synchronous>, transform_indices = @transform_3, window_bounds = array<i64: 1, 128>}, {transform_indices = @transform_4, window_bounds = array<i64: 1, 128, 128>}, {transform_indices = @transform_5, window_bounds = array<i64: 1, 1, 128>}, {transform_indices = @transform_6, window_bounds = array<i64: 1, 128, 128>}, {transform_indices = @transform_7, window_bounds = array<i64: 1, 1, 128>}, {transform_indices = @transform_8, window_bounds = array<i64: 1, 24, 128>}, {pipeline_mode = #tpu.pipeline_mode<synchronous>, transform_indices = @transform_9, window_bounds = array<i64: 12, 24>}, {transform_indices = @transform_10, window_bounds = array<i64: 1, 128, 128>}, {transform_indices = @transform_11, window_bounds = array<i64: 1, 1, 128>}, {transform_indices = @transform_12, window_bounds = array<i64: 1, 128, 128>}, {transform_indices = @transform_13, window_bounds = array<i64: 1, 1, 128>}, {pipeline_mode = #tpu.pipeline_mode<synchronous>, transform_indices = @transform_14, window_bounds = array<i64: 12, 128>}, {pipeline_mode = #tpu.pipeline_mode<synchronous>, transform_indices = @transform_15, window_bounds = array<i64: 12, 128>}]} {
    %c0_i32 = arith.constant 0 : i32
    %0 = arith.cmpi eq, %arg0, %c0_i32 : i32
    %c0_i32_0 = arith.constant 0 : i32
    %1 = arith.cmpi eq, %arg1, %c0_i32_0 : i32
    %2 = arith.andi %0, %1 : i1
    %3 = arith.extui %2 : i1 to i32
    %c0_i32_1 = arith.constant 0 : i32
    %4 = arith.cmpi ne, %3, %c0_i32_1 : i32
    scf.if %4 {
      %c0_41 = arith.constant 0 : index
      %c0_42 = arith.constant 0 : index
      %82 = vector.load %arg16[%c0_41, %c0_42] : memref<12x128xf32, #tpu.memory_space<vmem>>, vector<12x128xf32>
      %c0_43 = arith.constant 0 : index
      %c0_44 = arith.constant 0 : index
      %83 = vector.load %arg17[%c0_43, %c0_44] : memref<12x128xf32, #tpu.memory_space<vmem>>, vector<12x128xf32>
      tpu.vector_store %arg17[%c0_43, %c0_44], %82 {strides = array<i32>} : memref<12x128xf32, #tpu.memory_space<vmem>>, vector<12x128xf32>,
    } else {
    }
    %c0_i32_2 = arith.constant 0 : i32
    %5 = arith.cmpi eq, %arg1, %c0_i32_2 : i32
    %6 = arith.extui %5 : i1 to i32
    %c0_i32_3 = arith.constant 0 : i32
    %7 = arith.cmpi ne, %6, %c0_i32_3 : i32
    scf.if %7 {
      %cst_41 = arith.constant 0.000000e+00 : f32
      %82 = vector.broadcast %cst_41 : f32 to vector<24x128xf32>
      %c0_42 = arith.constant 0 : index
      %c0_43 = arith.constant 0 : index
      %83 = vector.load %arg18[%c0_42, %c0_43] : memref<24x128xf32, #tpu.memory_space<vmem>>, vector<24x128xf32>
      tpu.vector_store %arg18[%c0_42, %c0_43], %82 {strides = array<i32>} : memref<24x128xf32, #tpu.memory_space<vmem>>, vector<24x128xf32>,
    } else {
    }
    %c0 = arith.constant 0 : index
    %c0_4 = arith.constant 0 : index
    %8 = vector.load %arg2[%c0, %c0_4] : memref<256x1xf32, #tpu.memory_space<vmem>>, vector<256x1xf32>
    %c0_5 = arith.constant 0 : index
    %c0_6 = arith.constant 0 : index
    %9 = vector.load %arg5[%c0_5, %c0_6] : memref<1x128xf32, #tpu.memory_space<vmem>>, vector<1x128xf32>
    %10 = vector.broadcast %8 : vector<256x1xf32> to vector<256x128xf32>
    %11 = vector.broadcast %9 : vector<1x128xf32> to vector<256x128xf32>
    %12 = arith.subf %10, %11 : vector<256x128xf32>
    %13 = arith.mulf %12, %12 : vector<256x128xf32>
    %cst = arith.constant -12.0049992 : f32
    %14 = vector.broadcast %cst : f32 to vector<256x128xf32>
    %15 = arith.mulf %14, %13 : vector<256x128xf32>
    %16 = math.exp %15 : vector<256x128xf32>
    %17 = arith.truncf %16 : vector<256x128xf32> to vector<256x128xbf16>
    %c0_7 = arith.constant 0 : index
    %c0_8 = arith.constant 0 : index
    %c0_9 = arith.constant 0 : index
    %18 = vector.load %arg6[%c0_7, %c0_8, %c0_9] : memref<1x128x128xbf16, #tpu.memory_space<vmem>>, vector<1x128x128xbf16>
    %19 = vector.shape_cast %18 : vector<1x128x128xbf16> to vector<128x128xbf16>
    %cst_10 = arith.constant dense<0.000000e+00> : vector<256x128xf32>
    %20 = tpu.matmul %17, %19, %cst_10 {dimension_numbers = #tpu.dot_dimension_numbers<[1], [0], [0], [1], [0, 0, 1, 1], [], []>} : vector<256x128xbf16>, vector<128x128xbf16>, vector<256x128xf32> -> vector<256x128xf32>
    %c0_11 = arith.constant 0 : index
    %c0_12 = arith.constant 0 : index
    %c0_13 = arith.constant 0 : index
    %21 = vector.load %arg7[%c0_11, %c0_12, %c0_13] : memref<1x1x128xf32, #tpu.memory_space<vmem>>, vector<1x1x128xf32>
    %22 = vector.shape_cast %21 : vector<1x1x128xf32> to vector<1x128xf32>
    %23 = vector.broadcast %22 : vector<1x128xf32> to vector<256x128xf32>
    %24 = arith.addf %20, %23 : vector<256x128xf32>
    %cst_14 = arith.constant 0.000000e+00 : f32
    %25 = vector.broadcast %cst_14 : f32 to vector<256x128xf32>
    %26 = arith.maximumf %24, %25 : vector<256x128xf32>
    %27 = vector.broadcast %cst_14 : f32 to vector<256x128xf32>
    %28 = arith.subf %24, %27 : vector<256x128xf32>
    %29 = arith.cmpf one, %28, %28 : vector<256x128xf32>
    %30 = vector.broadcast %cst_14 : f32 to vector<256x128xf32>
    %31 = arith.addf %24, %30 : vector<256x128xf32>
    %32 = math.absf %28 : vector<256x128xf32>
    %cst_15 = arith.constant 0.000000e+00 : f32
    %33 = vector.broadcast %cst_15 : f32 to vector<256x128xf32>
    %34 = arith.subf %33, %32 : vector<256x128xf32>
    %35 = math.exp %34 : vector<256x128xf32>
    %36 = math.log1p %35 : vector<256x128xf32>
    %37 = arith.addf %26, %36 : vector<256x128xf32>
    %38 = arith.select %29, %31, %37 : vector<256x128xi1>, vector<256x128xf32>
    %39 = arith.truncf %38 : vector<256x128xf32> to vector<256x128xbf16>
    %c0_16 = arith.constant 0 : index
    %c0_17 = arith.constant 0 : index
    %c0_18 = arith.constant 0 : index
    %40 = vector.load %arg8[%c0_16, %c0_17, %c0_18] : memref<1x128x128xbf16, #tpu.memory_space<vmem>>, vector<1x128x128xbf16>
    %41 = vector.shape_cast %40 : vector<1x128x128xbf16> to vector<128x128xbf16>
    %cst_19 = arith.constant dense<0.000000e+00> : vector<256x128xf32>
    %42 = tpu.matmul %39, %41, %cst_19 {dimension_numbers = #tpu.dot_dimension_numbers<[1], [0], [0], [1], [0, 0, 1, 1], [], []>} : vector<256x128xbf16>, vector<128x128xbf16>, vector<256x128xf32> -> vector<256x128xf32>
    %c0_20 = arith.constant 0 : index
    %c0_21 = arith.constant 0 : index
    %c0_22 = arith.constant 0 : index
    %43 = vector.load %arg9[%c0_20, %c0_21, %c0_22] : memref<1x1x128xf32, #tpu.memory_space<vmem>>, vector<1x1x128xf32>
    %44 = vector.shape_cast %43 : vector<1x1x128xf32> to vector<1x128xf32>
    %45 = vector.broadcast %44 : vector<1x128xf32> to vector<256x128xf32>
    %46 = arith.addf %42, %45 : vector<256x128xf32>
    %47 = arith.mulf %8, %8 : vector<256x1xf32>
    %cst_23 = arith.constant 1.000000e-10 : f32
    %48 = vector.broadcast %cst_23 : f32 to vector<256x1xf32>
    %49 = arith.addf %48, %47 : vector<256x1xf32>
    %cst_24 = arith.constant 1.000000e+01 : f32
    %50 = vector.broadcast %cst_24 : f32 to vector<256x1xf32>
    %51 = arith.divf %50, %49 : vector<256x1xf32>
    %cst_25 = arith.constant 1.000000e+00 : f32
    %52 = vector.broadcast %cst_25 : f32 to vector<256x1xf32>
    %53 = arith.subf %51, %52 : vector<256x1xf32>
    %54 = vector.broadcast %53 : vector<256x1xf32> to vector<256x128xf32>
    %55 = arith.mulf %46, %54 : vector<256x128xf32>
    %56 = tpu.iota {dimensions = array<i32: 1>} : vector<256x24xi32>
    %c0_26 = arith.constant 0 : index
    %c0_27 = arith.constant 0 : index
    %57 = vector.load %arg3[%c0_26, %c0_27] : memref<256x1xi32, #tpu.memory_space<vmem>>, vector<256x1xi32>
    %58 = vector.broadcast %57 : vector<256x1xi32> to vector<256x24xi32>
    %59 = arith.cmpi eq, %56, %58 : vector<256x24xi32>
    %60 = arith.extui %59 : vector<256x24xi1> to vector<256x24xi32>
    %61 = arith.sitofp %60 : vector<256x24xi32> to vector<256x24xf32>
    %62 = arith.truncf %61 : vector<256x24xf32> to vector<256x24xbf16>
    %c0_28 = arith.constant 0 : index
    %c0_29 = arith.constant 0 : index
    %c0_30 = arith.constant 0 : index
    %63 = vector.load %arg10[%c0_28, %c0_29, %c0_30] : memref<1x24x128xbf16, #tpu.memory_space<vmem>>, vector<1x24x128xbf16>
    %64 = vector.shape_cast %63 : vector<1x24x128xbf16> to vector<24x128xbf16>
    %cst_31 = arith.constant dense<0.000000e+00> : vector<256x128xf32>
    %65 = tpu.matmul %62, %64, %cst_31 {dimension_numbers = #tpu.dot_dimension_numbers<[1], [0], [0], [1], [0, 0, 1, 1], [], []>} : vector<256x24xbf16>, vector<24x128xbf16>, vector<256x128xf32> -> vector<256x128xf32>
    %66 = tpu.iota {dimensions = array<i32: 0>} : vector<24x256xi32>
    %c0_32 = arith.constant 0 : index
    %c0_33 = arith.constant 0 : index
    %67 = vector.load %arg4[%c0_32, %c0_33] : memref<1x256xi32, #tpu.memory_space<vmem>>, vector<1x256xi32>
    %68 = vector.broadcast %67 : vector<1x256xi32> to vector<24x256xi32>
    %69 = arith.cmpi eq, %66, %68 : vector<24x256xi32>
    %70 = arith.extui %69 : vector<24x256xi1> to vector<24x256xi32>
    %71 = arith.sitofp %70 : vector<24x256xi32> to vector<24x256xf32>
    %72 = arith.truncf %71 : vector<24x256xf32> to vector<24x256xbf16>
    %73 = arith.mulf %65, %55 : vector<256x128xf32>
    %74 = arith.truncf %73 : vector<256x128xf32> to vector<256x128xbf16>
    %c0_34 = arith.constant 0 : index
    %c0_35 = arith.constant 0 : index
    %75 = vector.load %arg18[%c0_34, %c0_35] : memref<24x128xf32, #tpu.memory_space<vmem>>, vector<24x128xf32>
    %cst_36 = arith.constant dense<0.000000e+00> : vector<24x128xf32>
    %76 = tpu.matmul %72, %74, %cst_36 {dimension_numbers = #tpu.dot_dimension_numbers<[1], [0], [0], [1], [0, 0, 1, 1], [], []>} : vector<24x256xbf16>, vector<256x128xbf16>, vector<24x128xf32> -> vector<24x128xf32>
    %77 = arith.addf %75, %76 : vector<24x128xf32>
    %c0_37 = arith.constant 0 : index
    %c0_38 = arith.constant 0 : index
    %78 = vector.load %arg18[%c0_37, %c0_38] : memref<24x128xf32, #tpu.memory_space<vmem>>, vector<24x128xf32>
    tpu.vector_store %arg18[%c0_37, %c0_38], %77 {strides = array<i32>} : memref<24x128xf32, #tpu.memory_space<vmem>>, vector<24x128xf32>,
    %c0_i32_39 = arith.constant 0 : i32
    %79 = arith.cmpi eq, %arg1, %c0_i32_39 : i32
    %80 = arith.extui %79 : i1 to i32
    %c0_i32_40 = arith.constant 0 : i32
    %81 = arith.cmpi ne, %80, %c0_i32_40 : i32
    scf.if %81 {
      %c0_41 = arith.constant 0 : index
      %c0_42 = arith.constant 0 : index
      %82 = vector.load %arg11[%c0_41, %c0_42] : memref<12x24xf32, #tpu.memory_space<vmem>>, vector<12x24xf32>
      %c0_43 = arith.constant 0 : index
      %c0_44 = arith.constant 0 : index
      %83 = vector.load %arg18[%c0_43, %c0_44] : memref<24x128xf32, #tpu.memory_space<vmem>>, vector<24x128xf32>
      %cst_45 = arith.constant dense<0.000000e+00> : vector<12x128xf32>
      %84 = tpu.matmul %82, %83, %cst_45 {dimension_numbers = #tpu.dot_dimension_numbers<[1], [0], [0], [1], [0, 0, 1, 1], [], []>} : vector<12x24xf32>, vector<24x128xf32>, vector<12x128xf32> -> vector<12x128xf32>
      %c0_46 = arith.constant 0 : index
      %c0_47 = arith.constant 0 : index
      %c0_48 = arith.constant 0 : index
      %85 = vector.load %arg12[%c0_46, %c0_47, %c0_48] : memref<1x128x128xf32, #tpu.memory_space<vmem>>, vector<1x128x128xf32>
      %86 = vector.shape_cast %85 : vector<1x128x128xf32> to vector<128x128xf32>
      %cst_49 = arith.constant dense<0.000000e+00> : vector<12x128xf32>
      %87 = tpu.matmul %84, %86, %cst_49 {dimension_numbers = #tpu.dot_dimension_numbers<[1], [0], [0], [1], [0, 0, 1, 1], [], []>} : vector<12x128xf32>, vector<128x128xf32>, vector<12x128xf32> -> vector<12x128xf32>
      %c0_50 = arith.constant 0 : index
      %c0_51 = arith.constant 0 : index
      %c0_52 = arith.constant 0 : index
      %88 = vector.load %arg13[%c0_50, %c0_51, %c0_52] : memref<1x1x128xf32, #tpu.memory_space<vmem>>, vector<1x1x128xf32>
      %89 = vector.shape_cast %88 : vector<1x1x128xf32> to vector<1x128xf32>
      %90 = vector.broadcast %89 : vector<1x128xf32> to vector<12x128xf32>
      %91 = arith.addf %87, %90 : vector<12x128xf32>
      %cst_53 = arith.constant 0.000000e+00 : f32
      %92 = vector.broadcast %cst_53 : f32 to vector<12x128xf32>
      %93 = arith.maximumf %91, %92 : vector<12x128xf32>
      %94 = vector.broadcast %cst_53 : f32 to vector<12x128xf32>
      %95 = arith.subf %91, %94 : vector<12x128xf32>
      %96 = arith.cmpf one, %95, %95 : vector<12x128xf32>
      %97 = vector.broadcast %cst_53 : f32 to vector<12x128xf32>
      %98 = arith.addf %91, %97 : vector<12x128xf32>
      %99 = math.absf %95 : vector<12x128xf32>
      %cst_54 = arith.constant 0.000000e+00 : f32
      %100 = vector.broadcast %cst_54 : f32 to vector<12x128xf32>
      %101 = arith.subf %100, %99 : vector<12x128xf32>
      %102 = math.exp %101 : vector<12x128xf32>
      %103 = math.log1p %102 : vector<12x128xf32>
      %104 = arith.addf %93, %103 : vector<12x128xf32>
      %105 = arith.select %96, %98, %104 : vector<12x128xi1>, vector<12x128xf32>
      %c0_55 = arith.constant 0 : index
      %c0_56 = arith.constant 0 : index
      %c0_57 = arith.constant 0 : index
      %106 = vector.load %arg14[%c0_55, %c0_56, %c0_57] : memref<1x128x128xf32, #tpu.memory_space<vmem>>, vector<1x128x128xf32>
      %107 = vector.shape_cast %106 : vector<1x128x128xf32> to vector<128x128xf32>
      %cst_58 = arith.constant dense<0.000000e+00> : vector<12x128xf32>
      %108 = tpu.matmul %105, %107, %cst_58 {dimension_numbers = #tpu.dot_dimension_numbers<[1], [0], [0], [1], [0, 0, 1, 1], [], []>} : vector<12x128xf32>, vector<128x128xf32>, vector<12x128xf32> -> vector<12x128xf32>
      %c0_59 = arith.constant 0 : index
      %c0_60 = arith.constant 0 : index
      %c0_61 = arith.constant 0 : index
      %109 = vector.load %arg15[%c0_59, %c0_60, %c0_61] : memref<1x1x128xf32, #tpu.memory_space<vmem>>, vector<1x1x128xf32>
      %110 = vector.shape_cast %109 : vector<1x1x128xf32> to vector<1x128xf32>
      %111 = vector.broadcast %110 : vector<1x128xf32> to vector<12x128xf32>
      %112 = arith.addf %108, %111 : vector<12x128xf32>
      %c0_62 = arith.constant 0 : index
      %c0_63 = arith.constant 0 : index
      %113 = vector.load %arg17[%c0_62, %c0_63] : memref<12x128xf32, #tpu.memory_space<vmem>>, vector<12x128xf32>
      %114 = arith.addf %113, %112 : vector<12x128xf32>
      %c0_64 = arith.constant 0 : index
      %c0_65 = arith.constant 0 : index
      %115 = vector.load %arg17[%c0_64, %c0_65] : memref<12x128xf32, #tpu.memory_space<vmem>>, vector<12x128xf32>
      tpu.vector_store %arg17[%c0_64, %c0_65], %114 {strides = array<i32>} : memref<12x128xf32, #tpu.memory_space<vmem>>, vector<12x128xf32>,
    } else {
    }
    return
  }
  func.func @transform_0(%arg0: i32, %arg1: i32) -> (i32, i32) {
    %c0_i32 = arith.constant 0 : i32
    %c0_i32_0 = arith.constant 0 : i32
    return %arg1, %c0_i32 : i32, i32
  }
  func.func @transform_1(%arg0: i32, %arg1: i32) -> (i32, i32) {
    %c0_i32 = arith.constant 0 : i32
    %c0_i32_0 = arith.constant 0 : i32
    return %arg1, %c0_i32 : i32, i32
  }
  func.func @transform_2(%arg0: i32, %arg1: i32) -> (i32, i32) {
    %c0_i32 = arith.constant 0 : i32
    %c0_i32_0 = arith.constant 0 : i32
    return %c0_i32, %arg1 : i32, i32
  }
  func.func @transform_3(%arg0: i32, %arg1: i32) -> (i32, i32) {
    %c0_i32 = arith.constant 0 : i32
    %c0_i32_0 = arith.constant 0 : i32
    %c0_i32_1 = arith.constant 0 : i32
    return %c0_i32, %c0_i32_0 : i32, i32
  }
  func.func @transform_4(%arg0: i32, %arg1: i32) -> (i32, i32, i32) {
    %c0_i32 = arith.constant 0 : i32
    %c0_i32_0 = arith.constant 0 : i32
    %c0_i32_1 = arith.constant 0 : i32
    return %arg0, %c0_i32, %c0_i32_0 : i32, i32, i32
  }
  func.func @transform_5(%arg0: i32, %arg1: i32) -> (i32, i32, i32) {
    %c0_i32 = arith.constant 0 : i32
    %c0_i32_0 = arith.constant 0 : i32
    %c0_i32_1 = arith.constant 0 : i32
    return %arg0, %c0_i32, %c0_i32_0 : i32, i32, i32
  }
  func.func @transform_6(%arg0: i32, %arg1: i32) -> (i32, i32, i32) {
    %c0_i32 = arith.constant 0 : i32
    %c0_i32_0 = arith.constant 0 : i32
    %c0_i32_1 = arith.constant 0 : i32
    return %arg0, %c0_i32, %c0_i32_0 : i32, i32, i32
  }
  func.func @transform_7(%arg0: i32, %arg1: i32) -> (i32, i32, i32) {
    %c0_i32 = arith.constant 0 : i32
    %c0_i32_0 = arith.constant 0 : i32
    %c0_i32_1 = arith.constant 0 : i32
    return %arg0, %c0_i32, %c0_i32_0 : i32, i32, i32
  }
  func.func @transform_8(%arg0: i32, %arg1: i32) -> (i32, i32, i32) {
    %c0_i32 = arith.constant 0 : i32
    %c0_i32_0 = arith.constant 0 : i32
    %c0_i32_1 = arith.constant 0 : i32
    return %arg0, %c0_i32, %c0_i32_0 : i32, i32, i32
  }
  func.func @transform_9(%arg0: i32, %arg1: i32) -> (i32, i32) {
    %c0_i32 = arith.constant 0 : i32
    %c0_i32_0 = arith.constant 0 : i32
    %c0_i32_1 = arith.constant 0 : i32
    return %c0_i32, %c0_i32_0 : i32, i32
  }
  func.func @transform_10(%arg0: i32, %arg1: i32) -> (i32, i32, i32) {
    %c0_i32 = arith.constant 0 : i32
    %c0_i32_0 = arith.constant 0 : i32
    %c0_i32_1 = arith.constant 0 : i32
    return %arg0, %c0_i32, %c0_i32_0 : i32, i32, i32
  }
  func.func @transform_11(%arg0: i32, %arg1: i32) -> (i32, i32, i32) {
    %c0_i32 = arith.constant 0 : i32
    %c0_i32_0 = arith.constant 0 : i32
    %c0_i32_1 = arith.constant 0 : i32
    return %arg0, %c0_i32, %c0_i32_0 : i32, i32, i32
  }
  func.func @transform_12(%arg0: i32, %arg1: i32) -> (i32, i32, i32) {
    %c0_i32 = arith.constant 0 : i32
    %c0_i32_0 = arith.constant 0 : i32
    %c0_i32_1 = arith.constant 0 : i32
    return %arg0, %c0_i32, %c0_i32_0 : i32, i32, i32
  }
  func.func @transform_13(%arg0: i32, %arg1: i32) -> (i32, i32, i32) {
    %c0_i32 = arith.constant 0 : i32
    %c0_i32_0 = arith.constant 0 : i32
    %c0_i32_1 = arith.constant 0 : i32
    return %arg0, %c0_i32, %c0_i32_0 : i32, i32, i32
  }
  func.func @transform_14(%arg0: i32, %arg1: i32) -> (i32, i32) {
    %c0_i32 = arith.constant 0 : i32
    %c0_i32_0 = arith.constant 0 : i32
    %c0_i32_1 = arith.constant 0 : i32
    return %c0_i32, %c0_i32_0 : i32, i32
  }
  func.func @transform_15(%arg0: i32, %arg1: i32) -> (i32, i32) {
    %c0_i32 = arith.constant 0 : i32
    %c0_i32_0 = arith.constant 0 : i32
    %c0_i32_1 = arith.constant 0 : i32
    return %c0_i32, %c0_i32_0 : i32, i32
  }
}

</mosaic_0001>

<llo_original>
// kernel: tpu_custom_call.1
$region0: #{tpu_custom_call.1}
  #allocation0 [shape = 'u32[]', space=smem, size = 0x4, offset = 0x4, fixed_abs, tag = 'smem constant byte address 0x4 - core index']
  #allocation1 [shape = 'u32[144,128]{1,0:T(1,128)}', space=vmem, size = 0x12000, scoped, tag = 'internal scratch']
  #allocation2 [shape = 'f32[24,128]{1,0:T(8,128)}', space=vmem, size = 0x3000, scoped, tag = 'scratch operand']
  %s0 = inlined_call_operand.hbm [shape: f32[256,1], index: 0, kind: input, shape index: {}]
  %s1 = inlined_call_operand.hbm [shape: s32[256,1], index: 1, kind: input, shape index: {}]
  %s2 = inlined_call_operand.hbm [shape: s32[1,256], index: 2, kind: input, shape index: {}]
  %s3 = inlined_call_operand.hbm [shape: f32[1,128], index: 3, kind: input, shape index: {}]
  %s4 = inlined_call_operand.hbm [shape: bf16[2,128,128], index: 4, kind: input, shape index: {}]
  %s5 = inlined_call_operand.hbm [shape: f32[2,1,128], index: 5, kind: input, shape index: {}]
  %s6 = inlined_call_operand.hbm [shape: bf16[2,128,128], index: 6, kind: input, shape index: {}]
  %s7 = inlined_call_operand.hbm [shape: f32[2,1,128], index: 7, kind: input, shape index: {}]
  %s8 = inlined_call_operand.hbm [shape: bf16[2,24,128], index: 8, kind: input, shape index: {}]
  %s9 = inlined_call_operand.hbm [shape: f32[12,24], index: 9, kind: input, shape index: {}]
  %s10 = inlined_call_operand.hbm [shape: f32[2,128,128], index: 10, kind: input, shape index: {}]
  %s11 = inlined_call_operand.hbm [shape: f32[2,1,128], index: 11, kind: input, shape index: {}]
  %s12 = inlined_call_operand.hbm [shape: f32[2,128,128], index: 12, kind: input, shape index: {}]
  %s13 = inlined_call_operand.hbm [shape: f32[2,1,128], index: 13, kind: input, shape index: {}]
  %s14 = inlined_call_operand.hbm [shape: f32[12,128], index: 14, kind: input, shape index: {}]
  %s15 = inlined_call_operand.hbm [shape: f32[12,128], index: 15, kind: output, shape index: {}]
  %s16 = sld [smem:[#allocation0]]
  $region165: #{tpu_custom_call.1} parent=0
    _
  %s18 = ssub.s32 1, %s16
  %s19 = scalar_select 0, %s18, %s16
  $region1: #{tpu_custom_call.1} parent=0
    #allocation3 [shape = 'u8[131072]{0}', space=vmem, size = 0x20000, scoped, tag = 'input window, operand 0, single buffered']
    #allocation4 [shape = 's32[2]{0}', space=sflag, size = 0x8, scoped, tag = 'scoped memory for tpu_custom_call.1']
    #allocation5 [shape = 's32[2]{0}', space=sflag, size = 0x8, scoped, tag = 'scoped memory for tpu_custom_call.1']
    #allocation6 [shape = 'u8[131072]{0}', space=vmem, size = 0x20000, scoped, tag = 'input window, operand 1, single buffered']
    #allocation7 [shape = 's32[1]{0}', space=sflag, size = 0x4, scoped, tag = 'scoped memory for tpu_custom_call.1']
    #allocation8 [shape = 'u8[1024]{0}', space=vmem, size = 0x400, scoped, tag = 'input window, operand 2, single buffered']
    #allocation9 [shape = 'u8[512]{0}', space=vmem, size = 0x400, scoped, tag = 'input window, operand 3, single buffered']
    #allocation10 [shape = 's32[1]{0}', space=sflag, size = 0x4, scoped, tag = 'scoped memory for tpu_custom_call.1']
    #allocation11 [shape = 'u8[65536]{0}', space=vmem, size = 0x10000, scoped, tag = 'input window, operand 4']
    #allocation12 [shape = 'u8[1024]{0}', space=vmem, size = 0x400, scoped, tag = 'input window, operand 5']
    #allocation13 [shape = 'u8[65536]{0}', space=vmem, size = 0x10000, scoped, tag = 'input window, operand 6']
    #allocation14 [shape = 'u8[1024]{0}', space=vmem, size = 0x400, scoped, tag = 'input window, operand 7']
    #allocation15 [shape = 'u8[12288]{0}', space=vmem, size = 0x3000, scoped, tag = 'input window, operand 8']
    #allocation16 [shape = 'u8[8192]{0}', space=vmem, size = 0x2000, scoped, tag = 'input window, operand 9, single buffered']
    #allocation17 [shape = 'u8[131072]{0}', space=vmem, size = 0x20000, scoped, tag = 'input window, operand 10']
    #allocation18 [shape = 'u8[1024]{0}', space=vmem, size = 0x400, scoped, tag = 'input window, operand 11']
    #allocation19 [shape = 'u8[131072]{0}', space=vmem, size = 0x20000, scoped, tag = 'input window, operand 12']
    #allocation20 [shape = 'u8[1024]{0}', space=vmem, size = 0x400, scoped, tag = 'input window, operand 13']
    #allocation21 [shape = 'u8[8192]{0}', space=vmem, size = 0x2000, scoped, tag = 'input window, operand 14, single buffered']
    #allocation22 [shape = 'u8[8192]{0}', space=vmem, size = 0x2000, scoped, tag = 'output window, operand 0, single buffered']
    %20 = vsyncpa [#allocation4], 0
    %21 = vsyncpa [#allocation7], 0
    %22 = vsyncpa [#allocation10], 0
    %23 = vsyncpa [#allocation5], 0
    loop: start=0, step=1, limit=4
    $region2: #{tpu_custom_call.1} parent=1 // loop_pre_header
      _
    $region3: #{tpu_custom_call.1} parent=1 // loop_header
      %s25 = sphi 0, %s29
      %p26 = scmp.ge.s32.totalorder %s25, 4
      %s32 = sphi 0, %s44
      %s33 = sphi 0, %s40
      %s34 = sphi 0, %s32
      %s35 = sphi 0, %s33
      %s36 = sphi 0, %s34
      %s37 = sphi 0, %s35
      %s47 = sphi 0, %s49
      %s50 = sphi 0, %s47
      %s51 = sphi 0, %s50
      %s67 = sphi 0, %s51
      %s73 = sphi 0, %s75
      %s76 = sphi 0, %s73
      %s77 = sphi 0, %s76
      %s93 = sphi 0, %s77
      %s99 = sphi 0, %s101
      %s102 = sphi 0, %s99
      %s103 = sphi 0, %s102
      %s119 = sphi 0, %s103
      %s123 = sphi 0, %s123
      %s125 = sphi 0, %s123
      %s126 = sphi 0, %s125
      %s140 = sphi 0, %s126
      %s146 = sphi 0, %s148
      %s149 = sphi 0, %s146
      %s150 = sphi 0, %s149
      %s166 = sphi 0, %s150
      %s172 = sphi 0, %s174
      %s175 = sphi 0, %s172
      %s176 = sphi 0, %s175
      %s192 = sphi 0, %s176
      %s198 = sphi 0, %s200
      %s201 = sphi 0, %s198
      %s202 = sphi 0, %s201
      %s218 = sphi 0, %s202
      %s224 = sphi 0, %s226
      %s227 = sphi 0, %s224
      %s228 = sphi 0, %s227
      %s244 = sphi 0, %s228
      %s250 = sphi 0, %s252
      %s253 = sphi 0, %s250
      %s254 = sphi 0, %s253
      %s270 = sphi 0, %s254
      %s274 = sphi 0, %s274
      %s276 = sphi 0, %s274
      %s277 = sphi 0, %s276
      %s291 = sphi 0, %s277
      %s297 = sphi 0, %s299
      %s300 = sphi 0, %s297
      %s301 = sphi 0, %s300
      %s317 = sphi 0, %s301
      %s323 = sphi 0, %s325
      %s326 = sphi 0, %s323
      %s327 = sphi 0, %s326
      %s343 = sphi 0, %s327
      %s349 = sphi 0, %s351
      %s352 = sphi 0, %s349
      %s353 = sphi 0, %s352
      %s369 = sphi 0, %s353
      %s375 = sphi 0, %s377
      %s378 = sphi 0, %s375
      %s379 = sphi 0, %s378
      %s395 = sphi 0, %s379
      %s399 = sphi 0, %s399
      %s401 = sphi 0, %s399
      %s402 = sphi 0, %s401
      %s416 = sphi 0, %s402
      %s420 = sphi 0, %s420
      %s422 = sphi 0, %s420
      %s423 = sphi 0, %s422
      %s437 = sphi 0, %s423
    $region4: #{tpu_custom_call.1} parent=1 // loop_header_branch
      %28 = sbr.rel (%p26) target = $region8
    $region5: #{tpu_custom_call.1} parent=1 // loop_body
      %s30 = ssub.s32 %s25, 1
      %s31 = ssub.s32 %s25, 2
      %s38 = sadd.s32 1, %s33
      %p39 = scmp.ge.s32.totalorder %s38, 1
      %s40 = scalar_select %p39, 0, %s38
      %s41 = sadd.s32 1, %s32
      %s42 = scalar_select %p39, %s41, %s32
      %p43 = scmp.ge.s32.totalorder %s42, 2
      %s44 = scalar_select %p43, 0, %s42
      %s45 = ssub.s32 %s33, %s40
      %p46 = scmp.eq.s32.totalorder %s45, 0
      %s48 = sadd.s32 %s47, 1
      %s49 = scalar_select %p46, %s47, %s48
      %p52 = pneg %p46
      %p53 = scmp.eq.s32.totalorder %s25, 1
      %p54 = por %p52, %p53
      %p55 = scmp.ne.s32.totalorder %s47, %s50
      %p56 = scmp.eq.s32.totalorder %s25, 0
      %p57 = por %p55, %p56
      %p58 = scmp.ne.s32.totalorder %s47, %s50
      %p59 = scmp.eq.s32.totalorder %s30, 1
      %p60 = por %p58, %p59
      %p61 = scmp.ne.s32.totalorder %s50, %s51
      %p62 = scmp.eq.s32.totalorder %s30, 0
      %p63 = por %p61, %p62
      %p64 = scmp.ne.s32.totalorder %s50, %s51
      %p65 = scmp.eq.s32.totalorder %s31, 1
      %p66 = por %p64, %p65
      %p68 = scmp.ne.s32.totalorder %s51, %s67
      %p69 = scmp.eq.s32.totalorder %s31, 0
      %p70 = por %p68, %p69
      %s71 = ssub.s32 %s33, %s40
      %p72 = scmp.eq.s32.totalorder %s71, 0
      %s74 = sadd.s32 %s73, 1
      %s75 = scalar_select %p72, %s73, %s74
      %p78 = pneg %p72
      %p79 = scmp.eq.s32.totalorder %s25, 1
      %p80 = por %p78, %p79
      %p81 = scmp.ne.s32.totalorder %s73, %s76
      %p82 = scmp.eq.s32.totalorder %s25, 0
      %p83 = por %p81, %p82
      %p84 = scmp.ne.s32.totalorder %s73, %s76
      %p85 = scmp.eq.s32.totalorder %s30, 1
      %p86 = por %p84, %p85
      %p87 = scmp.ne.s32.totalorder %s76, %s77
      %p88 = scmp.eq.s32.totalorder %s30, 0
      %p89 = por %p87, %p88
      %p90 = scmp.ne.s32.totalorder %s76, %s77
      %p91 = scmp.eq.s32.totalorder %s31, 1
      %p92 = por %p90, %p91
      %p94 = scmp.ne.s32.totalorder %s77, %s93
      %p95 = scmp.eq.s32.totalorder %s31, 0
      %p96 = por %p94, %p95
      %s97 = ssub.s32 %s33, %s40
      %p98 = scmp.eq.s32.totalorder %s97, 0
      %s100 = sadd.s32 %s99, 1
      %s101 = scalar_select %p98, %s99, %s100
      %p104 = pneg %p98
      %p105 = scmp.eq.s32.totalorder %s25, 1
      %p106 = por %p104, %p105
      %p107 = scmp.ne.s32.totalorder %s99, %s102
      %p108 = scmp.eq.s32.totalorder %s25, 0
      %p109 = por %p107, %p108
      %p110 = scmp.ne.s32.totalorder %s99, %s102
      %p111 = scmp.eq.s32.totalorder %s30, 1
      %p112 = por %p110, %p111
      %p113 = scmp.ne.s32.totalorder %s102, %s103
      %p114 = scmp.eq.s32.totalorder %s30, 0
      %p115 = por %p113, %p114
      %p116 = scmp.ne.s32.totalorder %s102, %s103
      %p117 = scmp.eq.s32.totalorder %s31, 1
      %p118 = por %p116, %p117
      %p120 = scmp.ne.s32.totalorder %s103, %s119
      %p121 = scmp.eq.s32.totalorder %s31, 0
      %p122 = por %p120, %p121
      %s124 = sadd.s32 %s123, 1
      %p127 = scmp.eq.s32.totalorder %s25, 1
      %p128 = scmp.ne.s32.totalorder %s123, %s125
      %p129 = scmp.eq.s32.totalorder %s25, 0
      %p130 = por %p128, %p129
      %p131 = scmp.ne.s32.totalorder %s123, %s125
      %p132 = scmp.eq.s32.totalorder %s30, 1
      %p133 = por %p131, %p132
      %p134 = scmp.ne.s32.totalorder %s125, %s126
      %p135 = scmp.eq.s32.totalorder %s30, 0
      %p136 = por %p134, %p135
      %p137 = scmp.ne.s32.totalorder %s125, %s126
      %p138 = scmp.eq.s32.totalorder %s31, 1
      %p139 = por %p137, %p138
      %p141 = scmp.ne.s32.totalorder %s126, %s140
      %p142 = scmp.eq.s32.totalorder %s31, 0
      %p143 = por %p141, %p142
      %s144 = ssub.s32 %s32, %s44
      %p145 = scmp.eq.s32.totalorder %s144, 0
      %s147 = sadd.s32 %s146, 1
      %s148 = scalar_select %p145, %s146, %s147
      %p151 = pneg %p145
      %p152 = scmp.eq.s32.totalorder %s25, 1
      %p153 = por %p151, %p152
      %p154 = scmp.ne.s32.totalorder %s146, %s149
      %p155 = scmp.eq.s32.totalorder %s25, 0
      %p156 = por %p154, %p155
      %p157 = scmp.ne.s32.totalorder %s146, %s149
      %p158 = scmp.eq.s32.totalorder %s30, 1
      %p159 = por %p157, %p158
      %p160 = scmp.ne.s32.totalorder %s149, %s150
      %p161 = scmp.eq.s32.totalorder %s30, 0
      %p162 = por %p160, %p161
      %p163 = scmp.ne.s32.totalorder %s149, %s150
      %p164 = scmp.eq.s32.totalorder %s31, 1
      %p165 = por %p163, %p164
      %p167 = scmp.ne.s32.totalorder %s150, %s166
      %p168 = scmp.eq.s32.totalorder %s31, 0
      %p169 = por %p167, %p168
      %s170 = ssub.s32 %s32, %s44
      %p171 = scmp.eq.s32.totalorder %s170, 0
      %s173 = sadd.s32 %s172, 1
      %s174 = scalar_select %p171, %s172, %s173
      %p177 = pneg %p171
      %p178 = scmp.eq.s32.totalorder %s25, 1
      %p179 = por %p177, %p178
      %p180 = scmp.ne.s32.totalorder %s172, %s175
      %p181 = scmp.eq.s32.totalorder %s25, 0
      %p182 = por %p180, %p181
      %p183 = scmp.ne.s32.totalorder %s172, %s175
      %p184 = scmp.eq.s32.totalorder %s30, 1
      %p185 = por %p183, %p184
      %p186 = scmp.ne.s32.totalorder %s175, %s176
      %p187 = scmp.eq.s32.totalorder %s30, 0
      %p188 = por %p186, %p187
      %p189 = scmp.ne.s32.totalorder %s175, %s176
      %p190 = scmp.eq.s32.totalorder %s31, 1
      %p191 = por %p189, %p190
      %p193 = scmp.ne.s32.totalorder %s176, %s192
      %p194 = scmp.eq.s32.totalorder %s31, 0
      %p195 = por %p193, %p194
      %s196 = ssub.s32 %s32, %s44
      %p197 = scmp.eq.s32.totalorder %s196, 0
      %s199 = sadd.s32 %s198, 1
      %s200 = scalar_select %p197, %s198, %s199
      %p203 = pneg %p197
      %p204 = scmp.eq.s32.totalorder %s25, 1
      %p205 = por %p203, %p204
      %p206 = scmp.ne.s32.totalorder %s198, %s201
      %p207 = scmp.eq.s32.totalorder %s25, 0
      %p208 = por %p206, %p207
      %p209 = scmp.ne.s32.totalorder %s198, %s201
      %p210 = scmp.eq.s32.totalorder %s30, 1
      %p211 = por %p209, %p210
      %p212 = scmp.ne.s32.totalorder %s201, %s202
      %p213 = scmp.eq.s32.totalorder %s30, 0
      %p214 = por %p212, %p213
      %p215 = scmp.ne.s32.totalorder %s201, %s202
      %p216 = scmp.eq.s32.totalorder %s31, 1
      %p217 = por %p215, %p216
      %p219 = scmp.ne.s32.totalorder %s202, %s218
      %p220 = scmp.eq.s32.totalorder %s31, 0
      %p221 = por %p219, %p220
      %s222 = ssub.s32 %s32, %s44
      %p223 = scmp.eq.s32.totalorder %s222, 0
      %s225 = sadd.s32 %s224, 1
      %s226 = scalar_select %p223, %s224, %s225
      %p229 = pneg %p223
      %p230 = scmp.eq.s32.totalorder %s25, 1
      %p231 = por %p229, %p230
      %p232 = scmp.ne.s32.totalorder %s224, %s227
      %p233 = scmp.eq.s32.totalorder %s25, 0
      %p234 = por %p232, %p233
      %p235 = scmp.ne.s32.totalorder %s224, %s227
      %p236 = scmp.eq.s32.totalorder %s30, 1
      %p237 = por %p235, %p236
      %p238 = scmp.ne.s32.totalorder %s227, %s228
      %p239 = scmp.eq.s32.totalorder %s30, 0
      %p240 = por %p238, %p239
      %p241 = scmp.ne.s32.totalorder %s227, %s228
      %p242 = scmp.eq.s32.totalorder %s31, 1
      %p243 = por %p241, %p242
      %p245 = scmp.ne.s32.totalorder %s228, %s244
      %p246 = scmp.eq.s32.totalorder %s31, 0
      %p247 = por %p245, %p246
      %s248 = ssub.s32 %s32, %s44
      %p249 = scmp.eq.s32.totalorder %s248, 0
      %s251 = sadd.s32 %s250, 1
      %s252 = scalar_select %p249, %s250, %s251
      %p255 = pneg %p249
      %p256 = scmp.eq.s32.totalorder %s25, 1
      %p257 = por %p255, %p256
      %p258 = scmp.ne.s32.totalorder %s250, %s253
      %p259 = scmp.eq.s32.totalorder %s25, 0
      %p260 = por %p258, %p259
      %p261 = scmp.ne.s32.totalorder %s250, %s253
      %p262 = scmp.eq.s32.totalorder %s30, 1
      %p263 = por %p261, %p262
      %p264 = scmp.ne.s32.totalorder %s253, %s254
      %p265 = scmp.eq.s32.totalorder %s30, 0
      %p266 = por %p264, %p265
      %p267 = scmp.ne.s32.totalorder %s253, %s254
      %p268 = scmp.eq.s32.totalorder %s31, 1
      %p269 = por %p267, %p268
      %p271 = scmp.ne.s32.totalorder %s254, %s270
      %p272 = scmp.eq.s32.totalorder %s31, 0
      %p273 = por %p271, %p272
      %s275 = sadd.s32 %s274, 1
      %p278 = scmp.eq.s32.totalorder %s25, 1
      %p279 = scmp.ne.s32.totalorder %s274, %s276
      %p280 = scmp.eq.s32.totalorder %s25, 0
      %p281 = por %p279, %p280
      %p282 = scmp.ne.s32.totalorder %s274, %s276
      %p283 = scmp.eq.s32.totalorder %s30, 1
      %p284 = por %p282, %p283
      %p285 = scmp.ne.s32.totalorder %s276, %s277
      %p286 = scmp.eq.s32.totalorder %s30, 0
      %p287 = por %p285, %p286
      %p288 = scmp.ne.s32.totalorder %s276, %s277
      %p289 = scmp.eq.s32.totalorder %s31, 1
      %p290 = por %p288, %p289
      %p292 = scmp.ne.s32.totalorder %s277, %s291
      %p293 = scmp.eq.s32.totalorder %s31, 0
      %p294 = por %p292, %p293
      %s295 = ssub.s32 %s32, %s44
      %p296 = scmp.eq.s32.totalorder %s295, 0
      %s298 = sadd.s32 %s297, 1
      %s299 = scalar_select %p296, %s297, %s298
      %p302 = pneg %p296
      %p303 = scmp.eq.s32.totalorder %s25, 1
      %p304 = por %p302, %p303
      %p305 = scmp.ne.s32.totalorder %s297, %s300
      %p306 = scmp.eq.s32.totalorder %s25, 0
      %p307 = por %p305, %p306
      %p308 = scmp.ne.s32.totalorder %s297, %s300
      %p309 = scmp.eq.s32.totalorder %s30, 1
      %p310 = por %p308, %p309
      %p311 = scmp.ne.s32.totalorder %s300, %s301
      %p312 = scmp.eq.s32.totalorder %s30, 0
      %p313 = por %p311, %p312
      %p314 = scmp.ne.s32.totalorder %s300, %s301
      %p315 = scmp.eq.s32.totalorder %s31, 1
      %p316 = por %p314, %p315
      %p318 = scmp.ne.s32.totalorder %s301, %s317
      %p319 = scmp.eq.s32.totalorder %s31, 0
      %p320 = por %p318, %p319
      %s321 = ssub.s32 %s32, %s44
      %p322 = scmp.eq.s32.totalorder %s321, 0
      %s324 = sadd.s32 %s323, 1
      %s325 = scalar_select %p322, %s323, %s324
      %p328 = pneg %p322
      %p329 = scmp.eq.s32.totalorder %s25, 1
      %p330 = por %p328, %p329
      %p331 = scmp.ne.s32.totalorder %s323, %s326
      %p332 = scmp.eq.s32.totalorder %s25, 0
      %p333 = por %p331, %p332
      %p334 = scmp.ne.s32.totalorder %s323, %s326
      %p335 = scmp.eq.s32.totalorder %s30, 1
      %p336 = por %p334, %p335
      %p337 = scmp.ne.s32.totalorder %s326, %s327
      %p338 = scmp.eq.s32.totalorder %s30, 0
      %p339 = por %p337, %p338
      %p340 = scmp.ne.s32.totalorder %s326, %s327
      %p341 = scmp.eq.s32.totalorder %s31, 1
      %p342 = por %p340, %p341
      %p344 = scmp.ne.s32.totalorder %s327, %s343
      %p345 = scmp.eq.s32.totalorder %s31, 0
      %p346 = por %p344, %p345
      %s347 = ssub.s32 %s32, %s44
      %p348 = scmp.eq.s32.totalorder %s347, 0
      %s350 = sadd.s32 %s349, 1
      %s351 = scalar_select %p348, %s349, %s350
      %p354 = pneg %p348
      %p355 = scmp.eq.s32.totalorder %s25, 1
      %p356 = por %p354, %p355
      %p357 = scmp.ne.s32.totalorder %s349, %s352
      %p358 = scmp.eq.s32.totalorder %s25, 0
      %p359 = por %p357, %p358
      %p360 = scmp.ne.s32.totalorder %s349, %s352
      %p361 = scmp.eq.s32.totalorder %s30, 1
      %p362 = por %p360, %p361
      %p363 = scmp.ne.s32.totalorder %s352, %s353
      %p364 = scmp.eq.s32.totalorder %s30, 0
      %p365 = por %p363, %p364
      %p366 = scmp.ne.s32.totalorder %s352, %s353
      %p367 = scmp.eq.s32.totalorder %s31, 1
      %p368 = por %p366, %p367
      %p370 = scmp.ne.s32.totalorder %s353, %s369
      %p371 = scmp.eq.s32.totalorder %s31, 0
      %p372 = por %p370, %p371
      %s373 = ssub.s32 %s32, %s44
      %p374 = scmp.eq.s32.totalorder %s373, 0
      %s376 = sadd.s32 %s375, 1
      %s377 = scalar_select %p374, %s375, %s376
      %p380 = pneg %p374
      %p381 = scmp.eq.s32.totalorder %s25, 1
      %p382 = por %p380, %p381
      %p383 = scmp.ne.s32.totalorder %s375, %s378
      %p384 = scmp.eq.s32.totalorder %s25, 0
      %p385 = por %p383, %p384
      %p386 = scmp.ne.s32.totalorder %s375, %s378
      %p387 = scmp.eq.s32.totalorder %s30, 1
      %p388 = por %p386, %p387
      %p389 = scmp.ne.s32.totalorder %s378, %s379
      %p390 = scmp.eq.s32.totalorder %s30, 0
      %p391 = por %p389, %p390
      %p392 = scmp.ne.s32.totalorder %s378, %s379
      %p393 = scmp.eq.s32.totalorder %s31, 1
      %p394 = por %p392, %p393
      %p396 = scmp.ne.s32.totalorder %s379, %s395
      %p397 = scmp.eq.s32.totalorder %s31, 0
      %p398 = por %p396, %p397
      %s400 = sadd.s32 %s399, 1
      %p403 = scmp.eq.s32.totalorder %s25, 1
      %p404 = scmp.ne.s32.totalorder %s399, %s401
      %p405 = scmp.eq.s32.totalorder %s25, 0
      %p406 = por %p404, %p405
      %p407 = scmp.ne.s32.totalorder %s399, %s401
      %p408 = scmp.eq.s32.totalorder %s30, 1
      %p409 = por %p407, %p408
      %p410 = scmp.ne.s32.totalorder %s401, %s402
      %p411 = scmp.eq.s32.totalorder %s30, 0
      %p412 = por %p410, %p411
      %p413 = scmp.ne.s32.totalorder %s401, %s402
      %p414 = scmp.eq.s32.totalorder %s31, 1
      %p415 = por %p413, %p414
      %p417 = scmp.ne.s32.totalorder %s402, %s416
      %p418 = scmp.eq.s32.totalorder %s31, 0
      %p419 = por %p417, %p418
      %s421 = sadd.s32 %s420, 1
      %p424 = scmp.eq.s32.totalorder %s25, 1
      %p425 = scmp.ne.s32.totalorder %s420, %s422
      %p426 = scmp.eq.s32.totalorder %s25, 0
      %p427 = por %p425, %p426
      %p428 = scmp.ne.s32.totalorder %s420, %s422
      %p429 = scmp.eq.s32.totalorder %s30, 1
      %p430 = por %p428, %p429
      %p431 = scmp.ne.s32.totalorder %s422, %s423
      %p432 = scmp.eq.s32.totalorder %s30, 0
      %p433 = por %p431, %p432
      %p434 = scmp.ne.s32.totalorder %s422, %s423
      %p435 = scmp.eq.s32.totalorder %s31, 1
      %p436 = por %p434, %p435
      %p438 = scmp.ne.s32.totalorder %s423, %s437
      %p439 = scmp.eq.s32.totalorder %s31, 0
      %p440 = por %p438, %p439
      %p441 = scmp.le.s32.totalorder 1, %s25
      %p442 = scmp.lt.s32.totalorder %s25, 3
      %p443 = pnand %p441, %p442
      %p444 = pneg %p443
      // Predicated region
      $region9: #{tpu_custom_call.1} parent=5 // pred_check
        _
      $region10: #{tpu_custom_call.1} parent=5 // pred_check_branch
        %446 = sbr.rel (%p443) target = $region12
      $region11: #{tpu_custom_call.1} parent=5 // pred_region
        %s447 = ssub.s32 %s25, 1
        // Predicated region
        $region13: #{tpu_custom_call.1} parent=11 // pred_check
          %p448 = pneg %p63
        $region14: #{tpu_custom_call.1} parent=11 // pred_check_branch
          %450 = sbr.rel (%p448) target = $region16
        $region15: #{tpu_custom_call.1} parent=11 // pred_region
          %s451 = smul.u32 32, %s35
          %s453 = ssub.s32 4096, 4096
          %454 = vsyncadd [#allocation4], %s453
          %s455 = smul.addr %s451, 128
          %s456 = scalar_lea.hbm %s0, %s455
          %s457 = sshll.u32 [#allocation3], 4
          %s458 = int_to_ptr.vmem [resolvable:$true] %s457
          %463 = dma.hbm_to_vmem [thread:$0]  %s456, 4096, %s458, [#allocation4], 128, 128, 8
        $region16: #{tpu_custom_call.1} parent=11 // pred_fallthru
          _
        // Predicated region
        $region17: #{tpu_custom_call.1} parent=11 // pred_check
          %p464 = pneg %p89
        $region18: #{tpu_custom_call.1} parent=11 // pred_check_branch
          %466 = sbr.rel (%p464) target = $region20
        $region19: #{tpu_custom_call.1} parent=11 // pred_region
          %s467 = smul.u32 32, %s35
          %s469 = ssub.s32 4096, 4096
          %470 = vsyncadd [#allocation7], %s469
          %s471 = smul.addr %s467, 128
          %s472 = scalar_lea.hbm %s1, %s471
          %s473 = sshll.u32 [#allocation6], 4
          %s474 = int_to_ptr.vmem [resolvable:$true] %s473
          %479 = dma.hbm_to_vmem [thread:$0]  %s472, 4096, %s474, [#allocation7], 128, 128, 8
        $region20: #{tpu_custom_call.1} parent=11 // pred_fallthru
          _
        // Predicated region
        $region21: #{tpu_custom_call.1} parent=11 // pred_check
          %p480 = pneg %p115
        $region22: #{tpu_custom_call.1} parent=11 // pred_check_branch
          %482 = sbr.rel (%p480) target = $region24
        $region23: #{tpu_custom_call.1} parent=11 // pred_region
          %s483 = smul.u32 2, %s35
          %s485 = ssub.s32 32, 32
          %486 = vsyncadd [#allocation7], %s485
          %s487 = smul.addr %s483, 16
          %s488 = scalar_lea.hbm %s2, %s487
          %s490 = sshll.u32 [#allocation8], 4
          %s491 = int_to_ptr.vmem [resolvable:$true] %s490
          %493 = dma.hbm_to_vmem [thread:$0]  %s488, 32, %s491, [#allocation7]
        $region24: #{tpu_custom_call.1} parent=11 // pred_fallthru
          _
        // Predicated region
        $region25: #{tpu_custom_call.1} parent=11 // pred_check
          %p494 = pneg %p136
        $region26: #{tpu_custom_call.1} parent=11 // pred_check_branch
          %496 = sbr.rel (%p494) target = $region28
        $region27: #{tpu_custom_call.1} parent=11 // pred_region
          %s498 = ssub.s32 16, 16
          %499 = vsyncadd [#allocation10], %s498
          %s501 = sshll.u32 [#allocation9], 4
          %s502 = int_to_ptr.vmem [resolvable:$true] %s501
          %504 = dma.hbm_to_vmem [thread:$0]  %s3, 16, %s502, [#allocation10]
        $region28: #{tpu_custom_call.1} parent=11 // pred_fallthru
          _
        // Predicated region
        $region29: #{tpu_custom_call.1} parent=11 // pred_check
          %p505 = pneg %p287
        $region30: #{tpu_custom_call.1} parent=11 // pred_check_branch
          %507 = sbr.rel (%p505) target = $region32
        $region31: #{tpu_custom_call.1} parent=11 // pred_region
          %s509 = ssub.s32 256, 256
          %510 = vsyncadd [#allocation7], %s509
          %s511 = sshll.u32 [#allocation16], 4
          %s512 = int_to_ptr.vmem [resolvable:$true] %s511
          %517 = dma.hbm_to_vmem [thread:$0]  %s9, 256, %s512, [#allocation7], 128, 128, 8
        $region32: #{tpu_custom_call.1} parent=11 // pred_fallthru
          _
        // Predicated region
        $region33: #{tpu_custom_call.1} parent=11 // pred_check
          %p518 = pneg %p412
        $region34: #{tpu_custom_call.1} parent=11 // pred_check_branch
          %520 = sbr.rel (%p518) target = $region36
        $region35: #{tpu_custom_call.1} parent=11 // pred_region
          %s522 = ssub.s32 256, 256
          %523 = vsyncadd [#allocation7], %s522
          %s524 = sshll.u32 [#allocation21], 4
          %s525 = int_to_ptr.vmem [resolvable:$true] %s524
          %530 = dma.hbm_to_vmem [thread:$0]  %s14, 256, %s525, [#allocation7], 128, 128, 8
        $region36: #{tpu_custom_call.1} parent=11 // pred_fallthru
          _
      $region12: #{tpu_custom_call.1} parent=5 // pred_fallthru
        _
      %p531 = scmp.lt.s32.totalorder %s25, 2
      // Predicated region
      $region37: #{tpu_custom_call.1} parent=5 // pred_check
        %p532 = pneg %p531
      $region38: #{tpu_custom_call.1} parent=5 // pred_check_branch
        %534 = sbr.rel (%p532) target = $region40
      $region39: #{tpu_custom_call.1} parent=5 // pred_region
        // Predicated region
        $region41: #{tpu_custom_call.1} parent=39 // pred_check
          %p535 = pneg %p156
        $region42: #{tpu_custom_call.1} parent=39 // pred_check_branch
          %537 = sbr.rel (%p535) target = $region44
        $region43: #{tpu_custom_call.1} parent=39 // pred_region
          %s538 = sand.u32 %s25, 1
          %s539 = scalar_lea.sflag [#allocation4], %s538
          %s540 = sand.u32 %s146, 1
          %s541 = smul.addr %s540, 64
          %s542 = scalar_lea.vmem [#allocation11], %s541
          %s544 = ssub.s32 1024, 1024
          %545 = vsyncadd %s539, %s544
          %s546 = smul.addr %s32, 16
          %s547 = smul.addr %s546, 64
          %s548 = scalar_lea.hbm %s4, %s547
          %s549 = sshll.u32 %s542, 4
          %s550 = int_to_ptr.vmem [resolvable:$true] %s549
          %555 = dma.hbm_to_vmem [thread:$0]  %s548, 1024, %s550, %s539, 64, 64, 4
        $region44: #{tpu_custom_call.1} parent=39 // pred_fallthru
          _
        // Predicated region
        $region45: #{tpu_custom_call.1} parent=39 // pred_check
          %p556 = pneg %p182
        $region46: #{tpu_custom_call.1} parent=39 // pred_check_branch
          %558 = sbr.rel (%p556) target = $region48
        $region47: #{tpu_custom_call.1} parent=39 // pred_region
          %s559 = sand.u32 %s25, 1
          %s560 = scalar_lea.sflag [#allocation4], %s559
          %s561 = sand.u32 %s172, 1
          %s562 = scalar_lea.vmem [#allocation12], %s561
          %s564 = ssub.s32 16, 16
          %565 = vsyncadd %s560, %s564
          %s566 = smul.addr %s32, 16
          %s567 = scalar_lea.hbm %s5, %s566
          %s569 = sshll.u32 %s562, 4
          %s570 = int_to_ptr.vmem [resolvable:$true] %s569
          %572 = dma.hbm_to_vmem [thread:$0]  %s567, 16, %s570, %s560
        $region48: #{tpu_custom_call.1} parent=39 // pred_fallthru
          _
        // Predicated region
        $region49: #{tpu_custom_call.1} parent=39 // pred_check
          %p573 = pneg %p208
        $region50: #{tpu_custom_call.1} parent=39 // pred_check_branch
          %575 = sbr.rel (%p573) target = $region52
        $region51: #{tpu_custom_call.1} parent=39 // pred_region
          %s576 = sand.u32 %s25, 1
          %s577 = scalar_lea.sflag [#allocation4], %s576
          %s578 = sand.u32 %s198, 1
          %s579 = smul.addr %s578, 64
          %s580 = scalar_lea.vmem [#allocation13], %s579
          %s582 = ssub.s32 1024, 1024
          %583 = vsyncadd %s577, %s582
          %s584 = smul.addr %s32, 16
          %s585 = smul.addr %s584, 64
          %s586 = scalar_lea.hbm %s6, %s585
          %s587 = sshll.u32 %s580, 4
          %s588 = int_to_ptr.vmem [resolvable:$true] %s587
          %593 = dma.hbm_to_vmem [thread:$0]  %s586, 1024, %s588, %s577, 64, 64, 4
        $region52: #{tpu_custom_call.1} parent=39 // pred_fallthru
          _
        // Predicated region
        $region53: #{tpu_custom_call.1} parent=39 // pred_check
          %p594 = pneg %p234
        $region54: #{tpu_custom_call.1} parent=39 // pred_check_branch
          %596 = sbr.rel (%p594) target = $region56
        $region55: #{tpu_custom_call.1} parent=39 // pred_region
          %s597 = sand.u32 %s25, 1
          %s598 = scalar_lea.sflag [#allocation4], %s597
          %s599 = sand.u32 %s224, 1
          %s600 = scalar_lea.vmem [#allocation14], %s599
          %s602 = ssub.s32 16, 16
          %603 = vsyncadd %s598, %s602
          %s604 = smul.addr %s32, 16
          %s605 = scalar_lea.hbm %s7, %s604
          %s607 = sshll.u32 %s600, 4
          %s608 = int_to_ptr.vmem [resolvable:$true] %s607
          %610 = dma.hbm_to_vmem [thread:$0]  %s605, 16, %s608, %s598
        $region56: #{tpu_custom_call.1} parent=39 // pred_fallthru
          _
        // Predicated region
        $region57: #{tpu_custom_call.1} parent=39 // pred_check
          %p611 = pneg %p260
        $region58: #{tpu_custom_call.1} parent=39 // pred_check_branch
          %613 = sbr.rel (%p611) target = $region60
        $region59: #{tpu_custom_call.1} parent=39 // pred_region
          %s614 = sand.u32 %s25, 1
          %s615 = scalar_lea.sflag [#allocation4], %s614
          %s616 = sand.u32 %s250, 1
          %s617 = smul.addr %s616, 12
          %s618 = scalar_lea.vmem [#allocation15], %s617
          %s620 = ssub.s32 192, 192
          %621 = vsyncadd %s615, %s620
          %s622 = smul.addr %s32, 3
          %s623 = smul.addr %s622, 64
          %s624 = scalar_lea.hbm %s8, %s623
          %s625 = sshll.u32 %s618, 4
          %s626 = int_to_ptr.vmem [resolvable:$true] %s625
          %631 = dma.hbm_to_vmem [thread:$0]  %s624, 192, %s626, %s615, 64, 64, 4
        $region60: #{tpu_custom_call.1} parent=39 // pred_fallthru
          _
        // Predicated region
        $region61: #{tpu_custom_call.1} parent=39 // pred_check
          %p632 = pneg %p307
        $region62: #{tpu_custom_call.1} parent=39 // pred_check_branch
          %634 = sbr.rel (%p632) target = $region64
        $region63: #{tpu_custom_call.1} parent=39 // pred_region
          %s635 = sand.u32 %s25, 1
          %s636 = scalar_lea.sflag [#allocation4], %s635
          %s637 = sand.u32 %s297, 1
          %s638 = smul.addr %s637, 128
          %s639 = scalar_lea.vmem [#allocation17], %s638
          %s641 = ssub.s32 2048, 2048
          %642 = vsyncadd %s636, %s641
          %s643 = smul.addr %s32, 16
          %s644 = smul.addr %s643, 128
          %s645 = scalar_lea.hbm %s10, %s644
          %s646 = sshll.u32 %s639, 4
          %s647 = int_to_ptr.vmem [resolvable:$true] %s646
          %652 = dma.hbm_to_vmem [thread:$0]  %s645, 2048, %s647, %s636, 128, 128, 8
        $region64: #{tpu_custom_call.1} parent=39 // pred_fallthru
          _
        // Predicated region
        $region65: #{tpu_custom_call.1} parent=39 // pred_check
          %p653 = pneg %p333
        $region66: #{tpu_custom_call.1} parent=39 // pred_check_branch
          %655 = sbr.rel (%p653) target = $region68
        $region67: #{tpu_custom_call.1} parent=39 // pred_region
          %s656 = sand.u32 %s25, 1
          %s657 = scalar_lea.sflag [#allocation4], %s656
          %s658 = sand.u32 %s323, 1
          %s659 = scalar_lea.vmem [#allocation18], %s658
          %s661 = ssub.s32 16, 16
          %662 = vsyncadd %s657, %s661
          %s663 = smul.addr %s32, 16
          %s664 = scalar_lea.hbm %s11, %s663
          %s666 = sshll.u32 %s659, 4
          %s667 = int_to_ptr.vmem [resolvable:$true] %s666
          %669 = dma.hbm_to_vmem [thread:$0]  %s664, 16, %s667, %s657
        $region68: #{tpu_custom_call.1} parent=39 // pred_fallthru
          _
        // Predicated region
        $region69: #{tpu_custom_call.1} parent=39 // pred_check
          %p670 = pneg %p359
        $region70: #{tpu_custom_call.1} parent=39 // pred_check_branch
          %672 = sbr.rel (%p670) target = $region72
        $region71: #{tpu_custom_call.1} parent=39 // pred_region
          %s673 = sand.u32 %s25, 1
          %s674 = scalar_lea.sflag [#allocation4], %s673
          %s675 = sand.u32 %s349, 1
          %s676 = smul.addr %s675, 128
          %s677 = scalar_lea.vmem [#allocation19], %s676
          %s679 = ssub.s32 2048, 2048
          %680 = vsyncadd %s674, %s679
          %s681 = smul.addr %s32, 16
          %s682 = smul.addr %s681, 128
          %s683 = scalar_lea.hbm %s12, %s682
          %s684 = sshll.u32 %s677, 4
          %s685 = int_to_ptr.vmem [resolvable:$true] %s684
          %690 = dma.hbm_to_vmem [thread:$0]  %s683, 2048, %s685, %s674, 128, 128, 8
        $region72: #{tpu_custom_call.1} parent=39 // pred_fallthru
          _
        // Predicated region
        $region73: #{tpu_custom_call.1} parent=39 // pred_check
          %p691 = pneg %p385
        $region74: #{tpu_custom_call.1} parent=39 // pred_check_branch
          %693 = sbr.rel (%p691) target = $region76
        $region75: #{tpu_custom_call.1} parent=39 // pred_region
          %s694 = sand.u32 %s25, 1
          %s695 = scalar_lea.sflag [#allocation4], %s694
          %s696 = sand.u32 %s375, 1
          %s697 = scalar_lea.vmem [#allocation20], %s696
          %s699 = ssub.s32 16, 16
          %700 = vsyncadd %s695, %s699
          %s701 = smul.addr %s32, 16
          %s702 = scalar_lea.hbm %s13, %s701
          %s704 = sshll.u32 %s697, 4
          %s705 = int_to_ptr.vmem [resolvable:$true] %s704
          %707 = dma.hbm_to_vmem [thread:$0]  %s702, 16, %s705, %s695
        $region76: #{tpu_custom_call.1} parent=39 // pred_fallthru
          _
      $region40: #{tpu_custom_call.1} parent=5 // pred_fallthru
        _
      %p708 = scmp.le.s32.totalorder 1, %s25
      %p709 = scmp.lt.s32.totalorder %s25, 3
      %p710 = pnand %p708, %p709
      %p711 = pneg %p710
      // Predicated region
      $region77: #{tpu_custom_call.1} parent=5 // pred_check
        _
      $region78: #{tpu_custom_call.1} parent=5 // pred_check_branch
        %713 = sbr.rel (%p710) target = $region80
      $region79: #{tpu_custom_call.1} parent=5 // pred_region
        %s714 = ssub.s32 %s25, 1
        // Predicated region
        $region81: #{tpu_custom_call.1} parent=79 // pred_check
          %p715 = pneg %p63
        $region82: #{tpu_custom_call.1} parent=79 // pred_check_branch
          %717 = sbr.rel (%p715) target = $region84
        $region83: #{tpu_custom_call.1} parent=79 // pred_region
          %718 = dma.done [#allocation4], 4096
        $region84: #{tpu_custom_call.1} parent=79 // pred_fallthru
          _
        // Predicated region
        $region85: #{tpu_custom_call.1} parent=79 // pred_check
          %p719 = pneg %p89
        $region86: #{tpu_custom_call.1} parent=79 // pred_check_branch
          %721 = sbr.rel (%p719) target = $region88
        $region87: #{tpu_custom_call.1} parent=79 // pred_region
          %722 = dma.done [#allocation7], 4096
        $region88: #{tpu_custom_call.1} parent=79 // pred_fallthru
          _
        // Predicated region
        $region89: #{tpu_custom_call.1} parent=79 // pred_check
          %p723 = pneg %p115
        $region90: #{tpu_custom_call.1} parent=79 // pred_check_branch
          %725 = sbr.rel (%p723) target = $region92
        $region91: #{tpu_custom_call.1} parent=79 // pred_region
          %726 = dma.done [#allocation7], 32
        $region92: #{tpu_custom_call.1} parent=79 // pred_fallthru
          _
        // Predicated region
        $region93: #{tpu_custom_call.1} parent=79 // pred_check
          %p727 = pneg %p136
        $region94: #{tpu_custom_call.1} parent=79 // pred_check_branch
          %729 = sbr.rel (%p727) target = $region96
        $region95: #{tpu_custom_call.1} parent=79 // pred_region
          %730 = dma.done [#allocation10], 16
        $region96: #{tpu_custom_call.1} parent=79 // pred_fallthru
          _
        %s731 = sand.u32 %s30, 1
        %s732 = scalar_lea.sflag [#allocation4], %s731
        %s733 = sand.u32 %s149, 1
        %s734 = smul.addr %s733, 64
        %s735 = scalar_lea.vmem [#allocation11], %s734
        // Predicated region
        $region97: #{tpu_custom_call.1} parent=79 // pred_check
          %p736 = pneg %p162
        $region98: #{tpu_custom_call.1} parent=79 // pred_check_branch
          %738 = sbr.rel (%p736) target = $region100
        $region99: #{tpu_custom_call.1} parent=79 // pred_region
          %739 = dma.done %s732, 1024
        $region100: #{tpu_custom_call.1} parent=79 // pred_fallthru
          _
        %s740 = sand.u32 %s30, 1
        %s741 = scalar_lea.sflag [#allocation4], %s740
        %s742 = sand.u32 %s175, 1
        %s743 = scalar_lea.vmem [#allocation12], %s742
        // Predicated region
        $region101: #{tpu_custom_call.1} parent=79 // pred_check
          %p744 = pneg %p188
        $region102: #{tpu_custom_call.1} parent=79 // pred_check_branch
          %746 = sbr.rel (%p744) target = $region104
        $region103: #{tpu_custom_call.1} parent=79 // pred_region
          %747 = dma.done %s741, 16
        $region104: #{tpu_custom_call.1} parent=79 // pred_fallthru
          _
        %s748 = sand.u32 %s30, 1
        %s749 = scalar_lea.sflag [#allocation4], %s748
        %s750 = sand.u32 %s201, 1
        %s751 = smul.addr %s750, 64
        %s752 = scalar_lea.vmem [#allocation13], %s751
        // Predicated region
        $region105: #{tpu_custom_call.1} parent=79 // pred_check
          %p753 = pneg %p214
        $region106: #{tpu_custom_call.1} parent=79 // pred_check_branch
          %755 = sbr.rel (%p753) target = $region108
        $region107: #{tpu_custom_call.1} parent=79 // pred_region
          %756 = dma.done %s749, 1024
        $region108: #{tpu_custom_call.1} parent=79 // pred_fallthru
          _
        %s757 = sand.u32 %s30, 1
        %s758 = scalar_lea.sflag [#allocation4], %s757
        %s759 = sand.u32 %s227, 1
        %s760 = scalar_lea.vmem [#allocation14], %s759
        // Predicated region
        $region109: #{tpu_custom_call.1} parent=79 // pred_check
          %p761 = pneg %p240
        $region110: #{tpu_custom_call.1} parent=79 // pred_check_branch
          %763 = sbr.rel (%p761) target = $region112
        $region111: #{tpu_custom_call.1} parent=79 // pred_region
          %764 = dma.done %s758, 16
        $region112: #{tpu_custom_call.1} parent=79 // pred_fallthru
          _
        %s765 = sand.u32 %s30, 1
        %s766 = scalar_lea.sflag [#allocation4], %s765
        %s767 = sand.u32 %s253, 1
        %s768 = smul.addr %s767, 12
        %s769 = scalar_lea.vmem [#allocation15], %s768
        // Predicated region
        $region113: #{tpu_custom_call.1} parent=79 // pred_check
          %p770 = pneg %p266
        $region114: #{tpu_custom_call.1} parent=79 // pred_check_branch
          %772 = sbr.rel (%p770) target = $region116
        $region115: #{tpu_custom_call.1} parent=79 // pred_region
          %773 = dma.done %s766, 192
        $region116: #{tpu_custom_call.1} parent=79 // pred_fallthru
          _
        // Predicated region
        $region117: #{tpu_custom_call.1} parent=79 // pred_check
          %p774 = pneg %p287
        $region118: #{tpu_custom_call.1} parent=79 // pred_check_branch
          %776 = sbr.rel (%p774) target = $region120
        $region119: #{tpu_custom_call.1} parent=79 // pred_region
          %777 = dma.done [#allocation7], 256
        $region120: #{tpu_custom_call.1} parent=79 // pred_fallthru
          _
        %s778 = sand.u32 %s30, 1
        %s779 = scalar_lea.sflag [#allocation4], %s778
        %s780 = sand.u32 %s300, 1
        %s781 = smul.addr %s780, 128
        %s782 = scalar_lea.vmem [#allocation17], %s781
        // Predicated region
        $region121: #{tpu_custom_call.1} parent=79 // pred_check
          %p783 = pneg %p313
        $region122: #{tpu_custom_call.1} parent=79 // pred_check_branch
          %785 = sbr.rel (%p783) target = $region124
        $region123: #{tpu_custom_call.1} parent=79 // pred_region
          %786 = dma.done %s779, 2048
        $region124: #{tpu_custom_call.1} parent=79 // pred_fallthru
          _
        %s787 = sand.u32 %s30, 1
        %s788 = scalar_lea.sflag [#allocation4], %s787
        %s789 = sand.u32 %s326, 1
        %s790 = scalar_lea.vmem [#allocation18], %s789
        // Predicated region
        $region125: #{tpu_custom_call.1} parent=79 // pred_check
          %p791 = pneg %p339
        $region126: #{tpu_custom_call.1} parent=79 // pred_check_branch
          %793 = sbr.rel (%p791) target = $region128
        $region127: #{tpu_custom_call.1} parent=79 // pred_region
          %794 = dma.done %s788, 16
        $region128: #{tpu_custom_call.1} parent=79 // pred_fallthru
          _
        %s795 = sand.u32 %s30, 1
        %s796 = scalar_lea.sflag [#allocation4], %s795
        %s797 = sand.u32 %s352, 1
        %s798 = smul.addr %s797, 128
        %s799 = scalar_lea.vmem [#allocation19], %s798
        // Predicated region
        $region129: #{tpu_custom_call.1} parent=79 // pred_check
          %p800 = pneg %p365
        $region130: #{tpu_custom_call.1} parent=79 // pred_check_branch
          %802 = sbr.rel (%p800) target = $region132
        $region131: #{tpu_custom_call.1} parent=79 // pred_region
          %803 = dma.done %s796, 2048
        $region132: #{tpu_custom_call.1} parent=79 // pred_fallthru
          _
        %s804 = sand.u32 %s30, 1
        %s805 = scalar_lea.sflag [#allocation4], %s804
        %s806 = sand.u32 %s378, 1
        %s807 = scalar_lea.vmem [#allocation20], %s806
        // Predicated region
        $region133: #{tpu_custom_call.1} parent=79 // pred_check
          %p808 = pneg %p391
        $region134: #{tpu_custom_call.1} parent=79 // pred_check_branch
          %810 = sbr.rel (%p808) target = $region136
        $region135: #{tpu_custom_call.1} parent=79 // pred_region
          %811 = dma.done %s805, 16
        $region136: #{tpu_custom_call.1} parent=79 // pred_fallthru
          _
        // Predicated region
        $region137: #{tpu_custom_call.1} parent=79 // pred_check
          %p812 = pneg %p412
        $region138: #{tpu_custom_call.1} parent=79 // pred_check_branch
          %814 = sbr.rel (%p812) target = $region140
        $region139: #{tpu_custom_call.1} parent=79 // pred_region
          %815 = dma.done [#allocation7], 256
        $region140: #{tpu_custom_call.1} parent=79 // pred_fallthru
          _
        %p816 = pneg %p63
        %p817 = pneg %p60
        %p818 = pneg %p89
        %p819 = pneg %p86
        %p820 = pneg %p115
        %p821 = pneg %p112
        %p822 = pneg %p136
        %p823 = pneg %p133
        %s824 = sand.u32 %s30, 1
        %s825 = scalar_lea.sflag [#allocation4], %s824
        %s826 = sand.u32 %s149, 1
        %s827 = smul.addr %s826, 64
        %s828 = scalar_lea.vmem [#allocation11], %s827
        %p829 = pneg %p162
        %p830 = pneg %p159
        %s831 = sand.u32 %s30, 1
        %s832 = scalar_lea.sflag [#allocation4], %s831
        %s833 = sand.u32 %s175, 1
        %s834 = scalar_lea.vmem [#allocation12], %s833
        %p835 = pneg %p188
        %p836 = pneg %p185
        %s837 = sand.u32 %s30, 1
        %s838 = scalar_lea.sflag [#allocation4], %s837
        %s839 = sand.u32 %s201, 1
        %s840 = smul.addr %s839, 64
        %s841 = scalar_lea.vmem [#allocation13], %s840
        %p842 = pneg %p214
        %p843 = pneg %p211
        %s844 = sand.u32 %s30, 1
        %s845 = scalar_lea.sflag [#allocation4], %s844
        %s846 = sand.u32 %s227, 1
        %s847 = scalar_lea.vmem [#allocation14], %s846
        %p848 = pneg %p240
        %p849 = pneg %p237
        %s850 = sand.u32 %s30, 1
        %s851 = scalar_lea.sflag [#allocation4], %s850
        %s852 = sand.u32 %s253, 1
        %s853 = smul.addr %s852, 12
        %s854 = scalar_lea.vmem [#allocation15], %s853
        %p855 = pneg %p266
        %p856 = pneg %p263
        %p857 = pneg %p287
        %p858 = pneg %p284
        %s859 = sand.u32 %s30, 1
        %s860 = scalar_lea.sflag [#allocation4], %s859
        %s861 = sand.u32 %s300, 1
        %s862 = smul.addr %s861, 128
        %s863 = scalar_lea.vmem [#allocation17], %s862
        %p864 = pneg %p313
        %p865 = pneg %p310
        %s866 = sand.u32 %s30, 1
        %s867 = scalar_lea.sflag [#allocation4], %s866
        %s868 = sand.u32 %s326, 1
        %s869 = scalar_lea.vmem [#allocation18], %s868
        %p870 = pneg %p339
        %p871 = pneg %p336
        %s872 = sand.u32 %s30, 1
        %s873 = scalar_lea.sflag [#allocation4], %s872
        %s874 = sand.u32 %s352, 1
        %s875 = smul.addr %s874, 128
        %s876 = scalar_lea.vmem [#allocation19], %s875
        %p877 = pneg %p365
        %p878 = pneg %p362
        %s879 = sand.u32 %s30, 1
        %s880 = scalar_lea.sflag [#allocation4], %s879
        %s881 = sand.u32 %s378, 1
        %s882 = scalar_lea.vmem [#allocation20], %s881
        %p883 = pneg %p391
        %p884 = pneg %p388
        %p885 = pneg %p412
        %p886 = pneg %p409
        %p887 = pneg %p433
        %p888 = pneg %p430
        %s889 = smul.u32 32, %s35
        %s890 = smul.u32 32, %s35
        %s891 = smul.u32 2, %s35
        %p893 = scmp.eq.s32.totalorder %s34, 0
        %p894 = scmp.eq.s32.totalorder %s35, 0
        %p895 = pnand %p893, %p894
        %p896 = pneg %p895
        // Predicated region
        $region141: #{tpu_custom_call.1} parent=79 // pred_check
          _
        $region142: #{tpu_custom_call.1} parent=79 // pred_check_branch
          %898 = sbr.rel (%p895) target = $region144
        $region143: #{tpu_custom_call.1} parent=79 // pred_region
          %v899 = vld [vmem:[#allocation21] sm:$0xff]
          %v900 = vld [vmem:[#allocation21 + $0x8] sm:$0xf]
          %901 = vst [vmem:[#allocation22] sm:$0xff] %v899
          %902 = vst [vmem:[#allocation22 + $0x8] sm:$0xf] %v900
        $region144: #{tpu_custom_call.1} parent=79 // pred_fallthru
          _
        // Predicated region
        $region145: #{tpu_custom_call.1} parent=79 // pred_check
          %p903 = pneg %p894
        $region146: #{tpu_custom_call.1} parent=79 // pred_check_branch
          %905 = sbr.rel (%p903) target = $region148
        $region147: #{tpu_custom_call.1} parent=79 // pred_region
          %906 = vst [vmem:[#allocation2] sm:$0xff] 0.0
          %907 = vst [vmem:[#allocation2 + $0x8] sm:$0xff] 0.0
          %908 = vst [vmem:[#allocation2 + $0x10] sm:$0xff] 0.0
        $region148: #{tpu_custom_call.1} parent=79 // pred_fallthru
          _
        %v909 = vld [vmem:[#allocation3] sm:$0xff]
        %v910 = vld [vmem:[#allocation3 + $0x8] sm:$0xff]
        %v911 = vld [vmem:[#allocation3 + $0x10] sm:$0xff]
        %v912 = vld [vmem:[#allocation3 + $0x18] sm:$0xff]
        %v913 = vld [vmem:[#allocation3 + $0x20] sm:$0xff]
        %v914 = vld [vmem:[#allocation3 + $0x28] sm:$0xff]
        %v915 = vld [vmem:[#allocation3 + $0x30] sm:$0xff]
        %v916 = vld [vmem:[#allocation3 + $0x38] sm:$0xff]
        %v917 = vld [vmem:[#allocation3 + $0x40] sm:$0xff]
        %v918 = vld [vmem:[#allocation3 + $0x48] sm:$0xff]
        %v919 = vld [vmem:[#allocation3 + $0x50] sm:$0xff]
        %v920 = vld [vmem:[#allocation3 + $0x58] sm:$0xff]
        %v921 = vld [vmem:[#allocation3 + $0x60] sm:$0xff]
        %v922 = vld [vmem:[#allocation3 + $0x68] sm:$0xff]
        %v923 = vld [vmem:[#allocation3 + $0x70] sm:$0xff]
        %v924 = vld [vmem:[#allocation3 + $0x78] sm:$0xff]
        %v925 = vld [vmem:[#allocation3 + $0x80] sm:$0xff]
        %v926 = vld [vmem:[#allocation3 + $0x88] sm:$0xff]
        %v927 = vld [vmem:[#allocation3 + $0x90] sm:$0xff]
        %v928 = vld [vmem:[#allocation3 + $0x98] sm:$0xff]
        %v929 = vld [vmem:[#allocation3 + $0xa0] sm:$0xff]
        %v930 = vld [vmem:[#allocation3 + $0xa8] sm:$0xff]
        %v931 = vld [vmem:[#allocation3 + $0xb0] sm:$0xff]
        %v932 = vld [vmem:[#allocation3 + $0xb8] sm:$0xff]
        %v933 = vld [vmem:[#allocation3 + $0xc0] sm:$0xff]
        %v934 = vld [vmem:[#allocation3 + $0xc8] sm:$0xff]
        %v935 = vld [vmem:[#allocation3 + $0xd0] sm:$0xff]
        %v936 = vld [vmem:[#allocation3 + $0xd8] sm:$0xff]
        %v937 = vld [vmem:[#allocation3 + $0xe0] sm:$0xff]
        %v938 = vld [vmem:[#allocation3 + $0xe8] sm:$0xff]
        %v939 = vld [vmem:[#allocation3 + $0xf0] sm:$0xff]
        %v940 = vld [vmem:[#allocation3 + $0xf8] sm:$0xff]
        %v941 = vld [vmem:[#allocation9] sm:$0x1]
        %943 = vset.pattern.permute.xlu0 0
        %944 = vperm.xlu0 %943, %v909
        %v945 = vpop.permute.xlu0 %944
        %948 = vset.pattern.permute.xlu0 0
        %949 = vperm.xlu0 %948, %v910
        %v950 = vpop.permute.xlu0 %949
        %953 = vset.pattern.permute.xlu0 0
        %954 = vperm.xlu0 %953, %v911
        %v955 = vpop.permute.xlu0 %954
        %958 = vset.pattern.permute.xlu0 0
        %959 = vperm.xlu0 %958, %v912
        %v960 = vpop.permute.xlu0 %959
        %963 = vset.pattern.permute.xlu0 0
        %964 = vperm.xlu0 %963, %v913
        %v965 = vpop.permute.xlu0 %964
        %968 = vset.pattern.permute.xlu0 0
        %969 = vperm.xlu0 %968, %v914
        %v970 = vpop.permute.xlu0 %969
        %973 = vset.pattern.permute.xlu0 0
        %974 = vperm.xlu0 %973, %v915
        %v975 = vpop.permute.xlu0 %974
        %978 = vset.pattern.permute.xlu0 0
        %979 = vperm.xlu0 %978, %v916
        %v980 = vpop.permute.xlu0 %979
        %983 = vset.pattern.permute.xlu0 0
        %984 = vperm.xlu0 %983, %v917
        %v985 = vpop.permute.xlu0 %984
        %988 = vset.pattern.permute.xlu0 0
        %989 = vperm.xlu0 %988, %v918
        %v990 = vpop.permute.xlu0 %989
        %993 = vset.pattern.permute.xlu0 0
        %994 = vperm.xlu0 %993, %v919
        %v995 = vpop.permute.xlu0 %994
        %998 = vset.pattern.permute.xlu0 0
        %999 = vperm.xlu0 %998, %v920
        %v1000 = vpop.permute.xlu0 %999
        %1003 = vset.pattern.permute.xlu0 0
        %1004 = vperm.xlu0 %1003, %v921
        %v1005 = vpop.permute.xlu0 %1004
        %1008 = vset.pattern.permute.xlu0 0
        %1009 = vperm.xlu0 %1008, %v922
        %v1010 = vpop.permute.xlu0 %1009
        %1013 = vset.pattern.permute.xlu0 0
        %1014 = vperm.xlu0 %1013, %v923
        %v1015 = vpop.permute.xlu0 %1014
        %1018 = vset.pattern.permute.xlu0 0
        %1019 = vperm.xlu0 %1018, %v924
        %v1020 = vpop.permute.xlu0 %1019
        %1023 = vset.pattern.permute.xlu0 0
        %1024 = vperm.xlu0 %1023, %v925
        %v1025 = vpop.permute.xlu0 %1024
        %1028 = vset.pattern.permute.xlu0 0
        %1029 = vperm.xlu0 %1028, %v926
        %v1030 = vpop.permute.xlu0 %1029
        %1033 = vset.pattern.permute.xlu0 0
        %1034 = vperm.xlu0 %1033, %v927
        %v1035 = vpop.permute.xlu0 %1034
        %1038 = vset.pattern.permute.xlu0 0
        %1039 = vperm.xlu0 %1038, %v928
        %v1040 = vpop.permute.xlu0 %1039
        %1043 = vset.pattern.permute.xlu0 0
        %1044 = vperm.xlu0 %1043, %v929
        %v1045 = vpop.permute.xlu0 %1044
        %1048 = vset.pattern.permute.xlu0 0
        %1049 = vperm.xlu0 %1048, %v930
        %v1050 = vpop.permute.xlu0 %1049
        %1053 = vset.pattern.permute.xlu0 0
        %1054 = vperm.xlu0 %1053, %v931
        %v1055 = vpop.permute.xlu0 %1054
        %1058 = vset.pattern.permute.xlu0 0
        %1059 = vperm.xlu0 %1058, %v932
        %v1060 = vpop.permute.xlu0 %1059
        %1063 = vset.pattern.permute.xlu0 0
        %1064 = vperm.xlu0 %1063, %v933
        %v1065 = vpop.permute.xlu0 %1064
        %1068 = vset.pattern.permute.xlu0 0
        %1069 = vperm.xlu0 %1068, %v934
        %v1070 = vpop.permute.xlu0 %1069
        %1073 = vset.pattern.permute.xlu0 0
        %1074 = vperm.xlu0 %1073, %v935
        %v1075 = vpop.permute.xlu0 %1074
        %1078 = vset.pattern.permute.xlu0 0
        %1079 = vperm.xlu0 %1078, %v936
        %v1080 = vpop.permute.xlu0 %1079
        %1083 = vset.pattern.permute.xlu0 0
        %1084 = vperm.xlu0 %1083, %v937
        %v1085 = vpop.permute.xlu0 %1084
        %1088 = vset.pattern.permute.xlu0 0
        %1089 = vperm.xlu0 %1088, %v938
        %v1090 = vpop.permute.xlu0 %1089
        %1093 = vset.pattern.permute.xlu0 0
        %1094 = vperm.xlu0 %1093, %v939
        %v1095 = vpop.permute.xlu0 %1094
        %1098 = vset.pattern.permute.xlu0 0
        %1099 = vperm.xlu0 %1098, %v940
        %v1100 = vpop.permute.xlu0 %1099
        %v1103 = vlaneseq
        %v1104 = vshrl.u32 %v1103, 7
        %v1105 = vsub.s32 0, %v1104
        %v1106 = vrot.slane %v941, %v1105
        %v1108 = vsub.f32 %v945, %v1106
        %v1109 = vsub.f32 %v950, %v1106
        %v1110 = vsub.f32 %v955, %v1106
        %v1111 = vsub.f32 %v960, %v1106
        %v1112 = vsub.f32 %v965, %v1106
        %v1113 = vsub.f32 %v970, %v1106
        %v1114 = vsub.f32 %v975, %v1106
        %v1115 = vsub.f32 %v980, %v1106
        %v1116 = vsub.f32 %v985, %v1106
        %v1117 = vsub.f32 %v990, %v1106
        %v1118 = vsub.f32 %v995, %v1106
        %v1119 = vsub.f32 %v1000, %v1106
        %v1120 = vsub.f32 %v1005, %v1106
        %v1121 = vsub.f32 %v1010, %v1106
        %v1122 = vsub.f32 %v1015, %v1106
        %v1123 = vsub.f32 %v1020, %v1106
        %v1124 = vsub.f32 %v1025, %v1106
        %v1125 = vsub.f32 %v1030, %v1106
        %v1126 = vsub.f32 %v1035, %v1106
        %v1127 = vsub.f32 %v1040, %v1106
        %v1128 = vsub.f32 %v1045, %v1106
        %v1129 = vsub.f32 %v1050, %v1106
        %v1130 = vsub.f32 %v1055, %v1106
        %v1131 = vsub.f32 %v1060, %v1106
        %v1132 = vsub.f32 %v1065, %v1106
        %v1133 = vsub.f32 %v1070, %v1106
        %v1134 = vsub.f32 %v1075, %v1106
        %v1135 = vsub.f32 %v1080, %v1106
        %v1136 = vsub.f32 %v1085, %v1106
        %v1137 = vsub.f32 %v1090, %v1106
        %v1138 = vsub.f32 %v1095, %v1106
        %v1139 = vsub.f32 %v1100, %v1106
        %v1140 = vmul.f32 %v1108, %v1108
        %v1141 = vmul.f32 %v1109, %v1109
        %v1142 = vmul.f32 %v1110, %v1110
        %v1143 = vmul.f32 %v1111, %v1111
        %v1144 = vmul.f32 %v1112, %v1112
        %v1145 = vmul.f32 %v1113, %v1113
        %v1146 = vmul.f32 %v1114, %v1114
        %v1147 = vmul.f32 %v1115, %v1115
        %v1148 = vmul.f32 %v1116, %v1116
        %v1149 = vmul.f32 %v1117, %v1117
        %v1150 = vmul.f32 %v1118, %v1118
        %v1151 = vmul.f32 %v1119, %v1119
        %v1152 = vmul.f32 %v1120, %v1120
        %v1153 = vmul.f32 %v1121, %v1121
        %v1154 = vmul.f32 %v1122, %v1122
        %v1155 = vmul.f32 %v1123, %v1123
        %v1156 = vmul.f32 %v1124, %v1124
        %v1157 = vmul.f32 %v1125, %v1125
        %v1158 = vmul.f32 %v1126, %v1126
        %v1159 = vmul.f32 %v1127, %v1127
        %v1160 = vmul.f32 %v1128, %v1128
        %v1161 = vmul.f32 %v1129, %v1129
        %v1162 = vmul.f32 %v1130, %v1130
        %v1163 = vmul.f32 %v1131, %v1131
        %v1164 = vmul.f32 %v1132, %v1132
        %v1165 = vmul.f32 %v1133, %v1133
        %v1166 = vmul.f32 %v1134, %v1134
        %v1167 = vmul.f32 %v1135, %v1135
        %v1168 = vmul.f32 %v1136, %v1136
        %v1169 = vmul.f32 %v1137, %v1137
        %v1170 = vmul.f32 %v1138, %v1138
        %v1171 = vmul.f32 %v1139, %v1139
        %v1172 = vmul.f32 %v1140, -12.004999
        %v1173 = vmul.f32 %v1141, -12.004999
        %v1174 = vmul.f32 %v1142, -12.004999
        %v1175 = vmul.f32 %v1143, -12.004999
        %v1176 = vmul.f32 %v1144, -12.004999
        %v1177 = vmul.f32 %v1145, -12.004999
        %v1178 = vmul.f32 %v1146, -12.004999
        %v1179 = vmul.f32 %v1147, -12.004999
        %v1180 = vmul.f32 %v1148, -12.004999
        %v1181 = vmul.f32 %v1149, -12.004999
        %v1182 = vmul.f32 %v1150, -12.004999
        %v1183 = vmul.f32 %v1151, -12.004999
        %v1184 = vmul.f32 %v1152, -12.004999
        %v1185 = vmul.f32 %v1153, -12.004999
        %v1186 = vmul.f32 %v1154, -12.004999
        %v1187 = vmul.f32 %v1155, -12.004999
        %v1188 = vmul.f32 %v1156, -12.004999
        %v1189 = vmul.f32 %v1157, -12.004999
        %v1190 = vmul.f32 %v1158, -12.004999
        %v1191 = vmul.f32 %v1159, -12.004999
        %v1192 = vmul.f32 %v1160, -12.004999
        %v1193 = vmul.f32 %v1161, -12.004999
        %v1194 = vmul.f32 %v1162, -12.004999
        %v1195 = vmul.f32 %v1163, -12.004999
        %v1196 = vmul.f32 %v1164, -12.004999
        %v1197 = vmul.f32 %v1165, -12.004999
        %v1198 = vmul.f32 %v1166, -12.004999
        %v1199 = vmul.f32 %v1167, -12.004999
        %v1200 = vmul.f32 %v1168, -12.004999
        %v1201 = vmul.f32 %v1169, -12.004999
        %v1202 = vmul.f32 %v1170, -12.004999
        %v1203 = vmul.f32 %v1171, -12.004999
        %v1204 = vmul.f32 %v1172, 1.442695
        %v1205 = vpow.pop %v1204
        %v1206 = vmul.f32 %v1173, 1.442695
        %v1207 = vpow.pop %v1206
        %v1208 = vmul.f32 %v1174, 1.442695
        %v1209 = vpow.pop %v1208
        %v1210 = vmul.f32 %v1175, 1.442695
        %v1211 = vpow.pop %v1210
        %v1212 = vmul.f32 %v1176, 1.442695
        %v1213 = vpow.pop %v1212
        %v1214 = vmul.f32 %v1177, 1.442695
        %v1215 = vpow.pop %v1214
        %v1216 = vmul.f32 %v1178, 1.442695
        %v1217 = vpow.pop %v1216
        %v1218 = vmul.f32 %v1179, 1.442695
        %v1219 = vpow.pop %v1218
        %v1220 = vmul.f32 %v1180, 1.442695
        %v1221 = vpow.pop %v1220
        %v1222 = vmul.f32 %v1181, 1.442695
        %v1223 = vpow.pop %v1222
        %v1224 = vmul.f32 %v1182, 1.442695
        %v1225 = vpow.pop %v1224
        %v1226 = vmul.f32 %v1183, 1.442695
        %v1227 = vpow.pop %v1226
        %v1228 = vmul.f32 %v1184, 1.442695
        %v1229 = vpow.pop %v1228
        %v1230 = vmul.f32 %v1185, 1.442695
        %v1231 = vpow.pop %v1230
        %v1232 = vmul.f32 %v1186, 1.442695
        %v1233 = vpow.pop %v1232
        %v1234 = vmul.f32 %v1187, 1.442695
        %v1235 = vpow.pop %v1234
        %v1236 = vmul.f32 %v1188, 1.442695
        %v1237 = vpow.pop %v1236
        %v1238 = vmul.f32 %v1189, 1.442695
        %v1239 = vpow.pop %v1238
        %v1240 = vmul.f32 %v1190, 1.442695
        %v1241 = vpow.pop %v1240
        %v1242 = vmul.f32 %v1191, 1.442695
        %v1243 = vpow.pop %v1242
        %v1244 = vmul.f32 %v1192, 1.442695
        %v1245 = vpow.pop %v1244
        %v1246 = vmul.f32 %v1193, 1.442695
        %v1247 = vpow.pop %v1246
        %v1248 = vmul.f32 %v1194, 1.442695
        %v1249 = vpow.pop %v1248
        %v1250 = vmul.f32 %v1195, 1.442695
        %v1251 = vpow.pop %v1250
        %v1252 = vmul.f32 %v1196, 1.442695
        %v1253 = vpow.pop %v1252
        %v1254 = vmul.f32 %v1197, 1.442695
        %v1255 = vpow.pop %v1254
        %v1256 = vmul.f32 %v1198, 1.442695
        %v1257 = vpow.pop %v1256
        %v1258 = vmul.f32 %v1199, 1.442695
        %v1259 = vpow.pop %v1258
        %v1260 = vmul.f32 %v1200, 1.442695
        %v1261 = vpow.pop %v1260
        %v1262 = vmul.f32 %v1201, 1.442695
        %v1263 = vpow.pop %v1262
        %v1264 = vmul.f32 %v1202, 1.442695
        %v1265 = vpow.pop %v1264
        %v1266 = vmul.f32 %v1203, 1.442695
        %v1267 = vpow.pop %v1266
        %v1268 = vpack.c.bf16 %v1207, %v1205
        %v1269 = vpack.c.bf16 %v1211, %v1209
        %v1270 = vpack.c.bf16 %v1215, %v1213
        %v1271 = vpack.c.bf16 %v1219, %v1217
        %v1272 = vpack.c.bf16 %v1223, %v1221
        %v1273 = vpack.c.bf16 %v1227, %v1225
        %v1274 = vpack.c.bf16 %v1231, %v1229
        %v1275 = vpack.c.bf16 %v1235, %v1233
        %v1276 = vpack.c.bf16 %v1239, %v1237
        %v1277 = vpack.c.bf16 %v1243, %v1241
        %v1278 = vpack.c.bf16 %v1247, %v1245
        %v1279 = vpack.c.bf16 %v1251, %v1249
        %v1280 = vpack.c.bf16 %v1255, %v1253
        %v1281 = vpack.c.bf16 %v1259, %v1257
        %v1282 = vpack.c.bf16 %v1263, %v1261
        %v1283 = vpack.c.bf16 %v1267, %v1265
        %v1284 = vld [vmem:[%s735] sm:$0xf]
        %v1285 = vld [vmem:[%s735 + $0x4] sm:$0xf]
        %v1286 = vld [vmem:[%s735 + $0x8] sm:$0xf]
        %v1287 = vld [vmem:[%s735 + $0xc] sm:$0xf]
        %v1288 = vld [vmem:[%s735 + $0x10] sm:$0xf]
        %v1289 = vld [vmem:[%s735 + $0x14] sm:$0xf]
        %v1290 = vld [vmem:[%s735 + $0x18] sm:$0xf]
        %v1291 = vld [vmem:[%s735 + $0x1c] sm:$0xf]
        %v1292 = vld [vmem:[%s735 + $0x20] sm:$0xf]
        %v1293 = vld [vmem:[%s735 + $0x24] sm:$0xf]
        %v1294 = vld [vmem:[%s735 + $0x28] sm:$0xf]
        %v1295 = vld [vmem:[%s735 + $0x2c] sm:$0xf]
        %v1296 = vld [vmem:[%s735 + $0x30] sm:$0xf]
        %v1297 = vld [vmem:[%s735 + $0x34] sm:$0xf]
        %v1298 = vld [vmem:[%s735 + $0x38] sm:$0xf]
        %v1299 = vld [vmem:[%s735 + $0x3c] sm:$0xf]
        %v1300 = vld [vmem:[%s743] sm:$0x1]
        %v1302 = vlaneseq
        %v1303 = vshrl.u32 %v1302, 7
        %v1304 = vsub.s32 0, %v1303
        %v1305 = vrot.slane %v1300, %v1304
        %v1323 = vunpack.c.l.b16 %v1284
        %v1324 = vunpack.c.l.b16 %v1285
        %v1325 = vunpack.c.l.b16 %v1286
        %v1326 = vunpack.c.l.b16 %v1287
        %v1327 = vunpack.c.l.b16 %v1288
        %v1328 = vunpack.c.l.b16 %v1289
        %v1329 = vunpack.c.l.b16 %v1290
        %v1330 = vunpack.c.l.b16 %v1291
        %v1331 = vunpack.c.l.b16 %v1292
        %v1332 = vunpack.c.l.b16 %v1293
        %v1333 = vunpack.c.l.b16 %v1294
        %v1334 = vunpack.c.l.b16 %v1295
        %v1335 = vunpack.c.l.b16 %v1296
        %v1336 = vunpack.c.l.b16 %v1297
        %v1337 = vunpack.c.l.b16 %v1298
        %v1338 = vunpack.c.l.b16 %v1299
        %v1339 = vpack.c.b16 %v1324, %v1323
        %v1340 = vpack.c.b16 %v1326, %v1325
        %v1341 = vpack.c.b16 %v1328, %v1327
        %v1342 = vpack.c.b16 %v1330, %v1329
        %v1343 = vpack.c.b16 %v1332, %v1331
        %v1344 = vpack.c.b16 %v1334, %v1333
        %v1345 = vpack.c.b16 %v1336, %v1335
        %v1346 = vpack.c.b16 %v1338, %v1337
        %1355 = vmatprep.subr.bf16.mxu0 0
        %1356 = vmatpush1.bf16.msra.mxu0 %v1339
        %1357 = vmatprep.subr.bf16.mxu0 0
        %1358 = vmatpush1.bf16.msra.mxu0 %v1340
        %1359 = vmatprep.subr.bf16.mxu0 0
        %1360 = vmatpush1.bf16.msra.mxu0 %v1341
        %1361 = vmatprep.subr.bf16.mxu0 0
        %1362 = vmatpush1.bf16.msra.mxu0 %v1342
        %1363 = vmatprep.subr.bf16.mxu0 0
        %1364 = vmatpush1.bf16.msra.mxu0 %v1343
        %1365 = vmatprep.subr.bf16.mxu0 0
        %1366 = vmatpush1.bf16.msra.mxu0 %v1344
        %1367 = vmatprep.subr.bf16.mxu0 0
        %1368 = vmatpush1.bf16.msra.mxu0 %v1345
        %1369 = vmatprep.subr.bf16.mxu0 0
        %1370 = vmatpush1.bf16.msra.mxu0 %v1346
        %1371 = vmatprep.subr.bf16.mxu0 0
        %1372 = vmatpush1.bf16.msra.mxu0 0
        %1373 = vmatprep.subr.bf16.mxu0 0
        %1374 = vmatpush1.bf16.msra.mxu0 0
        %1375 = vmatprep.subr.bf16.mxu0 0
        %1376 = vmatpush1.bf16.msra.mxu0 0
        %1377 = vmatprep.subr.bf16.mxu0 0
        %1378 = vmatpush1.bf16.msra.mxu0 0
        %1379 = vmatprep.subr.bf16.mxu0 0
        %1380 = vmatpush1.bf16.msra.mxu0 0
        %1381 = vmatprep.subr.bf16.mxu0 0
        %1382 = vmatpush1.bf16.msra.mxu0 0
        %1383 = vmatprep.subr.bf16.mxu0 0
        %1384 = vmatpush1.bf16.msra.mxu0 0
        %1385 = vmatprep.subr.bf16.mxu0 0
        %1386 = vmatpush1.bf16.msra.mxu0 0
        %1387 = vmatprep.mubr.bf16.mxu0 0
        %1388 = vmatmul.mubr.bf16.gmra.mrb[0].mxu0 %v1268
        %v1389 = vpop.f32.mrb[0].mxu0
        %v1390 = vadd.f32 %v1305, %v1389
        %v1391 = vpop.f32.mrb[0].mxu0
        %v1392 = vpop.f32.mrb[0].mxu0
        %v1393 = vadd.f32 %v1305, %v1392
        %v1394 = vpop.f32.mrb[0].mxu0
        %1395 = vmatprep.mubr.bf16.mxu0 0
        %1396 = vmatmul.mubr.bf16.gmra.mrb[0].mxu0 %v1269
        %v1397 = vpop.f32.mrb[0].mxu0
        %v1398 = vadd.f32 %v1305, %v1397
        %v1399 = vpop.f32.mrb[0].mxu0
        %v1400 = vpop.f32.mrb[0].mxu0
        %v1401 = vadd.f32 %v1305, %v1400
        %v1402 = vpop.f32.mrb[0].mxu0
        %1403 = vmatprep.mubr.bf16.mxu0 0
        %1404 = vmatmul.mubr.bf16.gmra.mrb[0].mxu0 %v1270
        %v1405 = vpop.f32.mrb[0].mxu0
        %v1406 = vadd.f32 %v1305, %v1405
        %v1407 = vpop.f32.mrb[0].mxu0
        %v1408 = vpop.f32.mrb[0].mxu0
        %v1409 = vadd.f32 %v1305, %v1408
        %v1410 = vpop.f32.mrb[0].mxu0
        %1411 = vmatprep.mubr.bf16.mxu0 0
        %1412 = vmatmul.mubr.bf16.gmra.mrb[0].mxu0 %v1271
        %v1413 = vpop.f32.mrb[0].mxu0
        %v1414 = vadd.f32 %v1305, %v1413
        %v1415 = vpop.f32.mrb[0].mxu0
        %v1416 = vpop.f32.mrb[0].mxu0
        %v1417 = vadd.f32 %v1305, %v1416
        %v1418 = vpop.f32.mrb[0].mxu0
        %1419 = vmatprep.mubr.bf16.mxu0 0
        %1420 = vmatmul.mubr.bf16.gmra.mrb[0].mxu0 %v1272
        %v1421 = vpop.f32.mrb[0].mxu0
        %v1422 = vadd.f32 %v1305, %v1421
        %v1423 = vpop.f32.mrb[0].mxu0
        %v1424 = vpop.f32.mrb[0].mxu0
        %v1425 = vadd.f32 %v1305, %v1424
        %v1426 = vpop.f32.mrb[0].mxu0
        %1427 = vmatprep.mubr.bf16.mxu0 0
        %1428 = vmatmul.mubr.bf16.gmra.mrb[0].mxu0 %v1273
        %v1429 = vpop.f32.mrb[0].mxu0
        %v1430 = vadd.f32 %v1305, %v1429
        %v1431 = vpop.f32.mrb[0].mxu0
        %v1432 = vpop.f32.mrb[0].mxu0
        %v1433 = vadd.f32 %v1305, %v1432
        %v1434 = vpop.f32.mrb[0].mxu0
        %1435 = vmatprep.mubr.bf16.mxu0 0
        %1436 = vmatmul.mubr.bf16.gmra.mrb[0].mxu0 %v1274
        %v1437 = vpop.f32.mrb[0].mxu0
        %v1438 = vadd.f32 %v1305, %v1437
        %v1439 = vpop.f32.mrb[0].mxu0
        %v1440 = vpop.f32.mrb[0].mxu0
        %v1441 = vadd.f32 %v1305, %v1440
        %v1442 = vpop.f32.mrb[0].mxu0
        %1443 = vmatprep.mubr.bf16.mxu0 0
        %1444 = vmatmul.mubr.bf16.gmra.mrb[0].mxu0 %v1275
        %v1445 = vpop.f32.mrb[0].mxu0
        %v1446 = vadd.f32 %v1305, %v1445
        %v1447 = vpop.f32.mrb[0].mxu0
        %v1448 = vpop.f32.mrb[0].mxu0
        %v1449 = vadd.f32 %v1305, %v1448
        %v1450 = vpop.f32.mrb[0].mxu0
        %1451 = vmatprep.mubr.bf16.mxu0 0
        %1452 = vmatmul.mubr.bf16.gmra.mrb[0].mxu0 %v1276
        %v1453 = vpop.f32.mrb[0].mxu0
        %v1454 = vadd.f32 %v1305, %v1453
        %v1455 = vpop.f32.mrb[0].mxu0
        %v1456 = vpop.f32.mrb[0].mxu0
        %v1457 = vadd.f32 %v1305, %v1456
        %v1458 = vpop.f32.mrb[0].mxu0
        %1459 = vmatprep.mubr.bf16.mxu0 0
        %1460 = vmatmul.mubr.bf16.gmra.mrb[0].mxu0 %v1277
        %v1461 = vpop.f32.mrb[0].mxu0
        %v1462 = vadd.f32 %v1305, %v1461
        %v1463 = vpop.f32.mrb[0].mxu0
        %v1464 = vpop.f32.mrb[0].mxu0
        %v1465 = vadd.f32 %v1305, %v1464
        %v1466 = vpop.f32.mrb[0].mxu0
        %1467 = vmatprep.mubr.bf16.mxu0 0
        %1468 = vmatmul.mubr.bf16.gmra.mrb[0].mxu0 %v1278
        %v1469 = vpop.f32.mrb[0].mxu0
        %v1470 = vadd.f32 %v1305, %v1469
        %v1471 = vpop.f32.mrb[0].mxu0
        %v1472 = vpop.f32.mrb[0].mxu0
        %v1473 = vadd.f32 %v1305, %v1472
        %v1474 = vpop.f32.mrb[0].mxu0
        %1475 = vmatprep.mubr.bf16.mxu0 0
        %1476 = vmatmul.mubr.bf16.gmra.mrb[0].mxu0 %v1279
        %v1477 = vpop.f32.mrb[0].mxu0
        %v1478 = vadd.f32 %v1305, %v1477
        %v1479 = vpop.f32.mrb[0].mxu0
        %v1480 = vpop.f32.mrb[0].mxu0
        %v1481 = vadd.f32 %v1305, %v1480
        %v1482 = vpop.f32.mrb[0].mxu0
        %1483 = vmatprep.mubr.bf16.mxu0 0
        %1484 = vmatmul.mubr.bf16.gmra.mrb[0].mxu0 %v1280
        %v1485 = vpop.f32.mrb[0].mxu0
        %v1486 = vadd.f32 %v1305, %v1485
        %v1487 = vpop.f32.mrb[0].mxu0
        %v1488 = vpop.f32.mrb[0].mxu0
        %v1489 = vadd.f32 %v1305, %v1488
        %v1490 = vpop.f32.mrb[0].mxu0
        %1491 = vmatprep.mubr.bf16.mxu0 0
        %1492 = vmatmul.mubr.bf16.gmra.mrb[0].mxu0 %v1281
        %v1493 = vpop.f32.mrb[0].mxu0
        %v1494 = vadd.f32 %v1305, %v1493
        %v1495 = vpop.f32.mrb[0].mxu0
        %v1496 = vpop.f32.mrb[0].mxu0
        %v1497 = vadd.f32 %v1305, %v1496
        %v1498 = vpop.f32.mrb[0].mxu0
        %1499 = vmatprep.mubr.bf16.mxu0 0
        %1500 = vmatmul.mubr.bf16.gmra.mrb[0].mxu0 %v1282
        %v1501 = vpop.f32.mrb[0].mxu0
        %v1502 = vadd.f32 %v1305, %v1501
        %v1503 = vpop.f32.mrb[0].mxu0
        %v1504 = vpop.f32.mrb[0].mxu0
        %v1505 = vadd.f32 %v1305, %v1504
        %v1506 = vpop.f32.mrb[0].mxu0
        %1507 = vmatprep.mubr.bf16.mxu0 0
        %1508 = vmatmul.mubr.bf16.gmra.mrb[0].mxu0 %v1283
        %v1509 = vpop.f32.mrb[0].mxu0
        %v1510 = vadd.f32 %v1305, %v1509
        %v1511 = vpop.f32.mrb[0].mxu0
        %v1512 = vpop.f32.mrb[0].mxu0
        %v1513 = vadd.f32 %v1305, %v1512
        %v1514 = vpop.f32.mrb[0].mxu0
        %1515 = vdwg.mxu0
        %v1516 = vmax.f32 %v1390, 0.0
        %v1517 = vmax.f32 %v1393, 0.0
        %v1518 = vmax.f32 %v1398, 0.0
        %v1519 = vmax.f32 %v1401, 0.0
        %v1520 = vmax.f32 %v1406, 0.0
        %v1521 = vmax.f32 %v1409, 0.0
        %v1522 = vmax.f32 %v1414, 0.0
        %v1523 = vmax.f32 %v1417, 0.0
        %v1524 = vmax.f32 %v1422, 0.0
        %v1525 = vmax.f32 %v1425, 0.0
        %v1526 = vmax.f32 %v1430, 0.0
        %v1527 = vmax.f32 %v1433, 0.0
        %v1528 = vmax.f32 %v1438, 0.0
        %v1529 = vmax.f32 %v1441, 0.0
        %v1530 = vmax.f32 %v1446, 0.0
        %v1531 = vmax.f32 %v1449, 0.0
        %v1532 = vmax.f32 %v1454, 0.0
        %v1533 = vmax.f32 %v1457, 0.0
        %v1534 = vmax.f32 %v1462, 0.0
        %v1535 = vmax.f32 %v1465, 0.0
        %v1536 = vmax.f32 %v1470, 0.0
        %v1537 = vmax.f32 %v1473, 0.0
        %v1538 = vmax.f32 %v1478, 0.0
        %v1539 = vmax.f32 %v1481, 0.0
        %v1540 = vmax.f32 %v1486, 0.0
        %v1541 = vmax.f32 %v1489, 0.0
        %v1542 = vmax.f32 %v1494, 0.0
        %v1543 = vmax.f32 %v1497, 0.0
        %v1544 = vmax.f32 %v1502, 0.0
        %v1545 = vmax.f32 %v1505, 0.0
        %v1546 = vmax.f32 %v1510, 0.0
        %v1547 = vmax.f32 %v1513, 0.0
        %vm1548 = vcmp.ne.f32.partialorder %v1390, %v1390
        %vm1549 = vcmp.ne.f32.partialorder %v1393, %v1393
        %vm1550 = vcmp.ne.f32.partialorder %v1398, %v1398
        %vm1551 = vcmp.ne.f32.partialorder %v1401, %v1401
        %vm1552 = vcmp.ne.f32.partialorder %v1406, %v1406
        %vm1553 = vcmp.ne.f32.partialorder %v1409, %v1409
        %vm1554 = vcmp.ne.f32.partialorder %v1414, %v1414
        %vm1555 = vcmp.ne.f32.partialorder %v1417, %v1417
        %vm1556 = vcmp.ne.f32.partialorder %v1422, %v1422
        %vm1557 = vcmp.ne.f32.partialorder %v1425, %v1425
        %vm1558 = vcmp.ne.f32.partialorder %v1430, %v1430
        %vm1559 = vcmp.ne.f32.partialorder %v1433, %v1433
        %vm1560 = vcmp.ne.f32.partialorder %v1438, %v1438
        %vm1561 = vcmp.ne.f32.partialorder %v1441, %v1441
        %vm1562 = vcmp.ne.f32.partialorder %v1446, %v1446
        %vm1563 = vcmp.ne.f32.partialorder %v1449, %v1449
        %vm1564 = vcmp.ne.f32.partialorder %v1454, %v1454
        %vm1565 = vcmp.ne.f32.partialorder %v1457, %v1457
        %vm1566 = vcmp.ne.f32.partialorder %v1462, %v1462
        %vm1567 = vcmp.ne.f32.partialorder %v1465, %v1465
        %vm1568 = vcmp.ne.f32.partialorder %v1470, %v1470
        %vm1569 = vcmp.ne.f32.partialorder %v1473, %v1473
        %vm1570 = vcmp.ne.f32.partialorder %v1478, %v1478
        %vm1571 = vcmp.ne.f32.partialorder %v1481, %v1481
        %vm1572 = vcmp.ne.f32.partialorder %v1486, %v1486
        %vm1573 = vcmp.ne.f32.partialorder %v1489, %v1489
        %vm1574 = vcmp.ne.f32.partialorder %v1494, %v1494
        %vm1575 = vcmp.ne.f32.partialorder %v1497, %v1497
        %vm1576 = vcmp.ne.f32.partialorder %v1502, %v1502
        %vm1577 = vcmp.ne.f32.partialorder %v1505, %v1505
        %vm1578 = vcmp.ne.f32.partialorder %v1510, %v1510
        %vm1579 = vcmp.ne.f32.partialorder %v1513, %v1513
        %v1580 = vadd.f32 %v1390, 0.0
        %v1581 = vadd.f32 %v1393, 0.0
        %v1582 = vadd.f32 %v1398, 0.0
        %v1583 = vadd.f32 %v1401, 0.0
        %v1584 = vadd.f32 %v1406, 0.0
        %v1585 = vadd.f32 %v1409, 0.0
        %v1586 = vadd.f32 %v1414, 0.0
        %v1587 = vadd.f32 %v1417, 0.0
        %v1588 = vadd.f32 %v1422, 0.0
        %v1589 = vadd.f32 %v1425, 0.0
        %v1590 = vadd.f32 %v1430, 0.0
        %v1591 = vadd.f32 %v1433, 0.0
        %v1592 = vadd.f32 %v1438, 0.0
        %v1593 = vadd.f32 %v1441, 0.0
        %v1594 = vadd.f32 %v1446, 0.0
        %v1595 = vadd.f32 %v1449, 0.0
        %v1596 = vadd.f32 %v1454, 0.0
        %v1597 = vadd.f32 %v1457, 0.0
        %v1598 = vadd.f32 %v1462, 0.0
        %v1599 = vadd.f32 %v1465, 0.0
        %v1600 = vadd.f32 %v1470, 0.0
        %v1601 = vadd.f32 %v1473, 0.0
        %v1602 = vadd.f32 %v1478, 0.0
        %v1603 = vadd.f32 %v1481, 0.0
        %v1604 = vadd.f32 %v1486, 0.0
        %v1605 = vadd.f32 %v1489, 0.0
        %v1606 = vadd.f32 %v1494, 0.0
        %v1607 = vadd.f32 %v1497, 0.0
        %v1608 = vadd.f32 %v1502, 0.0
        %v1609 = vadd.f32 %v1505, 0.0
        %v1610 = vadd.f32 %v1510, 0.0
        %v1611 = vadd.f32 %v1513, 0.0
        %v1612 = vand.u32 2147483647, %v1390
        %v1613 = vand.u32 2147483647, %v1393
        %v1614 = vand.u32 2147483647, %v1398
        %v1615 = vand.u32 2147483647, %v1401
        %v1616 = vand.u32 2147483647, %v1406
        %v1617 = vand.u32 2147483647, %v1409
        %v1618 = vand.u32 2147483647, %v1414
        %v1619 = vand.u32 2147483647, %v1417
        %v1620 = vand.u32 2147483647, %v1422
        %v1621 = vand.u32 2147483647, %v1425
        %v1622 = vand.u32 2147483647, %v1430
        %v1623 = vand.u32 2147483647, %v1433
        %v1624 = vand.u32 2147483647, %v1438
        %v1625 = vand.u32 2147483647, %v1441
        %v1626 = vand.u32 2147483647, %v1446
        %v1627 = vand.u32 2147483647, %v1449
        %v1628 = vand.u32 2147483647, %v1454
        %v1629 = vand.u32 2147483647, %v1457
        %v1630 = vand.u32 2147483647, %v1462
        %v1631 = vand.u32 2147483647, %v1465
        %v1632 = vand.u32 2147483647, %v1470
        %v1633 = vand.u32 2147483647, %v1473
        %v1634 = vand.u32 2147483647, %v1478
        %v1635 = vand.u32 2147483647, %v1481
        %v1636 = vand.u32 2147483647, %v1486
        %v1637 = vand.u32 2147483647, %v1489
        %v1638 = vand.u32 2147483647, %v1494
        %v1639 = vand.u32 2147483647, %v1497
        %v1640 = vand.u32 2147483647, %v1502
        %v1641 = vand.u32 2147483647, %v1505
        %v1642 = vand.u32 2147483647, %v1510
        %v1643 = vand.u32 2147483647, %v1513
        %v1644 = vsub.f32 0.0, %v1612
        %v1645 = vsub.f32 0.0, %v1613
        %v1646 = vsub.f32 0.0, %v1614
        %v1647 = vsub.f32 0.0, %v1615
        %v1648 = vsub.f32 0.0, %v1616
        %v1649 = vsub.f32 0.0, %v1617
        %v1650 = vsub.f32 0.0, %v1618
        %v1651 = vsub.f32 0.0, %v1619
        %v1652 = vsub.f32 0.0, %v1620
        %v1653 = vsub.f32 0.0, %v1621
        %v1654 = vsub.f32 0.0, %v1622
        %v1655 = vsub.f32 0.0, %v1623
        %v1656 = vsub.f32 0.0, %v1624
        %v1657 = vsub.f32 0.0, %v1625
        %v1658 = vsub.f32 0.0, %v1626
        %v1659 = vsub.f32 0.0, %v1627
        %v1660 = vsub.f32 0.0, %v1628
        %v1661 = vsub.f32 0.0, %v1629
        %v1662 = vsub.f32 0.0, %v1630
        %v1663 = vsub.f32 0.0, %v1631
        %v1664 = vsub.f32 0.0, %v1632
        %v1665 = vsub.f32 0.0, %v1633
        %v1666 = vsub.f32 0.0, %v1634
        %v1667 = vsub.f32 0.0, %v1635
        %v1668 = vsub.f32 0.0, %v1636
        %v1669 = vsub.f32 0.0, %v1637
        %v1670 = vsub.f32 0.0, %v1638
        %v1671 = vsub.f32 0.0, %v1639
        %v1672 = vsub.f32 0.0, %v1640
        %v1673 = vsub.f32 0.0, %v1641
        %v1674 = vsub.f32 0.0, %v1642
        %v1675 = vsub.f32 0.0, %v1643
        %v1676 = vmul.f32 %v1644, 1.442695
        %v1677 = vpow.pop %v1676
        %v1678 = vmul.f32 %v1645, 1.442695
        %v1679 = vpow.pop %v1678
        %v1680 = vmul.f32 %v1646, 1.442695
        %v1681 = vpow.pop %v1680
        %v1682 = vmul.f32 %v1647, 1.442695
        %v1683 = vpow.pop %v1682
        %v1684 = vmul.f32 %v1648, 1.442695
        %v1685 = vpow.pop %v1684
        %v1686 = vmul.f32 %v1649, 1.442695
        %v1687 = vpow.pop %v1686
        %v1688 = vmul.f32 %v1650, 1.442695
        %v1689 = vpow.pop %v1688
        %v1690 = vmul.f32 %v1651, 1.442695
        %v1691 = vpow.pop %v1690
        %v1692 = vmul.f32 %v1652, 1.442695
        %v1693 = vpow.pop %v1692
        %v1694 = vmul.f32 %v1653, 1.442695
        %v1695 = vpow.pop %v1694
        %v1696 = vmul.f32 %v1654, 1.442695
        %v1697 = vpow.pop %v1696
        %v1698 = vmul.f32 %v1655, 1.442695
        %v1699 = vpow.pop %v1698
        %v1700 = vmul.f32 %v1656, 1.442695
        %v1701 = vpow.pop %v1700
        %v1702 = vmul.f32 %v1657, 1.442695
        %v1703 = vpow.pop %v1702
        %v1704 = vmul.f32 %v1658, 1.442695
        %v1705 = vpow.pop %v1704
        %v1706 = vmul.f32 %v1659, 1.442695
        %v1707 = vpow.pop %v1706
        %v1708 = vmul.f32 %v1660, 1.442695
        %v1709 = vpow.pop %v1708
        %v1710 = vmul.f32 %v1661, 1.442695
        %v1711 = vpow.pop %v1710
        %v1712 = vmul.f32 %v1662, 1.442695
        %v1713 = vpow.pop %v1712
        %v1714 = vmul.f32 %v1663, 1.442695
        %v1715 = vpow.pop %v1714
        %v1716 = vmul.f32 %v1664, 1.442695
        %v1717 = vpow.pop %v1716
        %v1718 = vmul.f32 %v1665, 1.442695
        %v1719 = vpow.pop %v1718
        %v1720 = vmul.f32 %v1666, 1.442695
        %v1721 = vpow.pop %v1720
        %v1722 = vmul.f32 %v1667, 1.442695
        %v1723 = vpow.pop %v1722
        %v1724 = vmul.f32 %v1668, 1.442695
        %v1725 = vpow.pop %v1724
        %v1726 = vmul.f32 %v1669, 1.442695
        %v1727 = vpow.pop %v1726
        %v1728 = vmul.f32 %v1670, 1.442695
        %v1729 = vpow.pop %v1728
        %v1730 = vmul.f32 %v1671, 1.442695
        %v1731 = vpow.pop %v1730
        %v1732 = vmul.f32 %v1672, 1.442695
        %v1733 = vpow.pop %v1732
        %v1734 = vmul.f32 %v1673, 1.442695
        %v1735 = vpow.pop %v1734
        %v1736 = vmul.f32 %v1674, 1.442695
        %v1737 = vpow.pop %v1736
        %v1738 = vmul.f32 %v1675, 1.442695
        %v1739 = vpow.pop %v1738
        %v1740 = vadd.f32 %v1677, 1.0
        %v1741 = vlog2.pop %v1740
        %v1742 = vmul.f32 %v1741, 0.6931472
        %v1743 = vmul.f32 -0.5, %v1677
        %v1744 = vadd.f32 %v1743, 1.0
        %v1745 = vmul.f32 %v1744, %v1677
        %v1746 = vand.u32 2147483647, %v1677
        %vm1747 = vcmp.lt.f32.partialorder %v1746, 0.0004427343
        %v1748 = vsel %vm1747, %v1745, %v1742
        %v1749 = vadd.f32 %v1679, 1.0
        %v1750 = vlog2.pop %v1749
        %v1751 = vmul.f32 %v1750, 0.6931472
        %v1752 = vmul.f32 -0.5, %v1679
        %v1753 = vadd.f32 %v1752, 1.0
        %v1754 = vmul.f32 %v1753, %v1679
        %v1755 = vand.u32 2147483647, %v1679
        %vm1756 = vcmp.lt.f32.partialorder %v1755, 0.0004427343
        %v1757 = vsel %vm1756, %v1754, %v1751
        %v1758 = vadd.f32 %v1681, 1.0
        %v1759 = vlog2.pop %v1758
        %v1760 = vmul.f32 %v1759, 0.6931472
        %v1761 = vmul.f32 -0.5, %v1681
        %v1762 = vadd.f32 %v1761, 1.0
        %v1763 = vmul.f32 %v1762, %v1681
        %v1764 = vand.u32 2147483647, %v1681
        %vm1765 = vcmp.lt.f32.partialorder %v1764, 0.0004427343
        %v1766 = vsel %vm1765, %v1763, %v1760
        %v1767 = vadd.f32 %v1683, 1.0
        %v1768 = vlog2.pop %v1767
        %v1769 = vmul.f32 %v1768, 0.6931472
        %v1770 = vmul.f32 -0.5, %v1683
        %v1771 = vadd.f32 %v1770, 1.0
        %v1772 = vmul.f32 %v1771, %v1683
        %v1773 = vand.u32 2147483647, %v1683
        %vm1774 = vcmp.lt.f32.partialorder %v1773, 0.0004427343
        %v1775 = vsel %vm1774, %v1772, %v1769
        %v1776 = vadd.f32 %v1685, 1.0
        %v1777 = vlog2.pop %v1776
        %v1778 = vmul.f32 %v1777, 0.6931472
        %v1779 = vmul.f32 -0.5, %v1685
        %v1780 = vadd.f32 %v1779, 1.0
        %v1781 = vmul.f32 %v1780, %v1685
        %v1782 = vand.u32 2147483647, %v1685
        %vm1783 = vcmp.lt.f32.partialorder %v1782, 0.0004427343
        %v1784 = vsel %vm1783, %v1781, %v1778
        %v1785 = vadd.f32 %v1687, 1.0
        %v1786 = vlog2.pop %v1785
        %v1787 = vmul.f32 %v1786, 0.6931472
        %v1788 = vmul.f32 -0.5, %v1687
        %v1789 = vadd.f32 %v1788, 1.0
        %v1790 = vmul.f32 %v1789, %v1687
        %v1791 = vand.u32 2147483647, %v1687
        %vm1792 = vcmp.lt.f32.partialorder %v1791, 0.0004427343
        %v1793 = vsel %vm1792, %v1790, %v1787
        %v1794 = vadd.f32 %v1689, 1.0
        %v1795 = vlog2.pop %v1794
        %v1796 = vmul.f32 %v1795, 0.6931472
        %v1797 = vmul.f32 -0.5, %v1689
        %v1798 = vadd.f32 %v1797, 1.0
        %v1799 = vmul.f32 %v1798, %v1689
        %v1800 = vand.u32 2147483647, %v1689
        %vm1801 = vcmp.lt.f32.partialorder %v1800, 0.0004427343
        %v1802 = vsel %vm1801, %v1799, %v1796
        %v1803 = vadd.f32 %v1691, 1.0
        %v1804 = vlog2.pop %v1803
        %v1805 = vmul.f32 %v1804, 0.6931472
        %v1806 = vmul.f32 -0.5, %v1691
        %v1807 = vadd.f32 %v1806, 1.0
        %v1808 = vmul.f32 %v1807, %v1691
        %v1809 = vand.u32 2147483647, %v1691
        %vm1810 = vcmp.lt.f32.partialorder %v1809, 0.0004427343
        %v1811 = vsel %vm1810, %v1808, %v1805
        %v1812 = vadd.f32 %v1693, 1.0
        %v1813 = vlog2.pop %v1812
        %v1814 = vmul.f32 %v1813, 0.6931472
        %v1815 = vmul.f32 -0.5, %v1693
        %v1816 = vadd.f32 %v1815, 1.0
        %v1817 = vmul.f32 %v1816, %v1693
        %v1818 = vand.u32 2147483647, %v1693
        %vm1819 = vcmp.lt.f32.partialorder %v1818, 0.0004427343
        %v1820 = vsel %vm1819, %v1817, %v1814
        %v1821 = vadd.f32 %v1695, 1.0
        %v1822 = vlog2.pop %v1821
        %v1823 = vmul.f32 %v1822, 0.6931472
        %v1824 = vmul.f32 -0.5, %v1695
        %v1825 = vadd.f32 %v1824, 1.0
        %v1826 = vmul.f32 %v1825, %v1695
        %v1827 = vand.u32 2147483647, %v1695
        %vm1828 = vcmp.lt.f32.partialorder %v1827, 0.0004427343
        %v1829 = vsel %vm1828, %v1826, %v1823
        %v1830 = vadd.f32 %v1697, 1.0
        %v1831 = vlog2.pop %v1830
        %v1832 = vmul.f32 %v1831, 0.6931472
        %v1833 = vmul.f32 -0.5, %v1697
        %v1834 = vadd.f32 %v1833, 1.0
        %v1835 = vmul.f32 %v1834, %v1697
        %v1836 = vand.u32 2147483647, %v1697
        %vm1837 = vcmp.lt.f32.partialorder %v1836, 0.0004427343
        %v1838 = vsel %vm1837, %v1835, %v1832
        %v1839 = vadd.f32 %v1699, 1.0
        %v1840 = vlog2.pop %v1839
        %v1841 = vmul.f32 %v1840, 0.6931472
        %v1842 = vmul.f32 -0.5, %v1699
        %v1843 = vadd.f32 %v1842, 1.0
        %v1844 = vmul.f32 %v1843, %v1699
        %v1845 = vand.u32 2147483647, %v1699
        %vm1846 = vcmp.lt.f32.partialorder %v1845, 0.0004427343
        %v1847 = vsel %vm1846, %v1844, %v1841
        %v1848 = vadd.f32 %v1701, 1.0
        %v1849 = vlog2.pop %v1848
        %v1850 = vmul.f32 %v1849, 0.6931472
        %v1851 = vmul.f32 -0.5, %v1701
        %v1852 = vadd.f32 %v1851, 1.0
        %v1853 = vmul.f32 %v1852, %v1701
        %v1854 = vand.u32 2147483647, %v1701
        %vm1855 = vcmp.lt.f32.partialorder %v1854, 0.0004427343
        %v1856 = vsel %vm1855, %v1853, %v1850
        %v1857 = vadd.f32 %v1703, 1.0
        %v1858 = vlog2.pop %v1857
        %v1859 = vmul.f32 %v1858, 0.6931472
        %v1860 = vmul.f32 -0.5, %v1703
        %v1861 = vadd.f32 %v1860, 1.0
        %v1862 = vmul.f32 %v1861, %v1703
        %v1863 = vand.u32 2147483647, %v1703
        %vm1864 = vcmp.lt.f32.partialorder %v1863, 0.0004427343
        %v1865 = vsel %vm1864, %v1862, %v1859
        %v1866 = vadd.f32 %v1705, 1.0
        %v1867 = vlog2.pop %v1866
        %v1868 = vmul.f32 %v1867, 0.6931472
        %v1869 = vmul.f32 -0.5, %v1705
        %v1870 = vadd.f32 %v1869, 1.0
        %v1871 = vmul.f32 %v1870, %v1705
        %v1872 = vand.u32 2147483647, %v1705
        %vm1873 = vcmp.lt.f32.partialorder %v1872, 0.0004427343
        %v1874 = vsel %vm1873, %v1871, %v1868
        %v1875 = vadd.f32 %v1707, 1.0
        %v1876 = vlog2.pop %v1875
        %v1877 = vmul.f32 %v1876, 0.6931472
        %v1878 = vmul.f32 -0.5, %v1707
        %v1879 = vadd.f32 %v1878, 1.0
        %v1880 = vmul.f32 %v1879, %v1707
        %v1881 = vand.u32 2147483647, %v1707
        %vm1882 = vcmp.lt.f32.partialorder %v1881, 0.0004427343
        %v1883 = vsel %vm1882, %v1880, %v1877
        %v1884 = vadd.f32 %v1709, 1.0
        %v1885 = vlog2.pop %v1884
        %v1886 = vmul.f32 %v1885, 0.6931472
        %v1887 = vmul.f32 -0.5, %v1709
        %v1888 = vadd.f32 %v1887, 1.0
        %v1889 = vmul.f32 %v1888, %v1709
        %v1890 = vand.u32 2147483647, %v1709
        %vm1891 = vcmp.lt.f32.partialorder %v1890, 0.0004427343
        %v1892 = vsel %vm1891, %v1889, %v1886
        %v1893 = vadd.f32 %v1711, 1.0
        %v1894 = vlog2.pop %v1893
        %v1895 = vmul.f32 %v1894, 0.6931472
        %v1896 = vmul.f32 -0.5, %v1711
        %v1897 = vadd.f32 %v1896, 1.0
        %v1898 = vmul.f32 %v1897, %v1711
        %v1899 = vand.u32 2147483647, %v1711
        %vm1900 = vcmp.lt.f32.partialorder %v1899, 0.0004427343
        %v1901 = vsel %vm1900, %v1898, %v1895
        %v1902 = vadd.f32 %v1713, 1.0
        %v1903 = vlog2.pop %v1902
        %v1904 = vmul.f32 %v1903, 0.6931472
        %v1905 = vmul.f32 -0.5, %v1713
        %v1906 = vadd.f32 %v1905, 1.0
        %v1907 = vmul.f32 %v1906, %v1713
        %v1908 = vand.u32 2147483647, %v1713
        %vm1909 = vcmp.lt.f32.partialorder %v1908, 0.0004427343
        %v1910 = vsel %vm1909, %v1907, %v1904
        %v1911 = vadd.f32 %v1715, 1.0
        %v1912 = vlog2.pop %v1911
        %v1913 = vmul.f32 %v1912, 0.6931472
        %v1914 = vmul.f32 -0.5, %v1715
        %v1915 = vadd.f32 %v1914, 1.0
        %v1916 = vmul.f32 %v1915, %v1715
        %v1917 = vand.u32 2147483647, %v1715
        %vm1918 = vcmp.lt.f32.partialorder %v1917, 0.0004427343
        %v1919 = vsel %vm1918, %v1916, %v1913
        %v1920 = vadd.f32 %v1717, 1.0
        %v1921 = vlog2.pop %v1920
        %v1922 = vmul.f32 %v1921, 0.6931472
        %v1923 = vmul.f32 -0.5, %v1717
        %v1924 = vadd.f32 %v1923, 1.0
        %v1925 = vmul.f32 %v1924, %v1717
        %v1926 = vand.u32 2147483647, %v1717
        %vm1927 = vcmp.lt.f32.partialorder %v1926, 0.0004427343
        %v1928 = vsel %vm1927, %v1925, %v1922
        %v1929 = vadd.f32 %v1719, 1.0
        %v1930 = vlog2.pop %v1929
        %v1931 = vmul.f32 %v1930, 0.6931472
        %v1932 = vmul.f32 -0.5, %v1719
        %v1933 = vadd.f32 %v1932, 1.0
        %v1934 = vmul.f32 %v1933, %v1719
        %v1935 = vand.u32 2147483647, %v1719
        %vm1936 = vcmp.lt.f32.partialorder %v1935, 0.0004427343
        %v1937 = vsel %vm1936, %v1934, %v1931
        %v1938 = vadd.f32 %v1721, 1.0
        %v1939 = vlog2.pop %v1938
        %v1940 = vmul.f32 %v1939, 0.6931472
        %v1941 = vmul.f32 -0.5, %v1721
        %v1942 = vadd.f32 %v1941, 1.0
        %v1943 = vmul.f32 %v1942, %v1721
        %v1944 = vand.u32 2147483647, %v1721
        %vm1945 = vcmp.lt.f32.partialorder %v1944, 0.0004427343
        %v1946 = vsel %vm1945, %v1943, %v1940
        %v1947 = vadd.f32 %v1723, 1.0
        %v1948 = vlog2.pop %v1947
        %v1949 = vmul.f32 %v1948, 0.6931472
        %v1950 = vmul.f32 -0.5, %v1723
        %v1951 = vadd.f32 %v1950, 1.0
        %v1952 = vmul.f32 %v1951, %v1723
        %v1953 = vand.u32 2147483647, %v1723
        %vm1954 = vcmp.lt.f32.partialorder %v1953, 0.0004427343
        %v1955 = vsel %vm1954, %v1952, %v1949
        %v1956 = vadd.f32 %v1725, 1.0
        %v1957 = vlog2.pop %v1956
        %v1958 = vmul.f32 %v1957, 0.6931472
        %v1959 = vmul.f32 -0.5, %v1725
        %v1960 = vadd.f32 %v1959, 1.0
        %v1961 = vmul.f32 %v1960, %v1725
        %v1962 = vand.u32 2147483647, %v1725
        %vm1963 = vcmp.lt.f32.partialorder %v1962, 0.0004427343
        %v1964 = vsel %vm1963, %v1961, %v1958
        %v1965 = vadd.f32 %v1727, 1.0
        %v1966 = vlog2.pop %v1965
        %v1967 = vmul.f32 %v1966, 0.6931472
        %v1968 = vmul.f32 -0.5, %v1727
        %v1969 = vadd.f32 %v1968, 1.0
        %v1970 = vmul.f32 %v1969, %v1727
        %v1971 = vand.u32 2147483647, %v1727
        %vm1972 = vcmp.lt.f32.partialorder %v1971, 0.0004427343
        %v1973 = vsel %vm1972, %v1970, %v1967
        %v1974 = vadd.f32 %v1729, 1.0
        %v1975 = vlog2.pop %v1974
        %v1976 = vmul.f32 %v1975, 0.6931472
        %v1977 = vmul.f32 -0.5, %v1729
        %v1978 = vadd.f32 %v1977, 1.0
        %v1979 = vmul.f32 %v1978, %v1729
        %v1980 = vand.u32 2147483647, %v1729
        %vm1981 = vcmp.lt.f32.partialorder %v1980, 0.0004427343
        %v1982 = vsel %vm1981, %v1979, %v1976
        %v1983 = vadd.f32 %v1731, 1.0
        %v1984 = vlog2.pop %v1983
        %v1985 = vmul.f32 %v1984, 0.6931472
        %v1986 = vmul.f32 -0.5, %v1731
        %v1987 = vadd.f32 %v1986, 1.0
        %v1988 = vmul.f32 %v1987, %v1731
        %v1989 = vand.u32 2147483647, %v1731
        %vm1990 = vcmp.lt.f32.partialorder %v1989, 0.0004427343
        %v1991 = vsel %vm1990, %v1988, %v1985
        %v1992 = vadd.f32 %v1733, 1.0
        %v1993 = vlog2.pop %v1992
        %v1994 = vmul.f32 %v1993, 0.6931472
        %v1995 = vmul.f32 -0.5, %v1733
        %v1996 = vadd.f32 %v1995, 1.0
        %v1997 = vmul.f32 %v1996, %v1733
        %v1998 = vand.u32 2147483647, %v1733
        %vm1999 = vcmp.lt.f32.partialorder %v1998, 0.0004427343
        %v2000 = vsel %vm1999, %v1997, %v1994
        %v2001 = vadd.f32 %v1735, 1.0
        %v2002 = vlog2.pop %v2001
        %v2003 = vmul.f32 %v2002, 0.6931472
        %v2004 = vmul.f32 -0.5, %v1735
        %v2005 = vadd.f32 %v2004, 1.0
        %v2006 = vmul.f32 %v2005, %v1735
        %v2007 = vand.u32 2147483647, %v1735
        %vm2008 = vcmp.lt.f32.partialorder %v2007, 0.0004427343
        %v2009 = vsel %vm2008, %v2006, %v2003
        %v2010 = vadd.f32 %v1737, 1.0
        %v2011 = vlog2.pop %v2010
        %v2012 = vmul.f32 %v2011, 0.6931472
        %v2013 = vmul.f32 -0.5, %v1737
        %v2014 = vadd.f32 %v2013, 1.0
        %v2015 = vmul.f32 %v2014, %v1737
        %v2016 = vand.u32 2147483647, %v1737
        %vm2017 = vcmp.lt.f32.partialorder %v2016, 0.0004427343
        %v2018 = vsel %vm2017, %v2015, %v2012
        %v2019 = vadd.f32 %v1739, 1.0
        %v2020 = vlog2.pop %v2019
        %v2021 = vmul.f32 %v2020, 0.6931472
        %v2022 = vmul.f32 -0.5, %v1739
        %v2023 = vadd.f32 %v2022, 1.0
        %v2024 = vmul.f32 %v2023, %v1739
        %v2025 = vand.u32 2147483647, %v1739
        %vm2026 = vcmp.lt.f32.partialorder %v2025, 0.0004427343
        %v2027 = vsel %vm2026, %v2024, %v2021
        %v2028 = vadd.f32 %v1516, %v1748
        %v2029 = vadd.f32 %v1517, %v1757
        %v2030 = vadd.f32 %v1518, %v1766
        %v2031 = vadd.f32 %v1519, %v1775
        %v2032 = vadd.f32 %v1520, %v1784
        %v2033 = vadd.f32 %v1521, %v1793
        %v2034 = vadd.f32 %v1522, %v1802
        %v2035 = vadd.f32 %v1523, %v1811
        %v2036 = vadd.f32 %v1524, %v1820
        %v2037 = vadd.f32 %v1525, %v1829
        %v2038 = vadd.f32 %v1526, %v1838
        %v2039 = vadd.f32 %v1527, %v1847
        %v2040 = vadd.f32 %v1528, %v1856
        %v2041 = vadd.f32 %v1529, %v1865
        %v2042 = vadd.f32 %v1530, %v1874
        %v2043 = vadd.f32 %v1531, %v1883
        %v2044 = vadd.f32 %v1532, %v1892
        %v2045 = vadd.f32 %v1533, %v1901
        %v2046 = vadd.f32 %v1534, %v1910
        %v2047 = vadd.f32 %v1535, %v1919
        %v2048 = vadd.f32 %v1536, %v1928
        %v2049 = vadd.f32 %v1537, %v1937
        %v2050 = vadd.f32 %v1538, %v1946
        %v2051 = vadd.f32 %v1539, %v1955
        %v2052 = vadd.f32 %v1540, %v1964
        %v2053 = vadd.f32 %v1541, %v1973
        %v2054 = vadd.f32 %v1542, %v1982
        %v2055 = vadd.f32 %v1543, %v1991
        %v2056 = vadd.f32 %v1544, %v2000
        %v2057 = vadd.f32 %v1545, %v2009
        %v2058 = vadd.f32 %v1546, %v2018
        %v2059 = vadd.f32 %v1547, %v2027
        %v2060 = vsel %vm1548, %v1580, %v2028
        %v2061 = vsel %vm1549, %v1581, %v2029
        %v2062 = vsel %vm1550, %v1582, %v2030
        %v2063 = vsel %vm1551, %v1583, %v2031
        %v2064 = vsel %vm1552, %v1584, %v2032
        %v2065 = vsel %vm1553, %v1585, %v2033
        %v2066 = vsel %vm1554, %v1586, %v2034
        %v2067 = vsel %vm1555, %v1587, %v2035
        %v2068 = vsel %vm1556, %v1588, %v2036
        %v2069 = vsel %vm1557, %v1589, %v2037
        %v2070 = vsel %vm1558, %v1590, %v2038
        %v2071 = vsel %vm1559, %v1591, %v2039
        %v2072 = vsel %vm1560, %v1592, %v2040
        %v2073 = vsel %vm1561, %v1593, %v2041
        %v2074 = vsel %vm1562, %v1594, %v2042
        %v2075 = vsel %vm1563, %v1595, %v2043
        %v2076 = vsel %vm1564, %v1596, %v2044
        %v2077 = vsel %vm1565, %v1597, %v2045
        %v2078 = vsel %vm1566, %v1598, %v2046
        %v2079 = vsel %vm1567, %v1599, %v2047
        %v2080 = vsel %vm1568, %v1600, %v2048
        %v2081 = vsel %vm1569, %v1601, %v2049
        %v2082 = vsel %vm1570, %v1602, %v2050
        %v2083 = vsel %vm1571, %v1603, %v2051
        %v2084 = vsel %vm1572, %v1604, %v2052
        %v2085 = vsel %vm1573, %v1605, %v2053
        %v2086 = vsel %vm1574, %v1606, %v2054
        %v2087 = vsel %vm1575, %v1607, %v2055
        %v2088 = vsel %vm1576, %v1608, %v2056
        %v2089 = vsel %vm1577, %v1609, %v2057
        %v2090 = vsel %vm1578, %v1610, %v2058
        %v2091 = vsel %vm1579, %v1611, %v2059
        %v2092 = vpack.c.bf16 %v2061, %v2060
        %v2093 = vpack.c.bf16 %v2063, %v2062
        %v2094 = vpack.c.bf16 %v2065, %v2064
        %v2095 = vpack.c.bf16 %v2067, %v2066
        %v2096 = vpack.c.bf16 %v2069, %v2068
        %v2097 = vpack.c.bf16 %v2071, %v2070
        %v2098 = vpack.c.bf16 %v2073, %v2072
        %v2099 = vpack.c.bf16 %v2075, %v2074
        %v2100 = vpack.c.bf16 %v2077, %v2076
        %v2101 = vpack.c.bf16 %v2079, %v2078
        %v2102 = vpack.c.bf16 %v2081, %v2080
        %v2103 = vpack.c.bf16 %v2083, %v2082
        %v2104 = vpack.c.bf16 %v2085, %v2084
        %v2105 = vpack.c.bf16 %v2087, %v2086
        %v2106 = vpack.c.bf16 %v2089, %v2088
        %v2107 = vpack.c.bf16 %v2091, %v2090
        %v2108 = vld [vmem:[%s752] sm:$0xf]
        %v2109 = vld [vmem:[%s752 + $0x4] sm:$0xf]
        %v2110 = vld [vmem:[%s752 + $0x8] sm:$0xf]
        %v2111 = vld [vmem:[%s752 + $0xc] sm:$0xf]
        %v2112 = vld [vmem:[%s752 + $0x10] sm:$0xf]
        %v2113 = vld [vmem:[%s752 + $0x14] sm:$0xf]
        %v2114 = vld [vmem:[%s752 + $0x18] sm:$0xf]
        %v2115 = vld [vmem:[%s752 + $0x1c] sm:$0xf]
        %v2116 = vld [vmem:[%s752 + $0x20] sm:$0xf]
        %v2117 = vld [vmem:[%s752 + $0x24] sm:$0xf]
        %v2118 = vld [vmem:[%s752 + $0x28] sm:$0xf]
        %v2119 = vld [vmem:[%s752 + $0x2c] sm:$0xf]
        %v2120 = vld [vmem:[%s752 + $0x30] sm:$0xf]
        %v2121 = vld [vmem:[%s752 + $0x34] sm:$0xf]
        %v2122 = vld [vmem:[%s752 + $0x38] sm:$0xf]
        %v2123 = vld [vmem:[%s752 + $0x3c] sm:$0xf]
        %v2124 = vld [vmem:[%s760] sm:$0x1]
        %v2126 = vlaneseq
        %v2127 = vshrl.u32 %v2126, 7
        %v2128 = vsub.s32 0, %v2127
        %v2129 = vrot.slane %v2124, %v2128
        %v2147 = vunpack.c.l.b16 %v2108
        %v2148 = vunpack.c.l.b16 %v2109
        %v2149 = vunpack.c.l.b16 %v2110
        %v2150 = vunpack.c.l.b16 %v2111
        %v2151 = vunpack.c.l.b16 %v2112
        %v2152 = vunpack.c.l.b16 %v2113
        %v2153 = vunpack.c.l.b16 %v2114
        %v2154 = vunpack.c.l.b16 %v2115
        %v2155 = vunpack.c.l.b16 %v2116
        %v2156 = vunpack.c.l.b16 %v2117
        %v2157 = vunpack.c.l.b16 %v2118
        %v2158 = vunpack.c.l.b16 %v2119
        %v2159 = vunpack.c.l.b16 %v2120
        %v2160 = vunpack.c.l.b16 %v2121
        %v2161 = vunpack.c.l.b16 %v2122
        %v2162 = vunpack.c.l.b16 %v2123
        %v2163 = vpack.c.b16 %v2148, %v2147
        %v2164 = vpack.c.b16 %v2150, %v2149
        %v2165 = vpack.c.b16 %v2152, %v2151
        %v2166 = vpack.c.b16 %v2154, %v2153
        %v2167 = vpack.c.b16 %v2156, %v2155
        %v2168 = vpack.c.b16 %v2158, %v2157
        %v2169 = vpack.c.b16 %v2160, %v2159
        %v2170 = vpack.c.b16 %v2162, %v2161
        %2179 = vmatprep.subr.bf16.mxu0 0
        %2180 = vmatpush1.bf16.msra.mxu0 %v2163
        %2181 = vmatprep.subr.bf16.mxu0 0
        %2182 = vmatpush1.bf16.msra.mxu0 %v2164
        %2183 = vmatprep.subr.bf16.mxu0 0
        %2184 = vmatpush1.bf16.msra.mxu0 %v2165
        %2185 = vmatprep.subr.bf16.mxu0 0
        %2186 = vmatpush1.bf16.msra.mxu0 %v2166
        %2187 = vmatprep.subr.bf16.mxu0 0
        %2188 = vmatpush1.bf16.msra.mxu0 %v2167
        %2189 = vmatprep.subr.bf16.mxu0 0
        %2190 = vmatpush1.bf16.msra.mxu0 %v2168
        %2191 = vmatprep.subr.bf16.mxu0 0
        %2192 = vmatpush1.bf16.msra.mxu0 %v2169
        %2193 = vmatprep.subr.bf16.mxu0 0
        %2194 = vmatpush1.bf16.msra.mxu0 %v2170
        %2195 = vmatprep.subr.bf16.mxu0 0
        %2196 = vmatpush1.bf16.msra.mxu0 0
        %2197 = vmatprep.subr.bf16.mxu0 0
        %2198 = vmatpush1.bf16.msra.mxu0 0
        %2199 = vmatprep.subr.bf16.mxu0 0
        %2200 = vmatpush1.bf16.msra.mxu0 0
        %2201 = vmatprep.subr.bf16.mxu0 0
        %2202 = vmatpush1.bf16.msra.mxu0 0
        %2203 = vmatprep.subr.bf16.mxu0 0
        %2204 = vmatpush1.bf16.msra.mxu0 0
        %2205 = vmatprep.subr.bf16.mxu0 0
        %2206 = vmatpush1.bf16.msra.mxu0 0
        %2207 = vmatprep.subr.bf16.mxu0 0
        %2208 = vmatpush1.bf16.msra.mxu0 0
        %2209 = vmatprep.subr.bf16.mxu0 0
        %2210 = vmatpush1.bf16.msra.mxu0 0
        %2211 = vmatprep.mubr.bf16.mxu0 0
        %2212 = vmatmul.mubr.bf16.gmra.mrb[0].mxu0 %v2092
        %v2213 = vpop.f32.mrb[0].mxu0
        %v2214 = vadd.f32 %v2129, %v2213
        %v2215 = vpop.f32.mrb[0].mxu0
        %v2216 = vpop.f32.mrb[0].mxu0
        %v2217 = vadd.f32 %v2129, %v2216
        %v2218 = vpop.f32.mrb[0].mxu0
        %2219 = vmatprep.mubr.bf16.mxu0 0
        %2220 = vmatmul.mubr.bf16.gmra.mrb[0].mxu0 %v2093
        %v2221 = vpop.f32.mrb[0].mxu0
        %v2222 = vadd.f32 %v2129, %v2221
        %v2223 = vpop.f32.mrb[0].mxu0
        %v2224 = vpop.f32.mrb[0].mxu0
        %v2225 = vadd.f32 %v2129, %v2224
        %v2226 = vpop.f32.mrb[0].mxu0
        %2227 = vmatprep.mubr.bf16.mxu0 0
        %2228 = vmatmul.mubr.bf16.gmra.mrb[0].mxu0 %v2094
        %v2229 = vpop.f32.mrb[0].mxu0
        %v2230 = vadd.f32 %v2129, %v2229
        %v2231 = vpop.f32.mrb[0].mxu0
        %v2232 = vpop.f32.mrb[0].mxu0
        %v2233 = vadd.f32 %v2129, %v2232
        %v2234 = vpop.f32.mrb[0].mxu0
        %2235 = vmatprep.mubr.bf16.mxu0 0
        %2236 = vmatmul.mubr.bf16.gmra.mrb[0].mxu0 %v2095
        %v2237 = vpop.f32.mrb[0].mxu0
        %v2238 = vadd.f32 %v2129, %v2237
        %v2239 = vpop.f32.mrb[0].mxu0
        %v2240 = vpop.f32.mrb[0].mxu0
        %v2241 = vadd.f32 %v2129, %v2240
        %v2242 = vpop.f32.mrb[0].mxu0
        %2243 = vmatprep.mubr.bf16.mxu0 0
        %2244 = vmatmul.mubr.bf16.gmra.mrb[0].mxu0 %v2096
        %v2245 = vpop.f32.mrb[0].mxu0
        %v2246 = vadd.f32 %v2129, %v2245
        %v2247 = vpop.f32.mrb[0].mxu0
        %v2248 = vpop.f32.mrb[0].mxu0
        %v2249 = vadd.f32 %v2129, %v2248
        %v2250 = vpop.f32.mrb[0].mxu0
        %2251 = vmatprep.mubr.bf16.mxu0 0
        %2252 = vmatmul.mubr.bf16.gmra.mrb[0].mxu0 %v2097
        %v2253 = vpop.f32.mrb[0].mxu0
        %v2254 = vadd.f32 %v2129, %v2253
        %v2255 = vpop.f32.mrb[0].mxu0
        %v2256 = vpop.f32.mrb[0].mxu0
        %v2257 = vadd.f32 %v2129, %v2256
        %v2258 = vpop.f32.mrb[0].mxu0
        %2259 = vmatprep.mubr.bf16.mxu0 0
        %2260 = vmatmul.mubr.bf16.gmra.mrb[0].mxu0 %v2098
        %v2261 = vpop.f32.mrb[0].mxu0
        %v2262 = vadd.f32 %v2129, %v2261
        %v2263 = vpop.f32.mrb[0].mxu0
        %v2264 = vpop.f32.mrb[0].mxu0
        %v2265 = vadd.f32 %v2129, %v2264
        %v2266 = vpop.f32.mrb[0].mxu0
        %2267 = vmatprep.mubr.bf16.mxu0 0
        %2268 = vmatmul.mubr.bf16.gmra.mrb[0].mxu0 %v2099
        %v2269 = vpop.f32.mrb[0].mxu0
        %v2270 = vadd.f32 %v2129, %v2269
        %v2271 = vpop.f32.mrb[0].mxu0
        %v2272 = vpop.f32.mrb[0].mxu0
        %v2273 = vadd.f32 %v2129, %v2272
        %v2274 = vpop.f32.mrb[0].mxu0
        %2275 = vmatprep.mubr.bf16.mxu0 0
        %2276 = vmatmul.mubr.bf16.gmra.mrb[0].mxu0 %v2100
        %v2277 = vpop.f32.mrb[0].mxu0
        %v2278 = vadd.f32 %v2129, %v2277
        %v2279 = vpop.f32.mrb[0].mxu0
        %v2280 = vpop.f32.mrb[0].mxu0
        %v2281 = vadd.f32 %v2129, %v2280
        %v2282 = vpop.f32.mrb[0].mxu0
        %2283 = vmatprep.mubr.bf16.mxu0 0
        %2284 = vmatmul.mubr.bf16.gmra.mrb[0].mxu0 %v2101
        %v2285 = vpop.f32.mrb[0].mxu0
        %v2286 = vadd.f32 %v2129, %v2285
        %v2287 = vpop.f32.mrb[0].mxu0
        %v2288 = vpop.f32.mrb[0].mxu0
        %v2289 = vadd.f32 %v2129, %v2288
        %v2290 = vpop.f32.mrb[0].mxu0
        %2291 = vmatprep.mubr.bf16.mxu0 0
        %2292 = vmatmul.mubr.bf16.gmra.mrb[0].mxu0 %v2102
        %v2293 = vpop.f32.mrb[0].mxu0
        %v2294 = vadd.f32 %v2129, %v2293
        %v2295 = vpop.f32.mrb[0].mxu0
        %v2296 = vpop.f32.mrb[0].mxu0
        %v2297 = vadd.f32 %v2129, %v2296
        %v2298 = vpop.f32.mrb[0].mxu0
        %2299 = vmatprep.mubr.bf16.mxu0 0
        %2300 = vmatmul.mubr.bf16.gmra.mrb[0].mxu0 %v2103
        %v2301 = vpop.f32.mrb[0].mxu0
        %v2302 = vadd.f32 %v2129, %v2301
        %v2303 = vpop.f32.mrb[0].mxu0
        %v2304 = vpop.f32.mrb[0].mxu0
        %v2305 = vadd.f32 %v2129, %v2304
        %v2306 = vpop.f32.mrb[0].mxu0
        %2307 = vmatprep.mubr.bf16.mxu0 0
        %2308 = vmatmul.mubr.bf16.gmra.mrb[0].mxu0 %v2104
        %v2309 = vpop.f32.mrb[0].mxu0
        %v2310 = vadd.f32 %v2129, %v2309
        %v2311 = vpop.f32.mrb[0].mxu0
        %v2312 = vpop.f32.mrb[0].mxu0
        %v2313 = vadd.f32 %v2129, %v2312
        %v2314 = vpop.f32.mrb[0].mxu0
        %2315 = vmatprep.mubr.bf16.mxu0 0
        %2316 = vmatmul.mubr.bf16.gmra.mrb[0].mxu0 %v2105
        %v2317 = vpop.f32.mrb[0].mxu0
        %v2318 = vadd.f32 %v2129, %v2317
        %v2319 = vpop.f32.mrb[0].mxu0
        %v2320 = vpop.f32.mrb[0].mxu0
        %v2321 = vadd.f32 %v2129, %v2320
        %v2322 = vpop.f32.mrb[0].mxu0
        %2323 = vmatprep.mubr.bf16.mxu0 0
        %2324 = vmatmul.mubr.bf16.gmra.mrb[0].mxu0 %v2106
        %v2325 = vpop.f32.mrb[0].mxu0
        %v2326 = vadd.f32 %v2129, %v2325
        %v2327 = vpop.f32.mrb[0].mxu0
        %v2328 = vpop.f32.mrb[0].mxu0
        %v2329 = vadd.f32 %v2129, %v2328
        %v2330 = vpop.f32.mrb[0].mxu0
        %2331 = vmatprep.mubr.bf16.mxu0 0
        %2332 = vmatmul.mubr.bf16.gmra.mrb[0].mxu0 %v2107
        %v2333 = vpop.f32.mrb[0].mxu0
        %v2334 = vadd.f32 %v2129, %v2333
        %v2335 = vpop.f32.mrb[0].mxu0
        %v2336 = vpop.f32.mrb[0].mxu0
        %v2337 = vadd.f32 %v2129, %v2336
        %v2338 = vpop.f32.mrb[0].mxu0
        %2339 = vdwg.mxu0
        %v2340 = vmul.f32 %v909, %v909
        %v2341 = vmul.f32 %v910, %v910
        %v2342 = vmul.f32 %v911, %v911
        %v2343 = vmul.f32 %v912, %v912
        %v2344 = vmul.f32 %v913, %v913
        %v2345 = vmul.f32 %v914, %v914
        %v2346 = vmul.f32 %v915, %v915
        %v2347 = vmul.f32 %v916, %v916
        %v2348 = vmul.f32 %v917, %v917
        %v2349 = vmul.f32 %v918, %v918
        %v2350 = vmul.f32 %v919, %v919
        %v2351 = vmul.f32 %v920, %v920
        %v2352 = vmul.f32 %v921, %v921
        %v2353 = vmul.f32 %v922, %v922
        %v2354 = vmul.f32 %v923, %v923
        %v2355 = vmul.f32 %v924, %v924
        %v2356 = vmul.f32 %v925, %v925
        %v2357 = vmul.f32 %v926, %v926
        %v2358 = vmul.f32 %v927, %v927
        %v2359 = vmul.f32 %v928, %v928
        %v2360 = vmul.f32 %v929, %v929
        %v2361 = vmul.f32 %v930, %v930
        %v2362 = vmul.f32 %v931, %v931
        %v2363 = vmul.f32 %v932, %v932
        %v2364 = vmul.f32 %v933, %v933
        %v2365 = vmul.f32 %v934, %v934
        %v2366 = vmul.f32 %v935, %v935
        %v2367 = vmul.f32 %v936, %v936
        %v2368 = vmul.f32 %v937, %v937
        %v2369 = vmul.f32 %v938, %v938
        %v2370 = vmul.f32 %v939, %v939
        %v2371 = vmul.f32 %v940, %v940
        %v2372 = vadd.f32 %v2340, 1e-10
        %v2373 = vadd.f32 %v2341, 1e-10
        %v2374 = vadd.f32 %v2342, 1e-10
        %v2375 = vadd.f32 %v2343, 1e-10
        %v2376 = vadd.f32 %v2344, 1e-10
        %v2377 = vadd.f32 %v2345, 1e-10
        %v2378 = vadd.f32 %v2346, 1e-10
        %v2379 = vadd.f32 %v2347, 1e-10
        %v2380 = vadd.f32 %v2348, 1e-10
        %v2381 = vadd.f32 %v2349, 1e-10
        %v2382 = vadd.f32 %v2350, 1e-10
        %v2383 = vadd.f32 %v2351, 1e-10
        %v2384 = vadd.f32 %v2352, 1e-10
        %v2385 = vadd.f32 %v2353, 1e-10
        %v2386 = vadd.f32 %v2354, 1e-10
        %v2387 = vadd.f32 %v2355, 1e-10
        %v2388 = vadd.f32 %v2356, 1e-10
        %v2389 = vadd.f32 %v2357, 1e-10
        %v2390 = vadd.f32 %v2358, 1e-10
        %v2391 = vadd.f32 %v2359, 1e-10
        %v2392 = vadd.f32 %v2360, 1e-10
        %v2393 = vadd.f32 %v2361, 1e-10
        %v2394 = vadd.f32 %v2362, 1e-10
        %v2395 = vadd.f32 %v2363, 1e-10
        %v2396 = vadd.f32 %v2364, 1e-10
        %v2397 = vadd.f32 %v2365, 1e-10
        %v2398 = vadd.f32 %v2366, 1e-10
        %v2399 = vadd.f32 %v2367, 1e-10
        %v2400 = vadd.f32 %v2368, 1e-10
        %v2401 = vadd.f32 %v2369, 1e-10
        %v2402 = vadd.f32 %v2370, 1e-10
        %v2403 = vadd.f32 %v2371, 1e-10
        %v2404 = vrcp.pop %v2372
        %v2405 = vmul.f32 10.0, %v2404
        %v2406 = vrcp.pop %v2373
        %v2407 = vmul.f32 10.0, %v2406
        %v2408 = vrcp.pop %v2374
        %v2409 = vmul.f32 10.0, %v2408
        %v2410 = vrcp.pop %v2375
        %v2411 = vmul.f32 10.0, %v2410
        %v2412 = vrcp.pop %v2376
        %v2413 = vmul.f32 10.0, %v2412
        %v2414 = vrcp.pop %v2377
        %v2415 = vmul.f32 10.0, %v2414
        %v2416 = vrcp.pop %v2378
        %v2417 = vmul.f32 10.0, %v2416
        %v2418 = vrcp.pop %v2379
        %v2419 = vmul.f32 10.0, %v2418
        %v2420 = vrcp.pop %v2380
        %v2421 = vmul.f32 10.0, %v2420
        %v2422 = vrcp.pop %v2381
        %v2423 = vmul.f32 10.0, %v2422
        %v2424 = vrcp.pop %v2382
        %v2425 = vmul.f32 10.0, %v2424
        %v2426 = vrcp.pop %v2383
        %v2427 = vmul.f32 10.0, %v2426
        %v2428 = vrcp.pop %v2384
        %v2429 = vmul.f32 10.0, %v2428
        %v2430 = vrcp.pop %v2385
        %v2431 = vmul.f32 10.0, %v2430
        %v2432 = vrcp.pop %v2386
        %v2433 = vmul.f32 10.0, %v2432
        %v2434 = vrcp.pop %v2387
        %v2435 = vmul.f32 10.0, %v2434
        %v2436 = vrcp.pop %v2388
        %v2437 = vmul.f32 10.0, %v2436
        %v2438 = vrcp.pop %v2389
        %v2439 = vmul.f32 10.0, %v2438
        %v2440 = vrcp.pop %v2390
        %v2441 = vmul.f32 10.0, %v2440
        %v2442 = vrcp.pop %v2391
        %v2443 = vmul.f32 10.0, %v2442
        %v2444 = vrcp.pop %v2392
        %v2445 = vmul.f32 10.0, %v2444
        %v2446 = vrcp.pop %v2393
        %v2447 = vmul.f32 10.0, %v2446
        %v2448 = vrcp.pop %v2394
        %v2449 = vmul.f32 10.0, %v2448
        %v2450 = vrcp.pop %v2395
        %v2451 = vmul.f32 10.0, %v2450
        %v2452 = vrcp.pop %v2396
        %v2453 = vmul.f32 10.0, %v2452
        %v2454 = vrcp.pop %v2397
        %v2455 = vmul.f32 10.0, %v2454
        %v2456 = vrcp.pop %v2398
        %v2457 = vmul.f32 10.0, %v2456
        %v2458 = vrcp.pop %v2399
        %v2459 = vmul.f32 10.0, %v2458
        %v2460 = vrcp.pop %v2400
        %v2461 = vmul.f32 10.0, %v2460
        %v2462 = vrcp.pop %v2401
        %v2463 = vmul.f32 10.0, %v2462
        %v2464 = vrcp.pop %v2402
        %v2465 = vmul.f32 10.0, %v2464
        %v2466 = vrcp.pop %v2403
        %v2467 = vmul.f32 10.0, %v2466
        %v2468 = vsub.f32 %v2405, 1.0
        %v2469 = vsub.f32 %v2407, 1.0
        %v2470 = vsub.f32 %v2409, 1.0
        %v2471 = vsub.f32 %v2411, 1.0
        %v2472 = vsub.f32 %v2413, 1.0
        %v2473 = vsub.f32 %v2415, 1.0
        %v2474 = vsub.f32 %v2417, 1.0
        %v2475 = vsub.f32 %v2419, 1.0
        %v2476 = vsub.f32 %v2421, 1.0
        %v2477 = vsub.f32 %v2423, 1.0
        %v2478 = vsub.f32 %v2425, 1.0
        %v2479 = vsub.f32 %v2427, 1.0
        %v2480 = vsub.f32 %v2429, 1.0
        %v2481 = vsub.f32 %v2431, 1.0
        %v2482 = vsub.f32 %v2433, 1.0
        %v2483 = vsub.f32 %v2435, 1.0
        %v2484 = vsub.f32 %v2437, 1.0
        %v2485 = vsub.f32 %v2439, 1.0
        %v2486 = vsub.f32 %v2441, 1.0
        %v2487 = vsub.f32 %v2443, 1.0
        %v2488 = vsub.f32 %v2445, 1.0
        %v2489 = vsub.f32 %v2447, 1.0
        %v2490 = vsub.f32 %v2449, 1.0
        %v2491 = vsub.f32 %v2451, 1.0
        %v2492 = vsub.f32 %v2453, 1.0
        %v2493 = vsub.f32 %v2455, 1.0
        %v2494 = vsub.f32 %v2457, 1.0
        %v2495 = vsub.f32 %v2459, 1.0
        %v2496 = vsub.f32 %v2461, 1.0
        %v2497 = vsub.f32 %v2463, 1.0
        %v2498 = vsub.f32 %v2465, 1.0
        %v2499 = vsub.f32 %v2467, 1.0
        %2501 = vset.pattern.permute.xlu0 0
        %2502 = vperm.xlu0 %2501, %v2468
        %v2503 = vpop.permute.xlu0 %2502
        %2506 = vset.pattern.permute.xlu0 0
        %2507 = vperm.xlu0 %2506, %v2469
        %v2508 = vpop.permute.xlu0 %2507
        %2511 = vset.pattern.permute.xlu0 0
        %2512 = vperm.xlu0 %2511, %v2470
        %v2513 = vpop.permute.xlu0 %2512
        %2516 = vset.pattern.permute.xlu0 0
        %2517 = vperm.xlu0 %2516, %v2471
        %v2518 = vpop.permute.xlu0 %2517
        %2521 = vset.pattern.permute.xlu0 0
        %2522 = vperm.xlu0 %2521, %v2472
        %v2523 = vpop.permute.xlu0 %2522
        %2526 = vset.pattern.permute.xlu0 0
        %2527 = vperm.xlu0 %2526, %v2473
        %v2528 = vpop.permute.xlu0 %2527
        %2531 = vset.pattern.permute.xlu0 0
        %2532 = vperm.xlu0 %2531, %v2474
        %v2533 = vpop.permute.xlu0 %2532
        %2536 = vset.pattern.permute.xlu0 0
        %2537 = vperm.xlu0 %2536, %v2475
        %v2538 = vpop.permute.xlu0 %2537
        %2541 = vset.pattern.permute.xlu0 0
        %2542 = vperm.xlu0 %2541, %v2476
        %v2543 = vpop.permute.xlu0 %2542
        %2546 = vset.pattern.permute.xlu0 0
        %2547 = vperm.xlu0 %2546, %v2477
        %v2548 = vpop.permute.xlu0 %2547
        %2551 = vset.pattern.permute.xlu0 0
        %2552 = vperm.xlu0 %2551, %v2478
        %v2553 = vpop.permute.xlu0 %2552
        %2556 = vset.pattern.permute.xlu0 0
        %2557 = vperm.xlu0 %2556, %v2479
        %v2558 = vpop.permute.xlu0 %2557
        %2561 = vset.pattern.permute.xlu0 0
        %2562 = vperm.xlu0 %2561, %v2480
        %v2563 = vpop.permute.xlu0 %2562
        %2566 = vset.pattern.permute.xlu0 0
        %2567 = vperm.xlu0 %2566, %v2481
        %v2568 = vpop.permute.xlu0 %2567
        %2571 = vset.pattern.permute.xlu0 0
        %2572 = vperm.xlu0 %2571, %v2482
        %v2573 = vpop.permute.xlu0 %2572
        %2576 = vset.pattern.permute.xlu0 0
        %2577 = vperm.xlu0 %2576, %v2483
        %v2578 = vpop.permute.xlu0 %2577
        %2581 = vset.pattern.permute.xlu0 0
        %2582 = vperm.xlu0 %2581, %v2484
        %v2583 = vpop.permute.xlu0 %2582
        %2586 = vset.pattern.permute.xlu0 0
        %2587 = vperm.xlu0 %2586, %v2485
        %v2588 = vpop.permute.xlu0 %2587
        %2591 = vset.pattern.permute.xlu0 0
        %2592 = vperm.xlu0 %2591, %v2486
        %v2593 = vpop.permute.xlu0 %2592
        %2596 = vset.pattern.permute.xlu0 0
        %2597 = vperm.xlu0 %2596, %v2487
        %v2598 = vpop.permute.xlu0 %2597
        %2601 = vset.pattern.permute.xlu0 0
        %2602 = vperm.xlu0 %2601, %v2488
        %v2603 = vpop.permute.xlu0 %2602
        %2606 = vset.pattern.permute.xlu0 0
        %2607 = vperm.xlu0 %2606, %v2489
        %v2608 = vpop.permute.xlu0 %2607
        %2611 = vset.pattern.permute.xlu0 0
        %2612 = vperm.xlu0 %2611, %v2490
        %v2613 = vpop.permute.xlu0 %2612
        %2616 = vset.pattern.permute.xlu0 0
        %2617 = vperm.xlu0 %2616, %v2491
        %v2618 = vpop.permute.xlu0 %2617
        %2621 = vset.pattern.permute.xlu0 0
        %2622 = vperm.xlu0 %2621, %v2492
        %v2623 = vpop.permute.xlu0 %2622
        %2626 = vset.pattern.permute.xlu0 0
        %2627 = vperm.xlu0 %2626, %v2493
        %v2628 = vpop.permute.xlu0 %2627
        %2631 = vset.pattern.permute.xlu0 0
        %2632 = vperm.xlu0 %2631, %v2494
        %v2633 = vpop.permute.xlu0 %2632
        %2636 = vset.pattern.permute.xlu0 0
        %2637 = vperm.xlu0 %2636, %v2495
        %v2638 = vpop.permute.xlu0 %2637
        %2641 = vset.pattern.permute.xlu0 0
        %2642 = vperm.xlu0 %2641, %v2496
        %v2643 = vpop.permute.xlu0 %2642
        %2646 = vset.pattern.permute.xlu0 0
        %2647 = vperm.xlu0 %2646, %v2497
        %v2648 = vpop.permute.xlu0 %2647
        %2651 = vset.pattern.permute.xlu0 0
        %2652 = vperm.xlu0 %2651, %v2498
        %v2653 = vpop.permute.xlu0 %2652
        %2656 = vset.pattern.permute.xlu0 0
        %2657 = vperm.xlu0 %2656, %v2499
        %v2658 = vpop.permute.xlu0 %2657
        %v2660 = vmul.f32 %v2214, %v2503
        %v2661 = vmul.f32 %v2217, %v2508
        %v2662 = vmul.f32 %v2222, %v2513
        %v2663 = vmul.f32 %v2225, %v2518
        %v2664 = vmul.f32 %v2230, %v2523
        %v2665 = vmul.f32 %v2233, %v2528
        %v2666 = vmul.f32 %v2238, %v2533
        %v2667 = vmul.f32 %v2241, %v2538
        %v2668 = vmul.f32 %v2246, %v2543
        %v2669 = vmul.f32 %v2249, %v2548
        %v2670 = vmul.f32 %v2254, %v2553
        %v2671 = vmul.f32 %v2257, %v2558
        %v2672 = vmul.f32 %v2262, %v2563
        %v2673 = vmul.f32 %v2265, %v2568
        %v2674 = vmul.f32 %v2270, %v2573
        %v2675 = vmul.f32 %v2273, %v2578
        %v2676 = vmul.f32 %v2278, %v2583
        %v2677 = vmul.f32 %v2281, %v2588
        %v2678 = vmul.f32 %v2286, %v2593
        %v2679 = vmul.f32 %v2289, %v2598
        %v2680 = vmul.f32 %v2294, %v2603
        %v2681 = vmul.f32 %v2297, %v2608
        %v2682 = vmul.f32 %v2302, %v2613
        %v2683 = vmul.f32 %v2305, %v2618
        %v2684 = vmul.f32 %v2310, %v2623
        %v2685 = vmul.f32 %v2313, %v2628
        %v2686 = vmul.f32 %v2318, %v2633
        %v2687 = vmul.f32 %v2321, %v2638
        %v2688 = vmul.f32 %v2326, %v2643
        %v2689 = vmul.f32 %v2329, %v2648
        %v2690 = vmul.f32 %v2334, %v2653
        %v2691 = vmul.f32 %v2337, %v2658
        %v2692 = vlaneseq
        %v2693 = vand.u32 %v2692, 127
        %v2694 = vld [vmem:[#allocation6] sm:$0xff]
        %v2695 = vld [vmem:[#allocation6 + $0x8] sm:$0xff]
        %v2696 = vld [vmem:[#allocation6 + $0x10] sm:$0xff]
        %v2697 = vld [vmem:[#allocation6 + $0x18] sm:$0xff]
        %v2698 = vld [vmem:[#allocation6 + $0x20] sm:$0xff]
        %v2699 = vld [vmem:[#allocation6 + $0x28] sm:$0xff]
        %v2700 = vld [vmem:[#allocation6 + $0x30] sm:$0xff]
        %v2701 = vld [vmem:[#allocation6 + $0x38] sm:$0xff]
        %v2702 = vld [vmem:[#allocation6 + $0x40] sm:$0xff]
        %v2703 = vld [vmem:[#allocation6 + $0x48] sm:$0xff]
        %v2704 = vld [vmem:[#allocation6 + $0x50] sm:$0xff]
        %v2705 = vld [vmem:[#allocation6 + $0x58] sm:$0xff]
        %v2706 = vld [vmem:[#allocation6 + $0x60] sm:$0xff]
        %v2707 = vld [vmem:[#allocation6 + $0x68] sm:$0xff]
        %v2708 = vld [vmem:[#allocation6 + $0x70] sm:$0xff]
        %v2709 = vld [vmem:[#allocation6 + $0x78] sm:$0xff]
        %v2710 = vld [vmem:[#allocation6 + $0x80] sm:$0xff]
        %v2711 = vld [vmem:[#allocation6 + $0x88] sm:$0xff]
        %v2712 = vld [vmem:[#allocation6 + $0x90] sm:$0xff]
        %v2713 = vld [vmem:[#allocation6 + $0x98] sm:$0xff]
        %v2714 = vld [vmem:[#allocation6 + $0xa0] sm:$0xff]
        %v2715 = vld [vmem:[#allocation6 + $0xa8] sm:$0xff]
        %v2716 = vld [vmem:[#allocation6 + $0xb0] sm:$0xff]
        %v2717 = vld [vmem:[#allocation6 + $0xb8] sm:$0xff]
        %v2718 = vld [vmem:[#allocation6 + $0xc0] sm:$0xff]
        %v2719 = vld [vmem:[#allocation6 + $0xc8] sm:$0xff]
        %v2720 = vld [vmem:[#allocation6 + $0xd0] sm:$0xff]
        %v2721 = vld [vmem:[#allocation6 + $0xd8] sm:$0xff]
        %v2722 = vld [vmem:[#allocation6 + $0xe0] sm:$0xff]
        %v2723 = vld [vmem:[#allocation6 + $0xe8] sm:$0xff]
        %v2724 = vld [vmem:[#allocation6 + $0xf0] sm:$0xff]
        %v2725 = vld [vmem:[#allocation6 + $0xf8] sm:$0xff]
        %2726 = vset.pattern.permute.xlu0 0
        %2727 = vperm.xlu0 %2726, %v2694
        %v2728 = vpop.permute.xlu0 %2727
        %2729 = vset.pattern.permute.xlu0 0
        %2730 = vperm.xlu0 %2729, %v2695
        %v2731 = vpop.permute.xlu0 %2730
        %2732 = vset.pattern.permute.xlu0 0
        %2733 = vperm.xlu0 %2732, %v2696
        %v2734 = vpop.permute.xlu0 %2733
        %2735 = vset.pattern.permute.xlu0 0
        %2736 = vperm.xlu0 %2735, %v2697
        %v2737 = vpop.permute.xlu0 %2736
        %2738 = vset.pattern.permute.xlu0 0
        %2739 = vperm.xlu0 %2738, %v2698
        %v2740 = vpop.permute.xlu0 %2739
        %2741 = vset.pattern.permute.xlu0 0
        %2742 = vperm.xlu0 %2741, %v2699
        %v2743 = vpop.permute.xlu0 %2742
        %2744 = vset.pattern.permute.xlu0 0
        %2745 = vperm.xlu0 %2744, %v2700
        %v2746 = vpop.permute.xlu0 %2745
        %2747 = vset.pattern.permute.xlu0 0
        %2748 = vperm.xlu0 %2747, %v2701
        %v2749 = vpop.permute.xlu0 %2748
        %2750 = vset.pattern.permute.xlu0 0
        %2751 = vperm.xlu0 %2750, %v2702
        %v2752 = vpop.permute.xlu0 %2751
        %2753 = vset.pattern.permute.xlu0 0
        %2754 = vperm.xlu0 %2753, %v2703
        %v2755 = vpop.permute.xlu0 %2754
        %2756 = vset.pattern.permute.xlu0 0
        %2757 = vperm.xlu0 %2756, %v2704
        %v2758 = vpop.permute.xlu0 %2757
        %2759 = vset.pattern.permute.xlu0 0
        %2760 = vperm.xlu0 %2759, %v2705
        %v2761 = vpop.permute.xlu0 %2760
        %2762 = vset.pattern.permute.xlu0 0
        %2763 = vperm.xlu0 %2762, %v2706
        %v2764 = vpop.permute.xlu0 %2763
        %2765 = vset.pattern.permute.xlu0 0
        %2766 = vperm.xlu0 %2765, %v2707
        %v2767 = vpop.permute.xlu0 %2766
        %2768 = vset.pattern.permute.xlu0 0
        %2769 = vperm.xlu0 %2768, %v2708
        %v2770 = vpop.permute.xlu0 %2769
        %2771 = vset.pattern.permute.xlu0 0
        %2772 = vperm.xlu0 %2771, %v2709
        %v2773 = vpop.permute.xlu0 %2772
        %2774 = vset.pattern.permute.xlu0 0
        %2775 = vperm.xlu0 %2774, %v2710
        %v2776 = vpop.permute.xlu0 %2775
        %2777 = vset.pattern.permute.xlu0 0
        %2778 = vperm.xlu0 %2777, %v2711
        %v2779 = vpop.permute.xlu0 %2778
        %2780 = vset.pattern.permute.xlu0 0
        %2781 = vperm.xlu0 %2780, %v2712
        %v2782 = vpop.permute.xlu0 %2781
        %2783 = vset.pattern.permute.xlu0 0
        %2784 = vperm.xlu0 %2783, %v2713
        %v2785 = vpop.permute.xlu0 %2784
        %2786 = vset.pattern.permute.xlu0 0
        %2787 = vperm.xlu0 %2786, %v2714
        %v2788 = vpop.permute.xlu0 %2787
        %2789 = vset.pattern.permute.xlu0 0
        %2790 = vperm.xlu0 %2789, %v2715
        %v2791 = vpop.permute.xlu0 %2790
        %2792 = vset.pattern.permute.xlu0 0
        %2793 = vperm.xlu0 %2792, %v2716
        %v2794 = vpop.permute.xlu0 %2793
        %2795 = vset.pattern.permute.xlu0 0
        %2796 = vperm.xlu0 %2795, %v2717
        %v2797 = vpop.permute.xlu0 %2796
        %2798 = vset.pattern.permute.xlu0 0
        %2799 = vperm.xlu0 %2798, %v2718
        %v2800 = vpop.permute.xlu0 %2799
        %2801 = vset.pattern.permute.xlu0 0
        %2802 = vperm.xlu0 %2801, %v2719
        %v2803 = vpop.permute.xlu0 %2802
        %2804 = vset.pattern.permute.xlu0 0
        %2805 = vperm.xlu0 %2804, %v2720
        %v2806 = vpop.permute.xlu0 %2805
        %2807 = vset.pattern.permute.xlu0 0
        %2808 = vperm.xlu0 %2807, %v2721
        %v2809 = vpop.permute.xlu0 %2808
        %2810 = vset.pattern.permute.xlu0 0
        %2811 = vperm.xlu0 %2810, %v2722
        %v2812 = vpop.permute.xlu0 %2811
        %2813 = vset.pattern.permute.xlu0 0
        %2814 = vperm.xlu0 %2813, %v2723
        %v2815 = vpop.permute.xlu0 %2814
        %2816 = vset.pattern.permute.xlu0 0
        %2817 = vperm.xlu0 %2816, %v2724
        %v2818 = vpop.permute.xlu0 %2817
        %2819 = vset.pattern.permute.xlu0 0
        %2820 = vperm.xlu0 %2819, %v2725
        %v2821 = vpop.permute.xlu0 %2820
        %vm2822 = vcmp.eq.s32.totalorder %v2693, %v2728
        %vm2823 = vcmp.eq.s32.totalorder %v2693, %v2731
        %vm2824 = vcmp.eq.s32.totalorder %v2693, %v2734
        %vm2825 = vcmp.eq.s32.totalorder %v2693, %v2737
        %vm2826 = vcmp.eq.s32.totalorder %v2693, %v2740
        %vm2827 = vcmp.eq.s32.totalorder %v2693, %v2743
        %vm2828 = vcmp.eq.s32.totalorder %v2693, %v2746
        %vm2829 = vcmp.eq.s32.totalorder %v2693, %v2749
        %vm2830 = vcmp.eq.s32.totalorder %v2693, %v2752
        %vm2831 = vcmp.eq.s32.totalorder %v2693, %v2755
        %vm2832 = vcmp.eq.s32.totalorder %v2693, %v2758
        %vm2833 = vcmp.eq.s32.totalorder %v2693, %v2761
        %vm2834 = vcmp.eq.s32.totalorder %v2693, %v2764
        %vm2835 = vcmp.eq.s32.totalorder %v2693, %v2767
        %vm2836 = vcmp.eq.s32.totalorder %v2693, %v2770
        %vm2837 = vcmp.eq.s32.totalorder %v2693, %v2773
        %vm2838 = vcmp.eq.s32.totalorder %v2693, %v2776
        %vm2839 = vcmp.eq.s32.totalorder %v2693, %v2779
        %vm2840 = vcmp.eq.s32.totalorder %v2693, %v2782
        %vm2841 = vcmp.eq.s32.totalorder %v2693, %v2785
        %vm2842 = vcmp.eq.s32.totalorder %v2693, %v2788
        %vm2843 = vcmp.eq.s32.totalorder %v2693, %v2791
        %vm2844 = vcmp.eq.s32.totalorder %v2693, %v2794
        %vm2845 = vcmp.eq.s32.totalorder %v2693, %v2797
        %vm2846 = vcmp.eq.s32.totalorder %v2693, %v2800
        %vm2847 = vcmp.eq.s32.totalorder %v2693, %v2803
        %vm2848 = vcmp.eq.s32.totalorder %v2693, %v2806
        %vm2849 = vcmp.eq.s32.totalorder %v2693, %v2809
        %vm2850 = vcmp.eq.s32.totalorder %v2693, %v2812
        %vm2851 = vcmp.eq.s32.totalorder %v2693, %v2815
        %vm2852 = vcmp.eq.s32.totalorder %v2693, %v2818
        %vm2853 = vcmp.eq.s32.totalorder %v2693, %v2821
        %v2854 = vsel %vm2822, 1, 0
        %v2855 = vsel %vm2823, 1, 0
        %v2856 = vsel %vm2824, 1, 0
        %v2857 = vsel %vm2825, 1, 0
        %v2858 = vsel %vm2826, 1, 0
        %v2859 = vsel %vm2827, 1, 0
        %v2860 = vsel %vm2828, 1, 0
        %v2861 = vsel %vm2829, 1, 0
        %v2862 = vsel %vm2830, 1, 0
        %v2863 = vsel %vm2831, 1, 0
        %v2864 = vsel %vm2832, 1, 0
        %v2865 = vsel %vm2833, 1, 0
        %v2866 = vsel %vm2834, 1, 0
        %v2867 = vsel %vm2835, 1, 0
        %v2868 = vsel %vm2836, 1, 0
        %v2869 = vsel %vm2837, 1, 0
        %v2870 = vsel %vm2838, 1, 0
        %v2871 = vsel %vm2839, 1, 0
        %v2872 = vsel %vm2840, 1, 0
        %v2873 = vsel %vm2841, 1, 0
        %v2874 = vsel %vm2842, 1, 0
        %v2875 = vsel %vm2843, 1, 0
        %v2876 = vsel %vm2844, 1, 0
        %v2877 = vsel %vm2845, 1, 0
        %v2878 = vsel %vm2846, 1, 0
        %v2879 = vsel %vm2847, 1, 0
        %v2880 = vsel %vm2848, 1, 0
        %v2881 = vsel %vm2849, 1, 0
        %v2882 = vsel %vm2850, 1, 0
        %v2883 = vsel %vm2851, 1, 0
        %v2884 = vsel %vm2852, 1, 0
        %v2885 = vsel %vm2853, 1, 0
        %v2886 = vcvt.s32.f32 %v2854
        %v2887 = vcvt.s32.f32 %v2855
        %v2888 = vcvt.s32.f32 %v2856
        %v2889 = vcvt.s32.f32 %v2857
        %v2890 = vcvt.s32.f32 %v2858
        %v2891 = vcvt.s32.f32 %v2859
        %v2892 = vcvt.s32.f32 %v2860
        %v2893 = vcvt.s32.f32 %v2861
        %v2894 = vcvt.s32.f32 %v2862
        %v2895 = vcvt.s32.f32 %v2863
        %v2896 = vcvt.s32.f32 %v2864
        %v2897 = vcvt.s32.f32 %v2865
        %v2898 = vcvt.s32.f32 %v2866
        %v2899 = vcvt.s32.f32 %v2867
        %v2900 = vcvt.s32.f32 %v2868
        %v2901 = vcvt.s32.f32 %v2869
        %v2902 = vcvt.s32.f32 %v2870
        %v2903 = vcvt.s32.f32 %v2871
        %v2904 = vcvt.s32.f32 %v2872
        %v2905 = vcvt.s32.f32 %v2873
        %v2906 = vcvt.s32.f32 %v2874
        %v2907 = vcvt.s32.f32 %v2875
        %v2908 = vcvt.s32.f32 %v2876
        %v2909 = vcvt.s32.f32 %v2877
        %v2910 = vcvt.s32.f32 %v2878
        %v2911 = vcvt.s32.f32 %v2879
        %v2912 = vcvt.s32.f32 %v2880
        %v2913 = vcvt.s32.f32 %v2881
        %v2914 = vcvt.s32.f32 %v2882
        %v2915 = vcvt.s32.f32 %v2883
        %v2916 = vcvt.s32.f32 %v2884
        %v2917 = vcvt.s32.f32 %v2885
        %v2918 = vpack.c.bf16 %v2887, %v2886
        %v2919 = vpack.c.bf16 %v2889, %v2888
        %v2920 = vpack.c.bf16 %v2891, %v2890
        %v2921 = vpack.c.bf16 %v2893, %v2892
        %v2922 = vpack.c.bf16 %v2895, %v2894
        %v2923 = vpack.c.bf16 %v2897, %v2896
        %v2924 = vpack.c.bf16 %v2899, %v2898
        %v2925 = vpack.c.bf16 %v2901, %v2900
        %v2926 = vpack.c.bf16 %v2903, %v2902
        %v2927 = vpack.c.bf16 %v2905, %v2904
        %v2928 = vpack.c.bf16 %v2907, %v2906
        %v2929 = vpack.c.bf16 %v2909, %v2908
        %v2930 = vpack.c.bf16 %v2911, %v2910
        %v2931 = vpack.c.bf16 %v2913, %v2912
        %v2932 = vpack.c.bf16 %v2915, %v2914
        %v2933 = vpack.c.bf16 %v2917, %v2916
        %v2934 = vld [vmem:[%s769] sm:$0xf]
        %v2935 = vld [vmem:[%s769 + $0x4] sm:$0xf]
        %v2936 = vld [vmem:[%s769 + $0x8] sm:$0xf]
        %v2940 = vunpack.c.l.b16 %v2934
        %v2941 = vunpack.c.l.b16 %v2935
        %v2942 = vunpack.c.l.b16 %v2936
        %v2943 = vpack.c.b16 %v2941, %v2940
        %v2944 = vpack.c.b16 %v2942, %v2942
        %vm2946 = vcmask 195584
        %v2948 = vsel %vm2946, %v2918, 0
        %v2951 = vsel %vm2946, %v2919, 0
        %v2954 = vsel %vm2946, %v2920, 0
        %v2957 = vsel %vm2946, %v2921, 0
        %v2960 = vsel %vm2946, %v2922, 0
        %v2963 = vsel %vm2946, %v2923, 0
        %v2966 = vsel %vm2946, %v2924, 0
        %v2969 = vsel %vm2946, %v2925, 0
        %v2972 = vsel %vm2946, %v2926, 0
        %v2975 = vsel %vm2946, %v2927, 0
        %v2978 = vsel %vm2946, %v2928, 0
        %v2981 = vsel %vm2946, %v2929, 0
        %v2984 = vsel %vm2946, %v2930, 0
        %v2987 = vsel %vm2946, %v2931, 0
        %v2990 = vsel %vm2946, %v2932, 0
        %v2993 = vsel %vm2946, %v2933, 0
        %vm2995 = vcmask 1043456
        %v2997 = vsel %vm2995, %v2944, 0
        %2999 = vmatprep.subr.bf16.mxu0 0
        %3000 = vmatpush1.bf16.msra.mxu0 %v2943
        %3001 = vmatprep.subr.bf16.mxu0 0
        %3002 = vmatpush1.bf16.msra.mxu0 %v2997
        %3003 = vmatprep.subr.bf16.mxu0 0
        %3004 = vmatpush1.bf16.msra.mxu0 0
        %3005 = vmatprep.subr.bf16.mxu0 0
        %3006 = vmatpush1.bf16.msra.mxu0 0
        %3007 = vmatprep.subr.bf16.mxu0 0
        %3008 = vmatpush1.bf16.msra.mxu0 0
        %3009 = vmatprep.subr.bf16.mxu0 0
        %3010 = vmatpush1.bf16.msra.mxu0 0
        %3011 = vmatprep.subr.bf16.mxu0 0
        %3012 = vmatpush1.bf16.msra.mxu0 0
        %3013 = vmatprep.subr.bf16.mxu0 0
        %3014 = vmatpush1.bf16.msra.mxu0 0
        %3015 = vmatprep.subr.bf16.mxu0 0
        %3016 = vmatpush1.bf16.msra.mxu0 0
        %3017 = vmatprep.subr.bf16.mxu0 0
        %3018 = vmatpush1.bf16.msra.mxu0 0
        %3019 = vmatprep.subr.bf16.mxu0 0
        %3020 = vmatpush1.bf16.msra.mxu0 0
        %3021 = vmatprep.subr.bf16.mxu0 0
        %3022 = vmatpush1.bf16.msra.mxu0 0
        %3023 = vmatprep.subr.bf16.mxu0 0
        %3024 = vmatpush1.bf16.msra.mxu0 0
        %3025 = vmatprep.subr.bf16.mxu0 0
        %3026 = vmatpush1.bf16.msra.mxu0 0
        %3027 = vmatprep.subr.bf16.mxu0 0
        %3028 = vmatpush1.bf16.msra.mxu0 0
        %3029 = vmatprep.subr.bf16.mxu0 0
        %3030 = vmatpush1.bf16.msra.mxu0 0
        %3031 = vmatprep.mubr.bf16.mxu0 0
        %3032 = vmatmul.mubr.bf16.gmra.mrb[0].mxu0 %v2948
        %v3033 = vpop.f32.mrb[0].mxu0
        %v3034 = vadd.f32 0.0, %v3033
        %v3035 = vpop.f32.mrb[0].mxu0
        %v3036 = vpop.f32.mrb[0].mxu0
        %v3037 = vadd.f32 0.0, %v3036
        %v3038 = vpop.f32.mrb[0].mxu0
        %3039 = vmatprep.mubr.bf16.mxu0 0
        %3040 = vmatmul.mubr.bf16.gmra.mrb[0].mxu0 %v2951
        %v3041 = vpop.f32.mrb[0].mxu0
        %v3042 = vadd.f32 0.0, %v3041
        %v3043 = vpop.f32.mrb[0].mxu0
        %v3044 = vpop.f32.mrb[0].mxu0
        %v3045 = vadd.f32 0.0, %v3044
        %v3046 = vpop.f32.mrb[0].mxu0
        %3047 = vmatprep.mubr.bf16.mxu0 0
        %3048 = vmatmul.mubr.bf16.gmra.mrb[0].mxu0 %v2954
        %v3049 = vpop.f32.mrb[0].mxu0
        %v3050 = vadd.f32 0.0, %v3049
        %v3051 = vpop.f32.mrb[0].mxu0
        %v3052 = vpop.f32.mrb[0].mxu0
        %v3053 = vadd.f32 0.0, %v3052
        %v3054 = vpop.f32.mrb[0].mxu0
        %3055 = vmatprep.mubr.bf16.mxu0 0
        %3056 = vmatmul.mubr.bf16.gmra.mrb[0].mxu0 %v2957
        %v3057 = vpop.f32.mrb[0].mxu0
        %v3058 = vadd.f32 0.0, %v3057
        %v3059 = vpop.f32.mrb[0].mxu0
        %v3060 = vpop.f32.mrb[0].mxu0
        %v3061 = vadd.f32 0.0, %v3060
        %v3062 = vpop.f32.mrb[0].mxu0
        %3063 = vmatprep.mubr.bf16.mxu0 0
        %3064 = vmatmul.mubr.bf16.gmra.mrb[0].mxu0 %v2960
        %v3065 = vpop.f32.mrb[0].mxu0
        %v3066 = vadd.f32 0.0, %v3065
        %v3067 = vpop.f32.mrb[0].mxu0
        %v3068 = vpop.f32.mrb[0].mxu0
        %v3069 = vadd.f32 0.0, %v3068
        %v3070 = vpop.f32.mrb[0].mxu0
        %3071 = vmatprep.mubr.bf16.mxu0 0
        %3072 = vmatmul.mubr.bf16.gmra.mrb[0].mxu0 %v2963
        %v3073 = vpop.f32.mrb[0].mxu0
        %v3074 = vadd.f32 0.0, %v3073
        %v3075 = vpop.f32.mrb[0].mxu0
        %v3076 = vpop.f32.mrb[0].mxu0
        %v3077 = vadd.f32 0.0, %v3076
        %v3078 = vpop.f32.mrb[0].mxu0
        %3079 = vmatprep.mubr.bf16.mxu0 0
        %3080 = vmatmul.mubr.bf16.gmra.mrb[0].mxu0 %v2966
        %v3081 = vpop.f32.mrb[0].mxu0
        %v3082 = vadd.f32 0.0, %v3081
        %v3083 = vpop.f32.mrb[0].mxu0
        %v3084 = vpop.f32.mrb[0].mxu0
        %v3085 = vadd.f32 0.0, %v3084
        %v3086 = vpop.f32.mrb[0].mxu0
        %3087 = vmatprep.mubr.bf16.mxu0 0
        %3088 = vmatmul.mubr.bf16.gmra.mrb[0].mxu0 %v2969
        %v3089 = vpop.f32.mrb[0].mxu0
        %v3090 = vadd.f32 0.0, %v3089
        %v3091 = vpop.f32.mrb[0].mxu0
        %v3092 = vpop.f32.mrb[0].mxu0
        %v3093 = vadd.f32 0.0, %v3092
        %v3094 = vpop.f32.mrb[0].mxu0
        %3095 = vmatprep.mubr.bf16.mxu0 0
        %3096 = vmatmul.mubr.bf16.gmra.mrb[0].mxu0 %v2972
        %v3097 = vpop.f32.mrb[0].mxu0
        %v3098 = vadd.f32 0.0, %v3097
        %v3099 = vpop.f32.mrb[0].mxu0
        %v3100 = vpop.f32.mrb[0].mxu0
        %v3101 = vadd.f32 0.0, %v3100
        %v3102 = vpop.f32.mrb[0].mxu0
        %3103 = vmatprep.mubr.bf16.mxu0 0
        %3104 = vmatmul.mubr.bf16.gmra.mrb[0].mxu0 %v2975
        %v3105 = vpop.f32.mrb[0].mxu0
        %v3106 = vadd.f32 0.0, %v3105
        %v3107 = vpop.f32.mrb[0].mxu0
        %v3108 = vpop.f32.mrb[0].mxu0
        %v3109 = vadd.f32 0.0, %v3108
        %v3110 = vpop.f32.mrb[0].mxu0
        %3111 = vmatprep.mubr.bf16.mxu0 0
        %3112 = vmatmul.mubr.bf16.gmra.mrb[0].mxu0 %v2978
        %v3113 = vpop.f32.mrb[0].mxu0
        %v3114 = vadd.f32 0.0, %v3113
        %v3115 = vpop.f32.mrb[0].mxu0
        %v3116 = vpop.f32.mrb[0].mxu0
        %v3117 = vadd.f32 0.0, %v3116
        %v3118 = vpop.f32.mrb[0].mxu0
        %3119 = vmatprep.mubr.bf16.mxu0 0
        %3120 = vmatmul.mubr.bf16.gmra.mrb[0].mxu0 %v2981
        %v3121 = vpop.f32.mrb[0].mxu0
        %v3122 = vadd.f32 0.0, %v3121
        %v3123 = vpop.f32.mrb[0].mxu0
        %v3124 = vpop.f32.mrb[0].mxu0
        %v3125 = vadd.f32 0.0, %v3124
        %v3126 = vpop.f32.mrb[0].mxu0
        %3127 = vmatprep.mubr.bf16.mxu0 0
        %3128 = vmatmul.mubr.bf16.gmra.mrb[0].mxu0 %v2984
        %v3129 = vpop.f32.mrb[0].mxu0
        %v3130 = vadd.f32 0.0, %v3129
        %v3131 = vpop.f32.mrb[0].mxu0
        %v3132 = vpop.f32.mrb[0].mxu0
        %v3133 = vadd.f32 0.0, %v3132
        %v3134 = vpop.f32.mrb[0].mxu0
        %3135 = vmatprep.mubr.bf16.mxu0 0
        %3136 = vmatmul.mubr.bf16.gmra.mrb[0].mxu0 %v2987
        %v3137 = vpop.f32.mrb[0].mxu0
        %v3138 = vadd.f32 0.0, %v3137
        %v3139 = vpop.f32.mrb[0].mxu0
        %v3140 = vpop.f32.mrb[0].mxu0
        %v3141 = vadd.f32 0.0, %v3140
        %v3142 = vpop.f32.mrb[0].mxu0
        %3143 = vmatprep.mubr.bf16.mxu0 0
        %3144 = vmatmul.mubr.bf16.gmra.mrb[0].mxu0 %v2990
        %v3145 = vpop.f32.mrb[0].mxu0
        %v3146 = vadd.f32 0.0, %v3145
        %v3147 = vpop.f32.mrb[0].mxu0
        %v3148 = vpop.f32.mrb[0].mxu0
        %v3149 = vadd.f32 0.0, %v3148
        %v3150 = vpop.f32.mrb[0].mxu0
        %3151 = vmatprep.mubr.bf16.mxu0 0
        %3152 = vmatmul.mubr.bf16.gmra.mrb[0].mxu0 %v2993
        %v3153 = vpop.f32.mrb[0].mxu0
        %v3154 = vadd.f32 0.0, %v3153
        %v3155 = vpop.f32.mrb[0].mxu0
        %v3156 = vpop.f32.mrb[0].mxu0
        %v3157 = vadd.f32 0.0, %v3156
        %v3158 = vpop.f32.mrb[0].mxu0
        %3159 = vdwg.mxu0
        %v3160 = vlaneseq
        %v3161 = vshrl.u32 %v3160, 7
        %v3162 = vadd.s32 %v3161, 8
        %v3163 = vadd.s32 %v3161, 16
        %v3164 = vld [vmem:[#allocation8] sm:$0x3]
        %v3165 = vlaneseq
        %v3166 = vshrl.u32 %v3165, 7
        %v3167 = vsub.s32 0, %v3166
        %v3168 = vrot.slane %v3164, %v3167
        %v3169 = vlaneseq
        %v3170 = vshrl.u32 %v3169, 7
        %v3171 = vsub.s32 1, %v3170
        %v3172 = vrot.slane %v3164, %v3171
        %vm3173 = vcmp.eq.s32.totalorder %v3161, %v3168
        %vm3174 = vcmp.eq.s32.totalorder %v3161, %v3172
        %vm3175 = vcmp.eq.s32.totalorder %v3162, %v3168
        %vm3176 = vcmp.eq.s32.totalorder %v3162, %v3172
        %vm3177 = vcmp.eq.s32.totalorder %v3163, %v3168
        %vm3178 = vcmp.eq.s32.totalorder %v3163, %v3172
        %v3179 = vsel %vm3173, 1, 0
        %v3180 = vsel %vm3174, 1, 0
        %v3181 = vsel %vm3175, 1, 0
        %v3182 = vsel %vm3176, 1, 0
        %v3183 = vsel %vm3177, 1, 0
        %v3184 = vsel %vm3178, 1, 0
        %v3185 = vcvt.s32.f32 %v3179
        %v3186 = vcvt.s32.f32 %v3180
        %v3187 = vcvt.s32.f32 %v3181
        %v3188 = vcvt.s32.f32 %v3182
        %v3189 = vcvt.s32.f32 %v3183
        %v3190 = vcvt.s32.f32 %v3184
        %v3191 = vpack.c.bf16 %v3187, %v3185
        %v3192 = vpack.c.bf16 %v3188, %v3186
        %v3193 = vpack.c.bf16 %v3189, %v3189
        %v3194 = vpack.c.bf16 %v3190, %v3190
        %v3195 = vmul.f32 %v3034, %v2660
        %v3196 = vmul.f32 %v3037, %v2661
        %v3197 = vmul.f32 %v3042, %v2662
        %v3198 = vmul.f32 %v3045, %v2663
        %v3199 = vmul.f32 %v3050, %v2664
        %v3200 = vmul.f32 %v3053, %v2665
        %v3201 = vmul.f32 %v3058, %v2666
        %v3202 = vmul.f32 %v3061, %v2667
        %v3203 = vmul.f32 %v3066, %v2668
        %v3204 = vmul.f32 %v3069, %v2669
        %v3205 = vmul.f32 %v3074, %v2670
        %v3206 = vmul.f32 %v3077, %v2671
        %v3207 = vmul.f32 %v3082, %v2672
        %v3208 = vmul.f32 %v3085, %v2673
        %v3209 = vmul.f32 %v3090, %v2674
        %v3210 = vmul.f32 %v3093, %v2675
        %v3211 = vmul.f32 %v3098, %v2676
        %v3212 = vmul.f32 %v3101, %v2677
        %v3213 = vmul.f32 %v3106, %v2678
        %v3214 = vmul.f32 %v3109, %v2679
        %v3215 = vmul.f32 %v3114, %v2680
        %v3216 = vmul.f32 %v3117, %v2681
        %v3217 = vmul.f32 %v3122, %v2682
        %v3218 = vmul.f32 %v3125, %v2683
        %v3219 = vmul.f32 %v3130, %v2684
        %v3220 = vmul.f32 %v3133, %v2685
        %v3221 = vmul.f32 %v3138, %v2686
        %v3222 = vmul.f32 %v3141, %v2687
        %v3223 = vmul.f32 %v3146, %v2688
        %v3224 = vmul.f32 %v3149, %v2689
        %v3225 = vmul.f32 %v3154, %v2690
        %v3226 = vmul.f32 %v3157, %v2691
        %v3227 = vpack.c.bf16 %v3196, %v3195
        %v3228 = vpack.c.bf16 %v3198, %v3197
        %v3229 = vpack.c.bf16 %v3200, %v3199
        %v3230 = vpack.c.bf16 %v3202, %v3201
        %v3231 = vpack.c.bf16 %v3204, %v3203
        %v3232 = vpack.c.bf16 %v3206, %v3205
        %v3233 = vpack.c.bf16 %v3208, %v3207
        %v3234 = vpack.c.bf16 %v3210, %v3209
        %v3235 = vpack.c.bf16 %v3212, %v3211
        %v3236 = vpack.c.bf16 %v3214, %v3213
        %v3237 = vpack.c.bf16 %v3216, %v3215
        %v3238 = vpack.c.bf16 %v3218, %v3217
        %v3239 = vpack.c.bf16 %v3220, %v3219
        %v3240 = vpack.c.bf16 %v3222, %v3221
        %v3241 = vpack.c.bf16 %v3224, %v3223
        %v3242 = vpack.c.bf16 %v3226, %v3225
        %v3243 = vld [vmem:[#allocation2] sm:$0xff]
        %v3244 = vld [vmem:[#allocation2 + $0x8] sm:$0xff]
        %v3245 = vld [vmem:[#allocation2 + $0x10] sm:$0xff]
        %3246 = vmatprep.subr.bf16.mxu0 0
        %3247 = vmatpush1.bf16.msra.mxu0 %v3227
        %3248 = vmatprep.subr.bf16.mxu0 0
        %3249 = vmatpush1.bf16.msra.mxu0 %v3228
        %3250 = vmatprep.subr.bf16.mxu0 0
        %3251 = vmatpush1.bf16.msra.mxu0 %v3229
        %3252 = vmatprep.subr.bf16.mxu0 0
        %3253 = vmatpush1.bf16.msra.mxu0 %v3230
        %3254 = vmatprep.subr.bf16.mxu0 0
        %3255 = vmatpush1.bf16.msra.mxu0 %v3231
        %3256 = vmatprep.subr.bf16.mxu0 0
        %3257 = vmatpush1.bf16.msra.mxu0 %v3232
        %3258 = vmatprep.subr.bf16.mxu0 0
        %3259 = vmatpush1.bf16.msra.mxu0 %v3233
        %3260 = vmatprep.subr.bf16.mxu0 0
        %3261 = vmatpush1.bf16.msra.mxu0 %v3234
        %3262 = vmatprep.subr.bf16.mxu0 0
        %3263 = vmatpush1.bf16.msra.mxu0 %v3235
        %3264 = vmatprep.subr.bf16.mxu0 0
        %3265 = vmatpush1.bf16.msra.mxu0 %v3236
        %3266 = vmatprep.subr.bf16.mxu0 0
        %3267 = vmatpush1.bf16.msra.mxu0 %v3237
        %3268 = vmatprep.subr.bf16.mxu0 0
        %3269 = vmatpush1.bf16.msra.mxu0 %v3238
        %3270 = vmatprep.subr.bf16.mxu0 0
        %3271 = vmatpush1.bf16.msra.mxu0 %v3239
        %3272 = vmatprep.subr.bf16.mxu0 0
        %3273 = vmatpush1.bf16.msra.mxu0 %v3240
        %3274 = vmatprep.subr.bf16.mxu0 0
        %3275 = vmatpush1.bf16.msra.mxu0 %v3241
        %3276 = vmatprep.subr.bf16.mxu0 0
        %3277 = vmatpush1.bf16.msra.mxu0 %v3242
        %3278 = vmatprep.mubr.bf16.mxu0 %v3192
        %3279 = vmatmul.mubr.bf16.gmra.mrb[0].mxu0 %v3191
        %v3280 = vpop.f32.mrb[0].mxu0
        %v3281 = vadd.f32 0.0, %v3280
        %v3282 = vpop.f32.mrb[0].mxu0
        %v3283 = vpop.f32.mrb[0].mxu0
        %v3284 = vadd.f32 0.0, %v3283
        %v3285 = vpop.f32.mrb[0].mxu0
        %3286 = vmatprep.mubr.bf16.mxu0 %v3194
        %3287 = vmatmul.mubr.bf16.gmra.mrb[0].mxu0 %v3193
        %v3288 = vpop.f32.mrb[0].mxu0
        %v3289 = vadd.f32 0.0, %v3288
        %v3290 = vpop.f32.mrb[0].mxu0
        %v3291 = vpop.f32.mrb[0].mxu0
        %v3292 = vpop.f32.mrb[0].mxu0
        %3293 = vdwg.mxu0
        %v3294 = vadd.f32 %v3243, %v3281
        %v3295 = vadd.f32 %v3244, %v3284
        %v3296 = vadd.f32 %v3245, %v3289
        %3297 = vst [vmem:[#allocation2] sm:$0xff] %v3294
        %3298 = vst [vmem:[#allocation2 + $0x8] sm:$0xff] %v3295
        %3299 = vst [vmem:[#allocation2 + $0x10] sm:$0xff] %v3296
        // Predicated region
        $region149: #{tpu_custom_call.1} parent=79 // pred_check
          %p3300 = pneg %p894
        $region150: #{tpu_custom_call.1} parent=79 // pred_check_branch
          %3302 = sbr.rel (%p3300) target = $region152
        $region151: #{tpu_custom_call.1} parent=79 // pred_region
          %v3303 = vld [vmem:[#allocation16] sm:$0xff]
          %v3304 = vld [vmem:[#allocation16 + $0x8] sm:$0xf]
          %v3305 = vld [vmem:[#allocation2] sm:$0xff]
          %v3306 = vld [vmem:[#allocation2 + $0x8] sm:$0xff]
          %v3307 = vld [vmem:[#allocation2 + $0x10] sm:$0xff]
          %v3309 = vsel %vm2946, %v3303, 0
          %v3312 = vsel %vm2946, %v3304, 0
          %3314 = vmatprep.subr.mxu0 0.0
          %3315 = vmatpush1.msra.mxu0 %v3305
          %3316 = vmatprep.subr.mxu0 0.0
          %3317 = vmatpush1.msra.mxu0 %v3306
          %3318 = vmatprep.subr.mxu0 0.0
          %3319 = vmatpush1.msra.mxu0 %v3307
          %3320 = vmatprep.subr.mxu0 0.0
          %3321 = vmatpush1.msra.mxu0 0.0
          %3322 = vmatprep.subr.mxu0 0.0
          %3323 = vmatpush1.msra.mxu0 0.0
          %3324 = vmatprep.subr.mxu0 0.0
          %3325 = vmatpush1.msra.mxu0 0.0
          %3326 = vmatprep.subr.mxu0 0.0
          %3327 = vmatpush1.msra.mxu0 0.0
          %3328 = vmatprep.subr.mxu0 0.0
          %3329 = vmatpush1.msra.mxu0 0.0
          %3330 = vmatprep.subr.mxu0 0.0
          %3331 = vmatpush1.msra.mxu0 0.0
          %3332 = vmatprep.subr.mxu0 0.0
          %3333 = vmatpush1.msra.mxu0 0.0
          %3334 = vmatprep.subr.mxu0 0.0
          %3335 = vmatpush1.msra.mxu0 0.0
          %3336 = vmatprep.subr.mxu0 0.0
          %3337 = vmatpush1.msra.mxu0 0.0
          %3338 = vmatprep.subr.mxu0 0.0
          %3339 = vmatpush1.msra.mxu0 0.0
          %3340 = vmatprep.subr.mxu0 0.0
          %3341 = vmatpush1.msra.mxu0 0.0
          %3342 = vmatprep.subr.mxu0 0.0
          %3343 = vmatpush1.msra.mxu0 0.0
          %3344 = vmatprep.subr.mxu0 0.0
          %3345 = vmatpush1.msra.mxu0 0.0
          %3346 = vmatprep.subr.mxu0 0.0
          %3347 = vmatpush1.msra.mxu0 0.0
          %3348 = vmatprep.subr.mxu0 0.0
          %3349 = vmatpush1.msra.mxu0 0.0
          %3350 = vmatprep.subr.mxu0 0.0
          %3351 = vmatpush1.msra.mxu0 0.0
          %3352 = vmatprep.subr.mxu0 0.0
          %3353 = vmatpush1.msra.mxu0 0.0
          %3354 = vmatprep.subr.mxu0 0.0
          %3355 = vmatpush1.msra.mxu0 0.0
          %3356 = vmatprep.subr.mxu0 0.0
          %3357 = vmatpush1.msra.mxu0 0.0
          %3358 = vmatprep.subr.mxu0 0.0
          %3359 = vmatpush1.msra.mxu0 0.0
          %3360 = vmatprep.subr.mxu0 0.0
          %3361 = vmatpush1.msra.mxu0 0.0
          %3362 = vmatprep.subr.mxu0 0.0
          %3363 = vmatpush1.msra.mxu0 0.0
          %3364 = vmatprep.subr.mxu0 0.0
          %3365 = vmatpush1.msra.mxu0 0.0
          %3366 = vmatprep.subr.mxu0 0.0
          %3367 = vmatpush1.msra.mxu0 0.0
          %3368 = vmatprep.subr.mxu0 0.0
          %3369 = vmatpush1.msra.mxu0 0.0
          %3370 = vmatprep.subr.mxu0 0.0
          %3371 = vmatpush1.msra.mxu0 0.0
          %3372 = vmatprep.subr.mxu0 0.0
          %3373 = vmatpush1.msra.mxu0 0.0
          %3374 = vmatprep.subr.mxu0 0.0
          %3375 = vmatpush1.msra.mxu0 0.0
          %3376 = vmatprep.subr.mxu0 0.0
          %3377 = vmatpush1.msra.mxu0 0.0
          %3378 = vmatprep.mubr.f32.mxu0 0.0
          %3379 = vmatmul.mubr.f32.gmra.mrb[0].mxu0 %v3309
          %v3380 = vpop.f32.mrb[0].mxu0
          %v3381 = vadd.f32 0.0, %v3380
          %v3382 = vpop.f32.mrb[0].mxu0
          %3383 = vmatprep.mubr.f32.mxu0 0.0
          %3384 = vmatmul.mubr.f32.gmra.mrb[0].mxu0 %v3312
          %v3385 = vpop.f32.mrb[0].mxu0
          %v3386 = vadd.f32 0.0, %v3385
          %v3387 = vpop.f32.mrb[0].mxu0
          %3388 = vdwg.mxu0
          %v3389 = vld [vmem:[%s782] sm:$0xff]
          %v3390 = vld [vmem:[%s782 + $0x8] sm:$0xff]
          %v3391 = vld [vmem:[%s782 + $0x10] sm:$0xff]
          %v3392 = vld [vmem:[%s782 + $0x18] sm:$0xff]
          %v3393 = vld [vmem:[%s782 + $0x20] sm:$0xff]
          %v3394 = vld [vmem:[%s782 + $0x28] sm:$0xff]
          %v3395 = vld [vmem:[%s782 + $0x30] sm:$0xff]
          %v3396 = vld [vmem:[%s782 + $0x38] sm:$0xff]
          %v3397 = vld [vmem:[%s782 + $0x40] sm:$0xff]
          %v3398 = vld [vmem:[%s782 + $0x48] sm:$0xff]
          %v3399 = vld [vmem:[%s782 + $0x50] sm:$0xff]
          %v3400 = vld [vmem:[%s782 + $0x58] sm:$0xff]
          %v3401 = vld [vmem:[%s782 + $0x60] sm:$0xff]
          %v3402 = vld [vmem:[%s782 + $0x68] sm:$0xff]
          %v3403 = vld [vmem:[%s782 + $0x70] sm:$0xff]
          %v3404 = vld [vmem:[%s782 + $0x78] sm:$0xff]
          %v3405 = vld [vmem:[%s790] sm:$0x1]
          %v3407 = vlaneseq
          %v3408 = vshrl.u32 %v3407, 7
          %v3409 = vsub.s32 0, %v3408
          %v3410 = vrot.slane %v3405, %v3409
          %3412 = vmatprep.subr.mxu0 0.0
          %3413 = vmatpush1.msra.mxu0 %v3389
          %3414 = vmatprep.subr.mxu0 0.0
          %3415 = vmatpush1.msra.mxu0 %v3390
          %3416 = vmatprep.subr.mxu0 0.0
          %3417 = vmatpush1.msra.mxu0 %v3391
          %3418 = vmatprep.subr.mxu0 0.0
          %3419 = vmatpush1.msra.mxu0 %v3392
          %3420 = vmatprep.subr.mxu0 0.0
          %3421 = vmatpush1.msra.mxu0 %v3393
          %3422 = vmatprep.subr.mxu0 0.0
          %3423 = vmatpush1.msra.mxu0 %v3394
          %3424 = vmatprep.subr.mxu0 0.0
          %3425 = vmatpush1.msra.mxu0 %v3395
          %3426 = vmatprep.subr.mxu0 0.0
          %3427 = vmatpush1.msra.mxu0 %v3396
          %3428 = vmatprep.subr.mxu0 0.0
          %3429 = vmatpush1.msra.mxu0 %v3397
          %3430 = vmatprep.subr.mxu0 0.0
          %3431 = vmatpush1.msra.mxu0 %v3398
          %3432 = vmatprep.subr.mxu0 0.0
          %3433 = vmatpush1.msra.mxu0 %v3399
          %3434 = vmatprep.subr.mxu0 0.0
          %3435 = vmatpush1.msra.mxu0 %v3400
          %3436 = vmatprep.subr.mxu0 0.0
          %3437 = vmatpush1.msra.mxu0 %v3401
          %3438 = vmatprep.subr.mxu0 0.0
          %3439 = vmatpush1.msra.mxu0 %v3402
          %3440 = vmatprep.subr.mxu0 0.0
          %3441 = vmatpush1.msra.mxu0 %v3403
          %3442 = vmatprep.subr.mxu0 0.0
          %3443 = vmatpush1.msra.mxu0 %v3404
          %3444 = vmatprep.subr.mxu0 0.0
          %3445 = vmatpush1.msra.mxu0 0.0
          %3446 = vmatprep.subr.mxu0 0.0
          %3447 = vmatpush1.msra.mxu0 0.0
          %3448 = vmatprep.subr.mxu0 0.0
          %3449 = vmatpush1.msra.mxu0 0.0
          %3450 = vmatprep.subr.mxu0 0.0
          %3451 = vmatpush1.msra.mxu0 0.0
          %3452 = vmatprep.subr.mxu0 0.0
          %3453 = vmatpush1.msra.mxu0 0.0
          %3454 = vmatprep.subr.mxu0 0.0
          %3455 = vmatpush1.msra.mxu0 0.0
          %3456 = vmatprep.subr.mxu0 0.0
          %3457 = vmatpush1.msra.mxu0 0.0
          %3458 = vmatprep.subr.mxu0 0.0
          %3459 = vmatpush1.msra.mxu0 0.0
          %3460 = vmatprep.subr.mxu0 0.0
          %3461 = vmatpush1.msra.mxu0 0.0
          %3462 = vmatprep.subr.mxu0 0.0
          %3463 = vmatpush1.msra.mxu0 0.0
          %3464 = vmatprep.subr.mxu0 0.0
          %3465 = vmatpush1.msra.mxu0 0.0
          %3466 = vmatprep.subr.mxu0 0.0
          %3467 = vmatpush1.msra.mxu0 0.0
          %3468 = vmatprep.subr.mxu0 0.0
          %3469 = vmatpush1.msra.mxu0 0.0
          %3470 = vmatprep.subr.mxu0 0.0
          %3471 = vmatpush1.msra.mxu0 0.0
          %3472 = vmatprep.subr.mxu0 0.0
          %3473 = vmatpush1.msra.mxu0 0.0
          %3474 = vmatprep.subr.mxu0 0.0
          %3475 = vmatpush1.msra.mxu0 0.0
          %3476 = vmatprep.mubr.f32.mxu0 0.0
          %3477 = vmatmul.mubr.f32.gmra.mrb[0].mxu0 %v3381
          %v3478 = vpop.f32.mrb[0].mxu0
          %v3479 = vadd.f32 %v3410, %v3478
          %v3480 = vpop.f32.mrb[0].mxu0
          %3481 = vmatprep.mubr.f32.mxu0 0.0
          %3482 = vmatmul.mubr.f32.gmra.mrb[0].mxu0 %v3386
          %v3483 = vpop.f32.mrb[0].mxu0
          %v3484 = vadd.f32 %v3410, %v3483
          %v3485 = vpop.f32.mrb[0].mxu0
          %3486 = vdwg.mxu0
          %v3487 = vmax.f32 %v3479, 0.0
          %v3488 = vmax.f32 %v3484, 0.0
          %vm3489 = vcmp.ne.f32.partialorder %v3479, %v3479
          %vm3490 = vcmp.ne.f32.partialorder %v3484, %v3484
          %v3491 = vadd.f32 %v3479, 0.0
          %v3492 = vadd.f32 %v3484, 0.0
          %v3493 = vand.u32 2147483647, %v3479
          %v3494 = vand.u32 2147483647, %v3484
          %v3495 = vsub.f32 0.0, %v3493
          %v3496 = vsub.f32 0.0, %v3494
          %v3497 = vmul.f32 %v3495, 1.442695
          %v3498 = vpow.pop %v3497
          %v3499 = vmul.f32 %v3496, 1.442695
          %v3500 = vpow.pop %v3499
          %v3501 = vadd.f32 %v3498, 1.0
          %v3502 = vlog2.pop %v3501
          %v3503 = vmul.f32 %v3502, 0.6931472
          %v3504 = vmul.f32 -0.5, %v3498
          %v3505 = vadd.f32 %v3504, 1.0
          %v3506 = vmul.f32 %v3505, %v3498
          %v3507 = vand.u32 2147483647, %v3498
          %vm3508 = vcmp.lt.f32.partialorder %v3507, 0.0004427343
          %v3509 = vsel %vm3508, %v3506, %v3503
          %v3510 = vadd.f32 %v3500, 1.0
          %v3511 = vlog2.pop %v3510
          %v3512 = vmul.f32 %v3511, 0.6931472
          %v3513 = vmul.f32 -0.5, %v3500
          %v3514 = vadd.f32 %v3513, 1.0
          %v3515 = vmul.f32 %v3514, %v3500
          %v3516 = vand.u32 2147483647, %v3500
          %vm3517 = vcmp.lt.f32.partialorder %v3516, 0.0004427343
          %v3518 = vsel %vm3517, %v3515, %v3512
          %v3519 = vadd.f32 %v3487, %v3509
          %v3520 = vadd.f32 %v3488, %v3518
          %v3521 = vsel %vm3489, %v3491, %v3519
          %v3522 = vsel %vm3490, %v3492, %v3520
          %v3523 = vld [vmem:[%s799] sm:$0xff]
          %v3524 = vld [vmem:[%s799 + $0x8] sm:$0xff]
          %v3525 = vld [vmem:[%s799 + $0x10] sm:$0xff]
          %v3526 = vld [vmem:[%s799 + $0x18] sm:$0xff]
          %v3527 = vld [vmem:[%s799 + $0x20] sm:$0xff]
          %v3528 = vld [vmem:[%s799 + $0x28] sm:$0xff]
          %v3529 = vld [vmem:[%s799 + $0x30] sm:$0xff]
          %v3530 = vld [vmem:[%s799 + $0x38] sm:$0xff]
          %v3531 = vld [vmem:[%s799 + $0x40] sm:$0xff]
          %v3532 = vld [vmem:[%s799 + $0x48] sm:$0xff]
          %v3533 = vld [vmem:[%s799 + $0x50] sm:$0xff]
          %v3534 = vld [vmem:[%s799 + $0x58] sm:$0xff]
          %v3535 = vld [vmem:[%s799 + $0x60] sm:$0xff]
          %v3536 = vld [vmem:[%s799 + $0x68] sm:$0xff]
          %v3537 = vld [vmem:[%s799 + $0x70] sm:$0xff]
          %v3538 = vld [vmem:[%s799 + $0x78] sm:$0xff]
          %v3539 = vld [vmem:[%s807] sm:$0x1]
          %v3541 = vlaneseq
          %v3542 = vshrl.u32 %v3541, 7
          %v3543 = vsub.s32 0, %v3542
          %v3544 = vrot.slane %v3539, %v3543
          %3546 = vmatprep.subr.mxu0 0.0
          %3547 = vmatpush1.msra.mxu0 %v3523
          %3548 = vmatprep.subr.mxu0 0.0
          %3549 = vmatpush1.msra.mxu0 %v3524
          %3550 = vmatprep.subr.mxu0 0.0
          %3551 = vmatpush1.msra.mxu0 %v3525
          %3552 = vmatprep.subr.mxu0 0.0
          %3553 = vmatpush1.msra.mxu0 %v3526
          %3554 = vmatprep.subr.mxu0 0.0
          %3555 = vmatpush1.msra.mxu0 %v3527
          %3556 = vmatprep.subr.mxu0 0.0
          %3557 = vmatpush1.msra.mxu0 %v3528
          %3558 = vmatprep.subr.mxu0 0.0
          %3559 = vmatpush1.msra.mxu0 %v3529
          %3560 = vmatprep.subr.mxu0 0.0
          %3561 = vmatpush1.msra.mxu0 %v3530
          %3562 = vmatprep.subr.mxu0 0.0
          %3563 = vmatpush1.msra.mxu0 %v3531
          %3564 = vmatprep.subr.mxu0 0.0
          %3565 = vmatpush1.msra.mxu0 %v3532
          %3566 = vmatprep.subr.mxu0 0.0
          %3567 = vmatpush1.msra.mxu0 %v3533
          %3568 = vmatprep.subr.mxu0 0.0
          %3569 = vmatpush1.msra.mxu0 %v3534
          %3570 = vmatprep.subr.mxu0 0.0
          %3571 = vmatpush1.msra.mxu0 %v3535
          %3572 = vmatprep.subr.mxu0 0.0
          %3573 = vmatpush1.msra.mxu0 %v3536
          %3574 = vmatprep.subr.mxu0 0.0
          %3575 = vmatpush1.msra.mxu0 %v3537
          %3576 = vmatprep.subr.mxu0 0.0
          %3577 = vmatpush1.msra.mxu0 %v3538
          %3578 = vmatprep.subr.mxu0 0.0
          %3579 = vmatpush1.msra.mxu0 0.0
          %3580 = vmatprep.subr.mxu0 0.0
          %3581 = vmatpush1.msra.mxu0 0.0
          %3582 = vmatprep.subr.mxu0 0.0
          %3583 = vmatpush1.msra.mxu0 0.0
          %3584 = vmatprep.subr.mxu0 0.0
          %3585 = vmatpush1.msra.mxu0 0.0
          %3586 = vmatprep.subr.mxu0 0.0
          %3587 = vmatpush1.msra.mxu0 0.0
          %3588 = vmatprep.subr.mxu0 0.0
          %3589 = vmatpush1.msra.mxu0 0.0
          %3590 = vmatprep.subr.mxu0 0.0
          %3591 = vmatpush1.msra.mxu0 0.0
          %3592 = vmatprep.subr.mxu0 0.0
          %3593 = vmatpush1.msra.mxu0 0.0
          %3594 = vmatprep.subr.mxu0 0.0
          %3595 = vmatpush1.msra.mxu0 0.0
          %3596 = vmatprep.subr.mxu0 0.0
          %3597 = vmatpush1.msra.mxu0 0.0
          %3598 = vmatprep.subr.mxu0 0.0
          %3599 = vmatpush1.msra.mxu0 0.0
          %3600 = vmatprep.subr.mxu0 0.0
          %3601 = vmatpush1.msra.mxu0 0.0
          %3602 = vmatprep.subr.mxu0 0.0
          %3603 = vmatpush1.msra.mxu0 0.0
          %3604 = vmatprep.subr.mxu0 0.0
          %3605 = vmatpush1.msra.mxu0 0.0
          %3606 = vmatprep.subr.mxu0 0.0
          %3607 = vmatpush1.msra.mxu0 0.0
          %3608 = vmatprep.subr.mxu0 0.0
          %3609 = vmatpush1.msra.mxu0 0.0
          %3610 = vmatprep.mubr.f32.mxu0 0.0
          %3611 = vmatmul.mubr.f32.gmra.mrb[0].mxu0 %v3521
          %v3612 = vpop.f32.mrb[0].mxu0
          %v3613 = vadd.f32 %v3544, %v3612
          %v3614 = vpop.f32.mrb[0].mxu0
          %3615 = vmatprep.mubr.f32.mxu0 0.0
          %3616 = vmatmul.mubr.f32.gmra.mrb[0].mxu0 %v3522
          %v3617 = vpop.f32.mrb[0].mxu0
          %v3618 = vadd.f32 %v3544, %v3617
          %v3619 = vpop.f32.mrb[0].mxu0
          %3620 = vdwg.mxu0
          %v3621 = vld [vmem:[#allocation22] sm:$0xff]
          %v3622 = vld [vmem:[#allocation22 + $0x8] sm:$0xf]
          %v3623 = vadd.f32 %v3621, %v3613
          %v3624 = vadd.f32 %v3622, %v3618
          %3625 = vst [vmem:[#allocation22] sm:$0xff] %v3623
          %3626 = vst [vmem:[#allocation22 + $0x8] sm:$0xf] %v3624
        $region152: #{tpu_custom_call.1} parent=79 // pred_fallthru
          _
        // Predicated region
        $region153: #{tpu_custom_call.1} parent=79 // pred_check
          %p3627 = pneg %p430
        $region154: #{tpu_custom_call.1} parent=79 // pred_check_branch
          %3629 = sbr.rel (%p3627) target = $region156
        $region155: #{tpu_custom_call.1} parent=79 // pred_region
          %s3631 = ssub.s32 256, 256
          %3632 = vsyncadd [#allocation5], %s3631
          %s3633 = sshll.u32 [#allocation22], 4
          %s3634 = int_to_ptr.vmem [resolvable:$true] %s3633
          %3639 = dma.vmem_to_hbm [thread:$0]  %s3634, 256, %s15, [#allocation5], 128, 128, 8
        $region156: #{tpu_custom_call.1} parent=79 // pred_fallthru
          _
        // Predicated region
        $region157: #{tpu_custom_call.1} parent=79 // pred_check
          %p3640 = pneg %p430
        $region158: #{tpu_custom_call.1} parent=79 // pred_check_branch
          %3642 = sbr.rel (%p3640) target = $region160
        $region159: #{tpu_custom_call.1} parent=79 // pred_region
          %3643 = dma.done [#allocation5], 256
        $region160: #{tpu_custom_call.1} parent=79 // pred_fallthru
          _
      $region80: #{tpu_custom_call.1} parent=5 // pred_fallthru
        _
      %p3644 = scmp.le.s32.totalorder 2, %s25
      // Predicated region
      $region161: #{tpu_custom_call.1} parent=5 // pred_check
        %p3645 = pneg %p3644
      $region162: #{tpu_custom_call.1} parent=5 // pred_check_branch
        %3647 = sbr.rel (%p3645) target = $region164
      $region163: #{tpu_custom_call.1} parent=5 // pred_region
        %s3648 = ssub.s32 %s25, 2
      $region164: #{tpu_custom_call.1} parent=5 // pred_fallthru
        _
    $region6: #{tpu_custom_call.1} parent=1 // loop_footer
      %s29 = sadd.s32 1, %s25
    $region7: #{tpu_custom_call.1} parent=1 // loop_footer_branch
      %24 = sbr.rel target = $region3
    $region8: #{tpu_custom_call.1} parent=1 // loop_exit
      _
    %3649 = vsyncpa [#allocation4], 1
    %s3650 = scalar_lea.sflag [#allocation4], 1
    %3651 = vsyncpa %s3650, 1
    %3652 = vsyncpa [#allocation7], 1
    %3653 = vsyncpa [#allocation10], 1
    %3654 = vsyncpa [#allocation5], 1
    %s3655 = scalar_lea.sflag [#allocation5], 1
    %3656 = vsyncpa %s3655, 1

</llo_original>
